<compile_context>
chip_gen: v6e
topology: v6e:2x2x1
jax: 0.10.0
libtpu: 0.0.40
codegen_flags: <defaults>
</compile_context>

<pallas_src>
import functools
import numpy as np
import jax
import jax.numpy as jnp
from jax.experimental import pallas as pl
from jax.experimental.pallas import tpu as pltpu

_VMEM_LIMIT = 32 * 1024 * 1024   # safe scoped-VMEM budget on v5e/v6e/v7x
_POINTWISE_TILE_N = 32768        # target lane tile for the 1x1-conv kernels
_HEAD_TILE_N = 16384             # target lane tile for the fused head kernel
_MIN_GRID = 2                    # keep >=2 grid steps so v7x's 2 TCs both work
_FOLD_THRESHOLD = 2048           # fold all modes into one matmul below this


def _choose_tile_n(n_pad, target_tile_n, min_grid=_MIN_GRID):
    """Largest lane tile (multiple of 128) that divides n_pad, fits the target,
    and keeps at least `min_grid` grid steps (when possible)."""
    lanes = n_pad // 128
    want = min(min_grid, lanes)
    best = 1
    for t in range(1, lanes + 1):
        if lanes % t == 0 and t * 128 <= target_tile_n and lanes // t >= want:
            best = t
    return best * 128


# ----------------------------------------------------------------------------
# Kernel 1: transposed pointwise linear  y = [relu](W^T @ x + b [+ residual])
# x tile: [Cin, tile_n]  (spatial dim lane-dense), W^T: [Cout, Cin], b: [Cout,1]
# Used for fc0 and the 1x1 convs w0..w2 (fused with residual add + ReLU).
# ----------------------------------------------------------------------------
def _make_linear_t_kernel(apply_relu, has_residual):
    if has_residual:
        def kernel(x_ref, w_ref, b_ref, r_ref, o_ref):
            y = jnp.dot(w_ref[...], x_ref[...].astype(jnp.float32),
                        preferred_element_type=jnp.float32)
            y = y + b_ref[...] + r_ref[...].astype(jnp.float32)
            if apply_relu:
                y = jnp.maximum(y, 0.0)
            o_ref[...] = y.astype(o_ref.dtype)
    else:
        def kernel(x_ref, w_ref, b_ref, o_ref):
            y = jnp.dot(w_ref[...], x_ref[...].astype(jnp.float32),
                        preferred_element_type=jnp.float32)
            y = y + b_ref[...]
            if apply_relu:
                y = jnp.maximum(y, 0.0)
            o_ref[...] = y.astype(o_ref.dtype)
    return kernel


def pointwise_linear_t(x_t, w, b, residual_t=None, relu=False,
                       target_tile_n=_POINTWISE_TILE_N, out_dtype=None):
    """x_t: [Cin, N]; w: [Cin, Cout]; b: (1,Cout)/(Cout,); residual_t: [Cout, N]."""
    Cin, N = x_t.shape
    Cout = w.shape[1]
    out_dtype = out_dtype if out_dtype is not None else x_t.dtype
    w_t = w.T.astype(jnp.float32)                 # [Cout, Cin]
    b_t = b.reshape(Cout, 1).astype(jnp.float32)

    n_pad = pl.cdiv(N, 128) * 128
    if n_pad != N:
        # TODO(synk): masked tail stores would avoid this one-off pad/slice copy.
        x_t = jnp.pad(x_t, ((0, 0), (0, n_pad - N)))
        if residual_t is not None:
            residual_t = jnp.pad(residual_t, ((0, 0), (0, n_pad - N)))
    tile_n = _choose_tile_n(n_pad, target_tile_n)
    grid = (n_pad // tile_n,)

    in_specs = [
        pl.BlockSpec((Cin, tile_n), lambda i: (0, i)),
        pl.BlockSpec((Cout, Cin), lambda i: (0, 0)),
        pl.BlockSpec((Cout, 1), lambda i: (0, 0)),
    ]
    args = [x_t, w_t, b_t]
    if residual_t is not None:
        in_specs.append(pl.BlockSpec((Cout, tile_n), lambda i: (0, i)))
        args.append(residual_t)

    kernel = _make_linear_t_kernel(relu, residual_t is not None)
    out = pl.pallas_call(
        kernel,
        out_shape=jax.ShapeDtypeStruct((Cout, n_pad), out_dtype),
        grid_spec=pltpu.PrefetchScalarGridSpec(
            num_scalar_prefetch=0,
            grid=grid,
            in_specs=in_specs,
            out_specs=pl.BlockSpec((Cout, tile_n), lambda i: (0, i)),
        ),
        compiler_params=pltpu.CompilerParams(
            dimension_semantics=("parallel",),
            vmem_limit_bytes=_VMEM_LIMIT),
    )(*args)
    return out[:, :N] if n_pad != N else out


# ----------------------------------------------------------------------------
# Kernel 2: fused tail + head
#   h3  = W3^T @ h2 + b3 + spec3          (last 1x1 conv + residual, no ReLU)
#   out = W2^T @ relu(W1^T @ h3 + b1) + b2
# The [W, tile_n] h3 and [128, tile_n] fc1 intermediates never touch HBM.
# ----------------------------------------------------------------------------
def _fused_tail_head_kernel(h_ref, s_ref, w3_ref, b3_ref,
                            w1_ref, b1_ref, w2_ref, b2_ref, o_ref):
    h3 = jnp.dot(w3_ref[...], h_ref[...].astype(jnp.float32),
                 preferred_element_type=jnp.float32)
    h3 = h3 + b3_ref[...] + s_ref[...].astype(jnp.float32)
    f = jnp.dot(w1_ref[...], h3, preferred_element_type=jnp.float32) + b1_ref[...]
    f = jnp.maximum(f, 0.0)
    y = jnp.dot(w2_ref[...], f, preferred_element_type=jnp.float32) + b2_ref[...]
    o_ref[...] = y.astype(o_ref.dtype)


def fused_tail_head(h_t, spec_t, w3, b3, w1, b1, w2, b2,
                    target_tile_n=_HEAD_TILE_N):
    """h_t: [W, N]; spec_t: [W, N] -> [1, N] = fc2(relu(fc1(conv3_res))))."""
    C, N = h_t.shape
    H = w1.shape[1]
    w3_t = w3.T.astype(jnp.float32)               # [C, C]
    b3_t = b3.reshape(C, 1).astype(jnp.float32)
    w1_t = w1.T.astype(jnp.float32)               # [H, C]
    b1_t = b1.reshape(H, 1).astype(jnp.float32)
    w2_t = w2.T.astype(jnp.float32)               # [1, H]
    b2_t = b2.reshape(1, 1).astype(jnp.float32)

    n_pad = pl.cdiv(N, 128) * 128
    if n_pad != N:
        h_t = jnp.pad(h_t, ((0, 0), (0, n_pad - N)))
        spec_t = jnp.pad(spec_t, ((0, 0), (0, n_pad - N)))
    tile_n = _choose_tile_n(n_pad, target_tile_n)
    grid = (n_pad // tile_n,)

    out = pl.pallas_call(
        _fused_tail_head_kernel,
        out_shape=jax.ShapeDtypeStruct((1, n_pad), jnp.float32),
        grid_spec=pltpu.PrefetchScalarGridSpec(
            num_scalar_prefetch=0,
            grid=grid,
            in_specs=[
                pl.BlockSpec((C, tile_n), lambda i: (0, i)),
                pl.BlockSpec((C, tile_n), lambda i: (0, i)),
                pl.BlockSpec((C, C), lambda i: (0, 0)),
                pl.BlockSpec((C, 1), lambda i: (0, 0)),
                pl.BlockSpec((H, C), lambda i: (0, 0)),
                pl.BlockSpec((H, 1), lambda i: (0, 0)),
                pl.BlockSpec((1, H), lambda i: (0, 0)),
                pl.BlockSpec((1, 1), lambda i: (0, 0)),
            ],
            out_specs=pl.BlockSpec((1, tile_n), lambda i: (0, i)),
        ),
        compiler_params=pltpu.CompilerParams(
            dimension_semantics=("parallel",),
            vmem_limit_bytes=_VMEM_LIMIT),
    )(h_t, spec_t, w3_t, b3_t, w1_t, b1_t, w2_t, b2_t)
    return out[:, :N] if n_pad != N else out


# ----------------------------------------------------------------------------
# Kernel 3: complex channel mixing over the truncated spectrum.
# Real representation: [xr|xi] @ [[wr, wi], [-wi, wr]].
# Small mode counts: ONE lane-dense matmul with a precomputed block-diag weight.
# Large mode counts: 8 modes per grid step with a batched dot.
# ----------------------------------------------------------------------------
def _matmul_kernel(x_ref, w_ref, o_ref):
    o_ref[...] = jnp.dot(x_ref[...], w_ref[...],
                         preferred_element_type=jnp.float32).astype(o_ref.dtype)


def mode_mix_folded(x_flat, w_bd):
    """x_flat: [B, M*2C]; w_bd (precomputed block-diag): [M*2C, M*2Cout]."""
    B, K = x_flat.shape
    Ko = w_bd.shape[1]
    return pl.pallas_call(
        _matmul_kernel,
        out_shape=jax.ShapeDtypeStruct((B, Ko), jnp.float32),
        grid_spec=pltpu.PrefetchScalarGridSpec(
            num_scalar_prefetch=0,
            grid=(1,),
            in_specs=[pl.BlockSpec((B, K), lambda i: (0, 0)),
                      pl.BlockSpec((K, Ko), lambda i: (0, 0))],
            out_specs=pl.BlockSpec((B, Ko), lambda i: (0, 0)),
        ),
        compiler_params=pltpu.CompilerParams(
            dimension_semantics=("arbitrary",),
            vmem_limit_bytes=_VMEM_LIMIT),
    )(x_flat, w_bd)


def _mode_tile_kernel(x_ref, w_ref, o_ref):
    o_ref[...] = jax.lax.dot_general(
        x_ref[...], w_ref[...],
        dimension_numbers=(((2,), (1,)), ((0,), (0,))),
        preferred_element_type=jnp.float32).astype(o_ref.dtype)


def mode_mix_tiled(x_stack, w_real, modes_per_tile=8):
    """x_stack: [B, M, 2C]; w_real: [M, 2C, 2Cout] -> [B, M, 2Cout]."""
    B, M, C2 = x_stack.shape
    Co2 = w_real.shape[2]
    mt = min(modes_per_tile, M)
    m_pad = pl.cdiv(M, mt) * mt
    xm = x_stack.transpose(1, 0, 2)                    # [M, B, 2C]
    if m_pad != M:
        xm = jnp.pad(xm, ((0, m_pad - M), (0, 0), (0, 0)))
        w_real = jnp.pad(w_real, ((0, m_pad - M), (0, 0), (0, 0)))
    y = pl.pallas_call(
        _mode_tile_kernel,
        out_shape=jax.ShapeDtypeStruct((m_pad, B, Co2), jnp.float32),
        grid_spec=pltpu.PrefetchScalarGridSpec(
            num_scalar_prefetch=0,
            grid=(m_pad // mt,),
            in_specs=[pl.BlockSpec((mt, B, C2), lambda m: (m, 0, 0)),
                      pl.BlockSpec((mt, C2, Co2), lambda m: (m, 0, 0))],
            out_specs=pl.BlockSpec((mt, B, Co2), lambda m: (m, 0, 0)),
        ),
        compiler_params=pltpu.CompilerParams(
            dimension_semantics=("parallel",),
            vmem_limit_bytes=_VMEM_LIMIT),
    )(xm, w_real)
    return y[:M].transpose(1, 0, 2)


# ----------------------------------------------------------------------------
# SpectralConv2d on channels-first flat activations [C, N] (N = B*Nx*Ny).
# ----------------------------------------------------------------------------
def spectral_conv2d_t(h_t, w_mix, B, Nx, Ny, modes1, modes2):
    C = h_t.shape[0]
    M = modes1 * modes2

    h = h_t.astype(jnp.float32).reshape(C, B, Nx, Ny)
    h_ft = jnp.fft.rfft2(h, axes=(-2, -1), norm='ortho')       # [C, B, Nx, Ny//2+1]
    xt = h_ft[:, :, :modes1, :modes2]                           # [C, B, m1, m2]

    xr = jnp.real(xt).transpose(1, 2, 3, 0)                     # [B, m1, m2, C]
    xi = jnp.imag(xt).transpose(1, 2, 3, 0)
    x_stack = jnp.concatenate([xr, xi], axis=-1)                # [B, m1, m2, 2C]

    if w_mix.ndim == 2:                                         # folded block-diag
        Cout = w_mix.shape[1] // (2 * M)
        y = mode_mix_folded(x_stack.reshape(B, M * 2 * C), w_mix)
    else:                                                       # per-mode tiles
        Cout = w_mix.shape[2] // 2
        y = mode_mix_tiled(x_stack.reshape(B, M, 2 * C), w_mix)
    y = y.reshape(B, modes1, modes2, 2, Cout)
    out_low = (y[..., 0, :] + 1j * y[..., 1, :]).transpose(3, 0, 1, 2)

    # TODO(synk): zero-fill + scatter of the truncated spectrum stays in XLA
    # (irfft2 needs the full half-spectrum array; no Pallas FFT available).
    out_ft = jnp.zeros((Cout, B, Nx, Ny // 2 + 1), dtype=jnp.complex64)
    out_ft = out_ft.at[:, :, :modes1, :modes2].set(out_low)
    out = jnp.fft.irfft2(out_ft, s=(Nx, Ny), axes=(-2, -1), norm='ortho')
    return out.reshape(Cout, B * Nx * Ny)                       # f32, consumed directly


# ----------------------------------------------------------------------------
# Precompute the spectral mixing weights (hoisted out of the forward path).
# ----------------------------------------------------------------------------
def prepare_spectral_weights(p, modes1, modes2, width,
                             fold_threshold=_FOLD_THRESHOLD):
    M = modes1 * modes2
    prepared = dict(p)
    for l in range(4):
        wr = p[f'spec{l}_wr']
        wi = p[f'spec{l}_wi']
        wr_m = wr.transpose(2, 3, 0, 1).reshape(M, width, width)
        wi_m = wi.transpose(2, 3, 0, 1).reshape(M, width, width)
        w_real = jnp.concatenate(
            [jnp.concatenate([wr_m, wi_m], axis=-1),
             jnp.concatenate([-wi_m, wr_m], axis=-1)], axis=1)  # [M, 2C, 2Cout]
        if M * 2 * width <= fold_threshold:
            eye = jnp.eye(M, dtype=w_real.dtype)
            w_mix = (eye[:, None, :, None] * w_real[:, :, None, :]
                     ).reshape(M * 2 * width, M * 2 * width)    # block-diagonal
        else:
            w_mix = w_real
        prepared[f'spec{l}_wmix'] = w_mix
    return prepared


# ----------------------------------------------------------------------------
# Full FNO2d forward (matches the PyTorch module semantics)
# ----------------------------------------------------------------------------
def fno2d_forward(x, p, modes1, modes2):
    """x: [B, Nx, Ny, 3] -> [B, Nx, Ny].  `p` must contain spec{l}_wmix."""
    B, Nx, Ny, _ = x.shape
    N = B * Nx * Ny
    act_dtype = jnp.bfloat16   # inter-layer activation storage dtype

    # Channels-first flat layout [C, N]; N (spatial) sits on the lane axis.
    x_t = x.transpose(3, 0, 1, 2).reshape(3, N)                 # f32, read directly
    h_t = pointwise_linear_t(x_t, p['fc0_w'], p['fc0_b'],
                             out_dtype=act_dtype)               # [W, N] bf16

    for l in range(3):
        spec_t = spectral_conv2d_t(h_t, p[f'spec{l}_wmix'],
                                   B, Nx, Ny, modes1, modes2)   # [W, N] f32
        h_t = pointwise_linear_t(h_t, p[f'w{l}_w'], p[f'w{l}_b'],
                                 residual_t=spec_t, relu=True,
                                 out_dtype=act_dtype)           # [W, N] bf16

    # Last layer (no ReLU) is fused with fc1/fc2 inside one kernel.
    spec3_t = spectral_conv2d_t(h_t, p['spec3_wmix'], B, Nx, Ny, modes1, modes2)
    out_t = fused_tail_head(h_t, spec3_t,
                            p['w3_w'], p['w3_b'],
                            p['fc1_w'], p['fc1_b'],
                            p['fc2_w'], p['fc2_b'])             # [1, N] f32
    return out_t.reshape(B, Nx, Ny)


# ----------------------------------------------------------------------------
# Pure-JAX reference (mirrors the PyTorch NCHW computation) for validation.
# ----------------------------------------------------------------------------
def reference_forward(x, p, modes1, modes2):
    def spec(h, wr, wi):
        B, C, Nx, Ny = h.shape
        hf = jnp.fft.rfft2(h, norm='ortho')
        w = wr + 1j * wi
        out = jnp.einsum('bixy,ioxy->boxy', hf[:, :, :modes1, :modes2], w)
        out_ft = jnp.zeros((B, wr.shape[1], Nx, Ny // 2 + 1), dtype=jnp.complex64)
        out_ft = out_ft.at[:, :, :modes1, :modes2].set(out)
        return jnp.fft.irfft2(out_ft, s=(Nx, Ny), norm='ortho')

    h = x @ p['fc0_w'] + p['fc0_b']            # [B, Nx, Ny, W]
    h = h.transpose(0, 3, 1, 2)                # NCHW
    for l in range(4):
        x1 = spec(h, p[f'spec{l}_wr'], p[f'spec{l}_wi'])
        x2 = jnp.einsum('bcxy,cd->bdxy', h, p[f'w{l}_w']) \
            + p[f'w{l}_b'].reshape(1, -1, 1, 1)
        h = x1 + x2
        if l < 3:
            h = jax.nn.relu(h)
    h = h.transpose(0, 2, 3, 1)                # back to NHWC
    h = jax.nn.relu(h @ p['fc1_w'] + p['fc1_b'])
    h = h @ p['fc2_w'] + p['fc2_b']
    return h[..., 0]


# ----------------------------------------------------------------------------
# Deterministic parameter initialization (shapes from FNO2d.__init__)
# ----------------------------------------------------------------------------
def init_params(key, width, modes1, modes2):
    keys = jax.random.split(key, 24)
    scale = 1.0 / (width * width)
    p = {}
    p['fc0_w'] = jax.random.normal(keys[0], (3, width), jnp.float32) * 0.3
    p['fc0_b'] = jax.random.normal(keys[1], (1, width), jnp.float32) * 0.1
    k = 2
    for l in range(4):
        p[f'spec{l}_wr'] = scale * jax.random.uniform(
            keys[k], (width, width, modes1, modes2), jnp.float32); k += 1
        p[f'spec{l}_wi'] = scale * jax.random.uniform(
            keys[k], (width, width, modes1, modes2), jnp.float32); k += 1
        p[f'w{l}_w'] = jax.random.normal(
            keys[k], (width, width), jnp.float32) / np.sqrt(width); k += 1
        p[f'w{l}_b'] = jax.random.normal(
            keys[k], (1, width), jnp.float32) * 0.05; k += 1
    p['fc1_w'] = jax.random.normal(keys[k], (width, 128), jnp.float32) / np.sqrt(width); k += 1
    p['fc1_b'] = jax.random.normal(keys[k], (1, 128), jnp.float32) * 0.05; k += 1
    p['fc2_w'] = jax.random.normal(keys[k], (128, 1), jnp.float32) / np.sqrt(128.0); k += 1
    p['fc2_b'] = jax.random.normal(keys[k], (1, 1), jnp.float32) * 0.05
    return p


if __name__ == "__main__":
    B, Nx, Ny = 2, 16, 16
    modes1, modes2, width = 4, 4, 16

    key = jax.random.PRNGKey(0)
    kx, kp = jax.random.split(key)
    x = jax.random.normal(kx, (B, Nx, Ny, 3), jnp.float32)
    params = init_params(kp, width, modes1, modes2)

    # Hoisted once (not per forward call): block-diag spectral mixing weights.
    prepared = prepare_spectral_weights(params, modes1, modes2, width)

    fwd = jax.jit(functools.partial(fno2d_forward, modes1=modes1, modes2=modes2))
    out = jax.block_until_ready(fwd(x, prepared))
    assert out.shape == (B, Nx, Ny)

    ref = reference_forward(x, params, modes1, modes2)
    # bf16 activation storage in the Pallas path -> loosened tolerances.
    np.testing.assert_allclose(np.asarray(out, dtype=np.float32),
                               np.asarray(ref, dtype=np.float32),
                               rtol=5e-2, atol=5e-2)
    print("KERNEL_OK")
</pallas_src>

<mosaic_0001>
module attributes {stable_mosaic.version = 11 : i64} {
  func.func @kernel(%arg0: i32, %arg1: memref<3x256xf32, #tpu.memory_space<vmem>>, %arg2: memref<16x3xf32, #tpu.memory_space<vmem>>, %arg3: memref<16x1xf32, #tpu.memory_space<vmem>>, %arg4: memref<16x256xbf16, #tpu.memory_space<vmem>>) attributes {dimension_semantics = [#tpu.dimension_semantics<parallel>], iteration_bounds = array<i64: 2>, scalar_prefetch = 0 : i64, scratch_operands = 0 : i64, tpu.core_type = #tpu.core_type<tc>, window_params = [{transform_indices = @transform_0, window_bounds = array<i64: 3, 256>}, {pipeline_mode = #tpu.pipeline_mode<synchronous>, transform_indices = @transform_1, window_bounds = array<i64: 16, 3>}, {pipeline_mode = #tpu.pipeline_mode<synchronous>, transform_indices = @transform_2, window_bounds = array<i64: 16, 1>}, {transform_indices = @transform_3, window_bounds = array<i64: 16, 256>}]} {
    %c0 = arith.constant 0 : index
    %c0_0 = arith.constant 0 : index
    %0 = vector.load %arg2[%c0, %c0_0] : memref<16x3xf32, #tpu.memory_space<vmem>>, vector<16x3xf32>
    %c0_1 = arith.constant 0 : index
    %c0_2 = arith.constant 0 : index
    %1 = vector.load %arg1[%c0_1, %c0_2] : memref<3x256xf32, #tpu.memory_space<vmem>>, vector<3x256xf32>
    %cst = arith.constant dense<0.000000e+00> : vector<16x256xf32>
    %2 = tpu.matmul %0, %1, %cst {dimension_numbers = #tpu.dot_dimension_numbers<[1], [0], [0], [1], [0, 0, 1, 1], [], []>} : vector<16x3xf32>, vector<3x256xf32>, vector<16x256xf32> -> vector<16x256xf32>
    %c0_3 = arith.constant 0 : index
    %c0_4 = arith.constant 0 : index
    %3 = vector.load %arg3[%c0_3, %c0_4] : memref<16x1xf32, #tpu.memory_space<vmem>>, vector<16x1xf32>
    %4 = vector.broadcast %3 : vector<16x1xf32> to vector<16x256xf32>
    %5 = arith.addf %2, %4 : vector<16x256xf32>
    %6 = arith.truncf %5 : vector<16x256xf32> to vector<16x256xbf16>
    %c0_5 = arith.constant 0 : index
    %c0_6 = arith.constant 0 : index
    %7 = vector.load %arg4[%c0_5, %c0_6] : memref<16x256xbf16, #tpu.memory_space<vmem>>, vector<16x256xbf16>
    tpu.vector_store %arg4[%c0_5, %c0_6], %6 {strides = array<i32>} : memref<16x256xbf16, #tpu.memory_space<vmem>>, vector<16x256xbf16>,
    return
  }
  func.func @transform_0(%arg0: i32) -> (i32, i32) {
    %c0_i32 = arith.constant 0 : i32
    %c0_i32_0 = arith.constant 0 : i32
    return %c0_i32, %arg0 : i32, i32
  }
  func.func @transform_1(%arg0: i32) -> (i32, i32) {
    %c0_i32 = arith.constant 0 : i32
    %c0_i32_0 = arith.constant 0 : i32
    %c0_i32_1 = arith.constant 0 : i32
    return %c0_i32, %c0_i32_0 : i32, i32
  }
  func.func @transform_2(%arg0: i32) -> (i32, i32) {
    %c0_i32 = arith.constant 0 : i32
    %c0_i32_0 = arith.constant 0 : i32
    %c0_i32_1 = arith.constant 0 : i32
    return %c0_i32, %c0_i32_0 : i32, i32
  }
  func.func @transform_3(%arg0: i32) -> (i32, i32) {
    %c0_i32 = arith.constant 0 : i32
    %c0_i32_0 = arith.constant 0 : i32
    return %c0_i32, %arg0 : i32, i32
  }
}

module attributes {stable_mosaic.version = 11 : i64} {
  func.func @_matmul_kernel(%arg0: i32, %arg1: memref<2x512xf32, #tpu.memory_space<vmem>>, %arg2: memref<512x512xf32, #tpu.memory_space<vmem>>, %arg3: memref<2x512xf32, #tpu.memory_space<vmem>>) attributes {dimension_semantics = [#tpu.dimension_semantics<arbitrary>], iteration_bounds = array<i64: 1>, scalar_prefetch = 0 : i64, scratch_operands = 0 : i64, tpu.core_type = #tpu.core_type<tc>, window_params = [{pipeline_mode = #tpu.pipeline_mode<synchronous>, transform_indices = @transform_0, window_bounds = array<i64: 2, 512>}, {pipeline_mode = #tpu.pipeline_mode<synchronous>, transform_indices = @transform_1, window_bounds = array<i64: 512, 512>}, {pipeline_mode = #tpu.pipeline_mode<synchronous>, transform_indices = @transform_2, window_bounds = array<i64: 2, 512>}]} {
    %c0 = arith.constant 0 : index
    %c0_0 = arith.constant 0 : index
    %0 = vector.load %arg1[%c0, %c0_0] : memref<2x512xf32, #tpu.memory_space<vmem>>, vector<2x512xf32>
    %c0_1 = arith.constant 0 : index
    %c0_2 = arith.constant 0 : index
    %1 = vector.load %arg2[%c0_1, %c0_2] : memref<512x512xf32, #tpu.memory_space<vmem>>, vector<512x512xf32>
    %cst = arith.constant dense<0.000000e+00> : vector<2x512xf32>
    %2 = tpu.matmul %0, %1, %cst {dimension_numbers = #tpu.dot_dimension_numbers<[1], [0], [0], [1], [0, 0, 1, 1], [], []>} : vector<2x512xf32>, vector<512x512xf32>, vector<2x512xf32> -> vector<2x512xf32>
    %c0_3 = arith.constant 0 : index
    %c0_4 = arith.constant 0 : index
    %3 = vector.load %arg3[%c0_3, %c0_4] : memref<2x512xf32, #tpu.memory_space<vmem>>, vector<2x512xf32>
    tpu.vector_store %arg3[%c0_3, %c0_4], %2 {strides = array<i32>} : memref<2x512xf32, #tpu.memory_space<vmem>>, vector<2x512xf32>,
    return
  }
  func.func @transform_0(%arg0: i32) -> (i32, i32) {
    %c0_i32 = arith.constant 0 : i32
    %c0_i32_0 = arith.constant 0 : i32
    %c0_i32_1 = arith.constant 0 : i32
    return %c0_i32, %c0_i32_0 : i32, i32
  }
  func.func @transform_1(%arg0: i32) -> (i32, i32) {
    %c0_i32 = arith.constant 0 : i32
    %c0_i32_0 = arith.constant 0 : i32
    %c0_i32_1 = arith.constant 0 : i32
    return %c0_i32, %c0_i32_0 : i32, i32
  }
  func.func @transform_2(%arg0: i32) -> (i32, i32) {
    %c0_i32 = arith.constant 0 : i32
    %c0_i32_0 = arith.constant 0 : i32
    %c0_i32_1 = arith.constant 0 : i32
    return %c0_i32, %c0_i32_0 : i32, i32
  }
}

module attributes {stable_mosaic.version = 11 : i64} {
  func.func @kernel(%arg0: i32, %arg1: memref<16x256xbf16, #tpu.memory_space<vmem>>, %arg2: memref<16x16xf32, #tpu.memory_space<vmem>>, %arg3: memref<16x1xf32, #tpu.memory_space<vmem>>, %arg4: memref<16x256xf32, #tpu.memory_space<vmem>>, %arg5: memref<16x256xbf16, #tpu.memory_space<vmem>>) attributes {dimension_semantics = [#tpu.dimension_semantics<parallel>], iteration_bounds = array<i64: 2>, scalar_prefetch = 0 : i64, scratch_operands = 0 : i64, tpu.core_type = #tpu.core_type<tc>, window_params = [{transform_indices = @transform_0, window_bounds = array<i64: 16, 256>}, {pipeline_mode = #tpu.pipeline_mode<synchronous>, transform_indices = @transform_1, window_bounds = array<i64: 16, 16>}, {pipeline_mode = #tpu.pipeline_mode<synchronous>, transform_indices = @transform_2, window_bounds = array<i64: 16, 1>}, {transform_indices = @transform_3, window_bounds = array<i64: 16, 256>}, {transform_indices = @transform_4, window_bounds = array<i64: 16, 256>}]} {
    %c0 = arith.constant 0 : index
    %c0_0 = arith.constant 0 : index
    %0 = vector.load %arg2[%c0, %c0_0] : memref<16x16xf32, #tpu.memory_space<vmem>>, vector<16x16xf32>
    %c0_1 = arith.constant 0 : index
    %c0_2 = arith.constant 0 : index
    %1 = vector.load %arg1[%c0_1, %c0_2] : memref<16x256xbf16, #tpu.memory_space<vmem>>, vector<16x256xbf16>
    %2 = arith.extf %1 : vector<16x256xbf16> to vector<16x256xf32>
    %cst = arith.constant dense<0.000000e+00> : vector<16x256xf32>
    %3 = tpu.matmul %0, %2, %cst {dimension_numbers = #tpu.dot_dimension_numbers<[1], [0], [0], [1], [0, 0, 1, 1], [], []>} : vector<16x16xf32>, vector<16x256xf32>, vector<16x256xf32> -> vector<16x256xf32>
    %c0_3 = arith.constant 0 : index
    %c0_4 = arith.constant 0 : index
    %4 = vector.load %arg3[%c0_3, %c0_4] : memref<16x1xf32, #tpu.memory_space<vmem>>, vector<16x1xf32>
    %5 = vector.broadcast %4 : vector<16x1xf32> to vector<16x256xf32>
    %6 = arith.addf %3, %5 : vector<16x256xf32>
    %c0_5 = arith.constant 0 : index
    %c0_6 = arith.constant 0 : index
    %7 = vector.load %arg4[%c0_5, %c0_6] : memref<16x256xf32, #tpu.memory_space<vmem>>, vector<16x256xf32>
    %8 = arith.addf %6, %7 : vector<16x256xf32>
    %cst_7 = arith.constant 0.000000e+00 : f32
    %9 = vector.broadcast %cst_7 : f32 to vector<16x256xf32>
    %10 = arith.maximumf %8, %9 : vector<16x256xf32>
    %11 = arith.truncf %10 : vector<16x256xf32> to vector<16x256xbf16>
    %c0_8 = arith.constant 0 : index
    %c0_9 = arith.constant 0 : index
    %12 = vector.load %arg5[%c0_8, %c0_9] : memref<16x256xbf16, #tpu.memory_space<vmem>>, vector<16x256xbf16>
    tpu.vector_store %arg5[%c0_8, %c0_9], %11 {strides = array<i32>} : memref<16x256xbf16, #tpu.memory_space<vmem>>, vector<16x256xbf16>,
    return
  }
  func.func @transform_0(%arg0: i32) -> (i32, i32) {
    %c0_i32 = arith.constant 0 : i32
    %c0_i32_0 = arith.constant 0 : i32
    return %c0_i32, %arg0 : i32, i32
  }
  func.func @transform_1(%arg0: i32) -> (i32, i32) {
    %c0_i32 = arith.constant 0 : i32
    %c0_i32_0 = arith.constant 0 : i32
    %c0_i32_1 = arith.constant 0 : i32
    return %c0_i32, %c0_i32_0 : i32, i32
  }
  func.func @transform_2(%arg0: i32) -> (i32, i32) {
    %c0_i32 = arith.constant 0 : i32
    %c0_i32_0 = arith.constant 0 : i32
    %c0_i32_1 = arith.constant 0 : i32
    return %c0_i32, %c0_i32_0 : i32, i32
  }
  func.func @transform_3(%arg0: i32) -> (i32, i32) {
    %c0_i32 = arith.constant 0 : i32
    %c0_i32_0 = arith.constant 0 : i32
    return %c0_i32, %arg0 : i32, i32
  }
  func.func @transform_4(%arg0: i32) -> (i32, i32) {
    %c0_i32 = arith.constant 0 : i32
    %c0_i32_0 = arith.constant 0 : i32
    return %c0_i32, %arg0 : i32, i32
  }
}

module attributes {stable_mosaic.version = 11 : i64} {
  func.func @_fused_tail_head_kernel(%arg0: i32, %arg1: memref<16x256xbf16, #tpu.memory_space<vmem>>, %arg2: memref<16x256xf32, #tpu.memory_space<vmem>>, %arg3: memref<16x16xf32, #tpu.memory_space<vmem>>, %arg4: memref<16x1xf32, #tpu.memory_space<vmem>>, %arg5: memref<128x16xf32, #tpu.memory_space<vmem>>, %arg6: memref<128x1xf32, #tpu.memory_space<vmem>>, %arg7: memref<1x128xf32, #tpu.memory_space<vmem>>, %arg8: memref<1x1xf32, #tpu.memory_space<vmem>>, %arg9: memref<1x256xf32, #tpu.memory_space<vmem>>) attributes {dimension_semantics = [#tpu.dimension_semantics<parallel>], iteration_bounds = array<i64: 2>, scalar_prefetch = 0 : i64, scratch_operands = 0 : i64, tpu.core_type = #tpu.core_type<tc>, window_params = [{transform_indices = @transform_0, window_bounds = array<i64: 16, 256>}, {transform_indices = @transform_1, window_bounds = array<i64: 16, 256>}, {pipeline_mode = #tpu.pipeline_mode<synchronous>, transform_indices = @transform_2, window_bounds = array<i64: 16, 16>}, {pipeline_mode = #tpu.pipeline_mode<synchronous>, transform_indices = @transform_3, window_bounds = array<i64: 16, 1>}, {pipeline_mode = #tpu.pipeline_mode<synchronous>, transform_indices = @transform_4, window_bounds = array<i64: 128, 16>}, {pipeline_mode = #tpu.pipeline_mode<synchronous>, transform_indices = @transform_5, window_bounds = array<i64: 128, 1>}, {pipeline_mode = #tpu.pipeline_mode<synchronous>, transform_indices = @transform_6, window_bounds = array<i64: 1, 128>}, {pipeline_mode = #tpu.pipeline_mode<synchronous>, transform_indices = @transform_7, window_bounds = array<i64: 1, 1>}, {transform_indices = @transform_8, window_bounds = array<i64: 1, 256>}]} {
    %c0 = arith.constant 0 : index
    %c0_0 = arith.constant 0 : index
    %0 = vector.load %arg3[%c0, %c0_0] : memref<16x16xf32, #tpu.memory_space<vmem>>, vector<16x16xf32>
    %c0_1 = arith.constant 0 : index
    %c0_2 = arith.constant 0 : index
    %1 = vector.load %arg1[%c0_1, %c0_2] : memref<16x256xbf16, #tpu.memory_space<vmem>>, vector<16x256xbf16>
    %2 = arith.extf %1 : vector<16x256xbf16> to vector<16x256xf32>
    %cst = arith.constant dense<0.000000e+00> : vector<16x256xf32>
    %3 = tpu.matmul %0, %2, %cst {dimension_numbers = #tpu.dot_dimension_numbers<[1], [0], [0], [1], [0, 0, 1, 1], [], []>} : vector<16x16xf32>, vector<16x256xf32>, vector<16x256xf32> -> vector<16x256xf32>
    %c0_3 = arith.constant 0 : index
    %c0_4 = arith.constant 0 : index
    %4 = vector.load %arg4[%c0_3, %c0_4] : memref<16x1xf32, #tpu.memory_space<vmem>>, vector<16x1xf32>
    %5 = vector.broadcast %4 : vector<16x1xf32> to vector<16x256xf32>
    %6 = arith.addf %3, %5 : vector<16x256xf32>
    %c0_5 = arith.constant 0 : index
    %c0_6 = arith.constant 0 : index
    %7 = vector.load %arg2[%c0_5, %c0_6] : memref<16x256xf32, #tpu.memory_space<vmem>>, vector<16x256xf32>
    %8 = arith.addf %6, %7 : vector<16x256xf32>
    %c0_7 = arith.constant 0 : index
    %c0_8 = arith.constant 0 : index
    %9 = vector.load %arg5[%c0_7, %c0_8] : memref<128x16xf32, #tpu.memory_space<vmem>>, vector<128x16xf32>
    %cst_9 = arith.constant dense<0.000000e+00> : vector<128x256xf32>
    %10 = tpu.matmul %9, %8, %cst_9 {dimension_numbers = #tpu.dot_dimension_numbers<[1], [0], [0], [1], [0, 0, 1, 1], [], []>} : vector<128x16xf32>, vector<16x256xf32>, vector<128x256xf32> -> vector<128x256xf32>
    %c0_10 = arith.constant 0 : index
    %c0_11 = arith.constant 0 : index
    %11 = vector.load %arg6[%c0_10, %c0_11] : memref<128x1xf32, #tpu.memory_space<vmem>>, vector<128x1xf32>
    %12 = vector.broadcast %11 : vector<128x1xf32> to vector<128x256xf32>
    %13 = arith.addf %10, %12 : vector<128x256xf32>
    %cst_12 = arith.constant 0.000000e+00 : f32
    %14 = vector.broadcast %cst_12 : f32 to vector<128x256xf32>
    %15 = arith.maximumf %13, %14 : vector<128x256xf32>
    %c0_13 = arith.constant 0 : index
    %c0_14 = arith.constant 0 : index
    %16 = vector.load %arg7[%c0_13, %c0_14] : memref<1x128xf32, #tpu.memory_space<vmem>>, vector<1x128xf32>
    %cst_15 = arith.constant dense<0.000000e+00> : vector<1x256xf32>
    %17 = tpu.matmul %16, %15, %cst_15 {dimension_numbers = #tpu.dot_dimension_numbers<[1], [0], [0], [1], [0, 0, 1, 1], [], []>} : vector<1x128xf32>, vector<128x256xf32>, vector<1x256xf32> -> vector<1x256xf32>
    %c0_16 = arith.constant 0 : index
    %c0_17 = arith.constant 0 : index
    %18 = vector.load %arg8[%c0_16, %c0_17] : memref<1x1xf32, #tpu.memory_space<vmem>>, vector<1x1xf32>
    %19 = vector.broadcast %18 : vector<1x1xf32> to vector<1x256xf32>
    %20 = arith.addf %17, %19 : vector<1x256xf32>
    %c0_18 = arith.constant 0 : index
    %c0_19 = arith.constant 0 : index
    %21 = vector.load %arg9[%c0_18, %c0_19] : memref<1x256xf32, #tpu.memory_space<vmem>>, vector<1x256xf32>
    tpu.vector_store %arg9[%c0_18, %c0_19], %20 {strides = array<i32>} : memref<1x256xf32, #tpu.memory_space<vmem>>, vector<1x256xf32>,
    return
  }
  func.func @transform_0(%arg0: i32) -> (i32, i32) {
    %c0_i32 = arith.constant 0 : i32
    %c0_i32_0 = arith.constant 0 : i32
    return %c0_i32, %arg0 : i32, i32
  }
  func.func @transform_1(%arg0: i32) -> (i32, i32) {
    %c0_i32 = arith.constant 0 : i32
    %c0_i32_0 = arith.constant 0 : i32
    return %c0_i32, %arg0 : i32, i32
  }
  func.func @transform_2(%arg0: i32) -> (i32, i32) {
    %c0_i32 = arith.constant 0 : i32
    %c0_i32_0 = arith.constant 0 : i32
    %c0_i32_1 = arith.constant 0 : i32
    return %c0_i32, %c0_i32_0 : i32, i32
  }
  func.func @transform_3(%arg0: i32) -> (i32, i32) {
    %c0_i32 = arith.constant 0 : i32
    %c0_i32_0 = arith.constant 0 : i32
    %c0_i32_1 = arith.constant 0 : i32
    return %c0_i32, %c0_i32_0 : i32, i32
  }
  func.func @transform_4(%arg0: i32) -> (i32, i32) {
    %c0_i32 = arith.constant 0 : i32
    %c0_i32_0 = arith.constant 0 : i32
    %c0_i32_1 = arith.constant 0 : i32
    return %c0_i32, %c0_i32_0 : i32, i32
  }
  func.func @transform_5(%arg0: i32) -> (i32, i32) {
    %c0_i32 = arith.constant 0 : i32
    %c0_i32_0 = arith.constant 0 : i32
    %c0_i32_1 = arith.constant 0 : i32
    return %c0_i32, %c0_i32_0 : i32, i32
  }
  func.func @transform_6(%arg0: i32) -> (i32, i32) {
    %c0_i32 = arith.constant 0 : i32
    %c0_i32_0 = arith.constant 0 : i32
    %c0_i32_1 = arith.constant 0 : i32
    return %c0_i32, %c0_i32_0 : i32, i32
  }
  func.func @transform_7(%arg0: i32) -> (i32, i32) {
    %c0_i32 = arith.constant 0 : i32
    %c0_i32_0 = arith.constant 0 : i32
    %c0_i32_1 = arith.constant 0 : i32
    return %c0_i32, %c0_i32_0 : i32, i32
  }
  func.func @transform_8(%arg0: i32) -> (i32, i32) {
    %c0_i32 = arith.constant 0 : i32
    %c0_i32_0 = arith.constant 0 : i32
    return %c0_i32, %arg0 : i32, i32
  }
}

</mosaic_0001>

<llo_original>
// kernel: fno2d_forward.9
$region0: #{fno2d_forward.9}
  #allocation0 [shape = 'u32[]', space=smem, size = 0x4, offset = 0x4, fixed_abs, tag = 'smem constant byte address 0x4 - core index']
  #allocation1 [shape = 'u32[144,128]{1,0:T(1,128)}', space=vmem, size = 0x12000, scoped, tag = 'internal scratch']
  %s0 = inlined_call_operand.vmem [shape: f32[3,512], index: 0, kind: input, shape index: {}]
  %s1 = inlined_call_operand.vmem [shape: f32[16,3], index: 1, kind: input, shape index: {}]
  %s2 = inlined_call_operand.vmem [shape: f32[16,1], index: 2, kind: input, shape index: {}]
  %s3 = inlined_call_operand.vmem [shape: bf16[16,512], index: 3, kind: output, shape index: {}]
  %s4 = sld [smem:[#allocation0]]
  $region79: #{fno2d_forward.9} parent=0
    _
  %s6 = ssub.s32 1, %s4
  %s7 = scalar_select 0, %s6, %s4
  $region1: #{fno2d_forward.9} parent=0
    #allocation2 [shape = 'u8[16384]{0}', space=vmem, size = 0x4000, scoped, tag = 'output window, operand 0']
    loop: start=0, step=1, limit=4
    $region2: #{fno2d_forward.9} parent=1 // loop_pre_header
      _
    $region3: #{fno2d_forward.9} parent=1 // loop_header
      %s9 = sphi 0, %s13
      %p10 = scmp.ge.s32.totalorder %s9, 4
      %s19 = sphi 0, %s21
      %s22 = sphi 0, %s19
      %s23 = sphi 0, %s22
      %s39 = sphi 0, %s23
      %s43 = sphi 0, %s43
      %s45 = sphi 0, %s43
      %s46 = sphi 0, %s45
      %s60 = sphi 0, %s46
      %s64 = sphi 0, %s64
      %s66 = sphi 0, %s64
      %s67 = sphi 0, %s66
      %s81 = sphi 0, %s67
      %s87 = sphi 0, %s89
      %s90 = sphi 0, %s87
      %s91 = sphi 0, %s90
      %s107 = sphi 0, %s91
    $region4: #{fno2d_forward.9} parent=1 // loop_header_branch
      %12 = sbr.rel (%p10) target = $region8
    $region5: #{fno2d_forward.9} parent=1 // loop_body
      %s14 = ssub.s32 %s9, 1
      %s15 = ssub.s32 %s9, 2
      %s16 = sadd.s32 %s9, 1
      %s17 = ssub.s32 %s9, %s16
      %p18 = scmp.eq.s32.totalorder %s17, 0
      %s20 = sadd.s32 %s19, 1
      %s21 = scalar_select %p18, %s19, %s20
      %p24 = pneg %p18
      %p25 = scmp.eq.s32.totalorder %s9, 1
      %p26 = por %p24, %p25
      %p27 = scmp.ne.s32.totalorder %s19, %s22
      %p28 = scmp.eq.s32.totalorder %s9, 0
      %p29 = por %p27, %p28
      %p30 = scmp.ne.s32.totalorder %s19, %s22
      %p31 = scmp.eq.s32.totalorder %s14, 1
      %p32 = por %p30, %p31
      %p33 = scmp.ne.s32.totalorder %s22, %s23
      %p34 = scmp.eq.s32.totalorder %s14, 0
      %p35 = por %p33, %p34
      %p36 = scmp.ne.s32.totalorder %s22, %s23
      %p37 = scmp.eq.s32.totalorder %s15, 1
      %p38 = por %p36, %p37
      %p40 = scmp.ne.s32.totalorder %s23, %s39
      %p41 = scmp.eq.s32.totalorder %s15, 0
      %p42 = por %p40, %p41
      %s44 = sadd.s32 %s43, 1
      %p47 = scmp.eq.s32.totalorder %s9, 1
      %p48 = scmp.ne.s32.totalorder %s43, %s45
      %p49 = scmp.eq.s32.totalorder %s9, 0
      %p50 = por %p48, %p49
      %p51 = scmp.ne.s32.totalorder %s43, %s45
      %p52 = scmp.eq.s32.totalorder %s14, 1
      %p53 = por %p51, %p52
      %p54 = scmp.ne.s32.totalorder %s45, %s46
      %p55 = scmp.eq.s32.totalorder %s14, 0
      %p56 = por %p54, %p55
      %p57 = scmp.ne.s32.totalorder %s45, %s46
      %p58 = scmp.eq.s32.totalorder %s15, 1
      %p59 = por %p57, %p58
      %p61 = scmp.ne.s32.totalorder %s46, %s60
      %p62 = scmp.eq.s32.totalorder %s15, 0
      %p63 = por %p61, %p62
      %s65 = sadd.s32 %s64, 1
      %p68 = scmp.eq.s32.totalorder %s9, 1
      %p69 = scmp.ne.s32.totalorder %s64, %s66
      %p70 = scmp.eq.s32.totalorder %s9, 0
      %p71 = por %p69, %p70
      %p72 = scmp.ne.s32.totalorder %s64, %s66
      %p73 = scmp.eq.s32.totalorder %s14, 1
      %p74 = por %p72, %p73
      %p75 = scmp.ne.s32.totalorder %s66, %s67
      %p76 = scmp.eq.s32.totalorder %s14, 0
      %p77 = por %p75, %p76
      %p78 = scmp.ne.s32.totalorder %s66, %s67
      %p79 = scmp.eq.s32.totalorder %s15, 1
      %p80 = por %p78, %p79
      %p82 = scmp.ne.s32.totalorder %s67, %s81
      %p83 = scmp.eq.s32.totalorder %s15, 0
      %p84 = por %p82, %p83
      %s85 = ssub.s32 %s9, %s16
      %p86 = scmp.eq.s32.totalorder %s85, 0
      %s88 = sadd.s32 %s87, 1
      %s89 = scalar_select %p86, %s87, %s88
      %p92 = pneg %p86
      %p93 = scmp.eq.s32.totalorder %s9, 1
      %p94 = por %p92, %p93
      %p95 = scmp.ne.s32.totalorder %s87, %s90
      %p96 = scmp.eq.s32.totalorder %s9, 0
      %p97 = por %p95, %p96
      %p98 = scmp.ne.s32.totalorder %s87, %s90
      %p99 = scmp.eq.s32.totalorder %s14, 1
      %p100 = por %p98, %p99
      %p101 = scmp.ne.s32.totalorder %s90, %s91
      %p102 = scmp.eq.s32.totalorder %s14, 0
      %p103 = por %p101, %p102
      %p104 = scmp.ne.s32.totalorder %s90, %s91
      %p105 = scmp.eq.s32.totalorder %s15, 1
      %p106 = por %p104, %p105
      %p108 = scmp.ne.s32.totalorder %s91, %s107
      %p109 = scmp.eq.s32.totalorder %s15, 0
      %p110 = por %p108, %p109
      %p111 = scmp.le.s32.totalorder 1, %s9
      %p112 = scmp.lt.s32.totalorder %s9, 3
      %p113 = pnand %p111, %p112
      %p114 = pneg %p113
      // Predicated region
      $region9: #{fno2d_forward.9} parent=5 // pred_check
        _
      $region10: #{fno2d_forward.9} parent=5 // pred_check_branch
        %116 = sbr.rel (%p113) target = $region12
      $region11: #{fno2d_forward.9} parent=5 // pred_region
        %s117 = ssub.s32 %s9, 1
        // Predicated region
        $region13: #{fno2d_forward.9} parent=11 // pred_check
          %p118 = pneg %p56
        $region14: #{fno2d_forward.9} parent=11 // pred_check_branch
          %120 = sbr.rel (%p118) target = $region16
        $region15: #{fno2d_forward.9} parent=11 // pred_region
          _
        $region16: #{fno2d_forward.9} parent=11 // pred_fallthru
          _
        // Predicated region
        $region17: #{fno2d_forward.9} parent=11 // pred_check
          %p121 = pneg %p77
        $region18: #{fno2d_forward.9} parent=11 // pred_check_branch
          %123 = sbr.rel (%p121) target = $region20
        $region19: #{fno2d_forward.9} parent=11 // pred_region
          _
        $region20: #{fno2d_forward.9} parent=11 // pred_fallthru
          _
      $region12: #{fno2d_forward.9} parent=5 // pred_fallthru
        _
      %p124 = scmp.lt.s32.totalorder %s9, 2
      // Predicated region
      $region21: #{fno2d_forward.9} parent=5 // pred_check
        %p125 = pneg %p124
      $region22: #{fno2d_forward.9} parent=5 // pred_check_branch
        %127 = sbr.rel (%p125) target = $region24
      $region23: #{fno2d_forward.9} parent=5 // pred_region
        // Predicated region
        $region25: #{fno2d_forward.9} parent=23 // pred_check
          %p128 = pneg %p29
        $region26: #{fno2d_forward.9} parent=23 // pred_check_branch
          %130 = sbr.rel (%p128) target = $region28
        $region27: #{fno2d_forward.9} parent=23 // pred_region
          %s131 = smul.u32 2, %s9
          %p132 = scmp.lt.s32.totalorder %s131, 3
          %s133 = scalar_select %p132, %s131, 3
          %s134 = smul.addr %s133, 4
          %s135 = scalar_lea.vmem %s0, %s134
          %s136 = smul.u32 2, %s9
        $region28: #{fno2d_forward.9} parent=23 // pred_fallthru
          _
      $region24: #{fno2d_forward.9} parent=5 // pred_fallthru
        _
      %p137 = scmp.le.s32.totalorder 1, %s9
      %p138 = scmp.lt.s32.totalorder %s9, 3
      %p139 = pnand %p137, %p138
      %p140 = pneg %p139
      // Predicated region
      $region29: #{fno2d_forward.9} parent=5 // pred_check
        _
      $region30: #{fno2d_forward.9} parent=5 // pred_check_branch
        %142 = sbr.rel (%p139) target = $region32
      $region31: #{fno2d_forward.9} parent=5 // pred_region
        %s143 = ssub.s32 %s9, 1
        %s144 = smul.u32 2, %s14
        %p145 = scmp.lt.s32.totalorder %s144, 3
        %s146 = scalar_select %p145, %s144, 3
        %s147 = smul.addr %s146, 4
        %s148 = scalar_lea.vmem %s0, %s147
        %p149 = pneg %p35
        %p150 = pneg %p32
        %p151 = pneg %p56
        %p152 = pneg %p53
        %p153 = pneg %p77
        %p154 = pneg %p74
        %p155 = pneg %p103
        %p156 = pneg %p100
        %s157 = sand.u32 %s90, 1
        %s158 = sand.u32 %s90, 1
        %s159 = smul.addr %s158, 16
        %s160 = scalar_lea.vmem [#allocation2], %s159
        %s161 = smul.u32 2, %s14
        %p162 = scmp.lt.s32.totalorder %s161, 3
        %s163 = scalar_select %p162, %s161, 3
        %s164 = smul.addr %s163, 4
        %s165 = scalar_lea.vmem %s0, %s164
        %s166 = smul.u32 2, %s14
        %s167 = smul.u32 2, %s14
        %v168 = vld [vmem:[%s1] sm:$0xff]
        %v169 = vld [vmem:[%s1 + $0x8] sm:$0xff]
        %v170 = vld [vmem:[%s165] sm:$0x77]
        %v171 = vld [vmem:[%s2] sm:$0xff]
        %v172 = vld [vmem:[%s2 + $0x8] sm:$0xff]
        %174 = vset.pattern.permute.xlu0 0
        %175 = vperm.xlu0 %174, %v171
        %v176 = vpop.permute.xlu0 %175
        %179 = vset.pattern.permute.xlu0 0
        %180 = vperm.xlu0 %179, %v172
        %v181 = vpop.permute.xlu0 %180
        %v184 = vcombine.high %v170, %v170
        %vm185 = vcmask 23552
        %v187 = vsel %vm185, %v168, 0
        %v190 = vsel %vm185, %v169, 0
        %vm192 = vcmask 1042432
        %v193 = vsel %vm192, %v170, 0
        %v195 = vsel %vm192, %v184, 0
        %197 = vmatprep.subr.mxu0 0.0
        %198 = vmatpush1.msra.mxu0 0.0
        %199 = vmatprep.subr.mxu0 0.0
        %200 = vmatpush1.msra.mxu0 0.0
        %201 = vmatprep.subr.mxu0 0.0
        %202 = vmatpush1.msra.mxu0 0.0
        %203 = vmatprep.subr.mxu0 0.0
        %204 = vmatpush1.msra.mxu0 0.0
        %205 = vmatprep.subr.mxu0 0.0
        %206 = vmatpush1.msra.mxu0 0.0
        %207 = vmatprep.subr.mxu0 0.0
        %208 = vmatpush1.msra.mxu0 0.0
        %209 = vmatprep.subr.mxu0 0.0
        %210 = vmatpush1.msra.mxu0 0.0
        %211 = vmatprep.subr.mxu0 0.0
        %212 = vmatpush1.msra.mxu0 0.0
        %213 = vmatprep.subr.mxu0 0.0
        %214 = vmatpush1.msra.mxu0 0.0
        %215 = vmatprep.subr.mxu0 0.0
        %216 = vmatpush1.msra.mxu0 0.0
        %217 = vmatprep.subr.mxu0 0.0
        %218 = vmatpush1.msra.mxu0 0.0
        %219 = vmatprep.subr.mxu0 0.0
        %220 = vmatpush1.msra.mxu0 0.0
        %221 = vmatprep.subr.mxu0 0.0
        %222 = vmatpush1.msra.mxu0 0.0
        %223 = vmatprep.subr.mxu0 0.0
        %224 = vmatpush1.msra.mxu0 0.0
        %225 = vmatprep.subr.mxu0 0.0
        %226 = vmatpush1.msra.mxu0 0.0
        %227 = vmatprep.subr.mxu0 %v195
        %228 = vmatpush1.msra.mxu0 %v193
        %229 = vmatprep.subr.mxu0 0.0
        %230 = vmatpush2.msra.mxu0 0.0
        %231 = vmatprep.subr.mxu0 0.0
        %232 = vmatpush2.msra.mxu0 0.0
        %233 = vmatprep.subr.mxu0 0.0
        %234 = vmatpush2.msra.mxu0 0.0
        %235 = vmatprep.subr.mxu0 0.0
        %236 = vmatpush2.msra.mxu0 0.0
        %237 = vmatprep.subr.mxu0 0.0
        %238 = vmatpush2.msra.mxu0 0.0
        %239 = vmatprep.subr.mxu0 0.0
        %240 = vmatpush2.msra.mxu0 0.0
        %241 = vmatprep.subr.mxu0 0.0
        %242 = vmatpush2.msra.mxu0 0.0
        %243 = vmatprep.subr.mxu0 0.0
        %244 = vmatpush2.msra.mxu0 0.0
        %245 = vmatprep.subr.mxu0 0.0
        %246 = vmatpush2.msra.mxu0 0.0
        %247 = vmatprep.subr.mxu0 0.0
        %248 = vmatpush2.msra.mxu0 0.0
        %249 = vmatprep.subr.mxu0 0.0
        %250 = vmatpush2.msra.mxu0 0.0
        %251 = vmatprep.subr.mxu0 0.0
        %252 = vmatpush2.msra.mxu0 0.0
        %253 = vmatprep.subr.mxu0 0.0
        %254 = vmatpush2.msra.mxu0 0.0
        %255 = vmatprep.subr.mxu0 0.0
        %256 = vmatpush2.msra.mxu0 0.0
        %257 = vmatprep.subr.mxu0 0.0
        %258 = vmatpush2.msra.mxu0 0.0
        %259 = vmatprep.subr.mxu0 0.0
        %260 = vmatpush2.msra.mxu0 0.0
        %261 = vmatprep.mubr.f32.mxu0 0.0
        %262 = vmatmul.mubr.f32.gmra.mxu0 %v187
        %v263 = vpop.f32.mrf.mxu0
        %v264 = vadd.f32 %v176, %v263
        %v265 = vpop.f32.mrf.mxu0
        %v266 = vadd.f32 %v176, %v265
        %267 = vmatprep.mubr.f32.mxu0 0.0
        %268 = vmatmul.mubr.f32.gmra.mxu0 %v190
        %v269 = vpop.f32.mrf.mxu0
        %v270 = vadd.f32 %v181, %v269
        %v271 = vpop.f32.mrf.mxu0
        %v272 = vadd.f32 %v181, %v271
        %273 = vdwg.mxu0
        %v274 = vpack.c.bf16 %v270, %v264
        %v275 = vpack.c.bf16 %v272, %v266
        %v278 = vunpack.c.l.b16 %v274
        %v279 = vunpack.c.l.b16 %v275
        %v280 = vunpack.c.h.b16 %v274
        %v281 = vunpack.c.h.b16 %v275
        %v282 = vpack.c.b16 %v279, %v278
        %v283 = vpack.c.b16 %v281, %v280
        %286 = vst [vmem:[%s160] sm:$0xff] %v282
        %287 = vst [vmem:[%s160 + $0x8] sm:$0xff] %v283
        %s288 = sand.u32 %s90, 1
        %s289 = sand.u32 %s90, 1
        %s290 = smul.addr %s289, 16
        %s291 = scalar_lea.vmem [#allocation2], %s290
        // Predicated region
        $region33: #{fno2d_forward.9} parent=31 // pred_check
          %p292 = pneg %p100
        $region34: #{fno2d_forward.9} parent=31 // pred_check_branch
          %294 = sbr.rel (%p292) target = $region36
        $region35: #{fno2d_forward.9} parent=31 // pred_region
          %s295 = smul.u32 2, %s14
          %s296 = smul.addr %s295, 4
          %s297 = scalar_lea.vmem %s3, %s296
          // Predicated region
          $region37: #{fno2d_forward.9} parent=35 // pred_check
            _
          $region38: #{fno2d_forward.9} parent=35 // pred_check_branch
            %299 = sbr.rel (0) target = $region40
          $region39: #{fno2d_forward.9} parent=35 // pred_region
            // Predicated region
            $region41: #{fno2d_forward.9} parent=39 // pred_check
              _
            $region42: #{fno2d_forward.9} parent=39 // pred_check_branch
              %301 = sbr.rel (0) target = $region44
            $region43: #{fno2d_forward.9} parent=39 // pred_region
              // Predicated region
              $region56: #{fno2d_forward.9} parent=43 // pred_check
                _
              $region57: #{fno2d_forward.9} parent=43 // pred_check_branch
                %319 = sbr.rel (0) target = $region59
              $region58: #{fno2d_forward.9} parent=43 // pred_region
                loop: start=0, step=1, limit=1
                $region60: #{fno2d_forward.9} parent=58 // loop_pre_header
                  _
                $region61: #{fno2d_forward.9} parent=58 // loop_header
                  %s321 = sphi 0, %s325
                  %p322 = scmp.ge.s32.totalorder %s321, 1
                  %s326 = sphi %s291, %s291
                  %s327 = sphi %s297, %s297
                $region62: #{fno2d_forward.9} parent=58 // loop_header_branch
                  %324 = sbr.rel (%p322) target = $region66
                $region63: #{fno2d_forward.9} parent=58 // loop_body
                  %v328 = vld [vmem:[%s326] sm:$0xff]
                  %329 = vst [vmem:[%s327] sm:$0xff] %v328
                  %v330 = vld [vmem:[%s326 + $0x8] sm:$0xff]
                  %331 = vst [vmem:[%s327 + $0x10] sm:$0xff] %v330
                $region64: #{fno2d_forward.9} parent=58 // loop_footer
                  %s325 = sadd.s32 1, %s321
                $region65: #{fno2d_forward.9} parent=58 // loop_footer_branch
                  %320 = sbr.rel target = $region61
                $region66: #{fno2d_forward.9} parent=58 // loop_exit
                  _
              $region59: #{fno2d_forward.9} parent=43 // pred_fallthru
                _
              // Predicated region
              $region67: #{fno2d_forward.9} parent=43 // pred_check
                _
              $region68: #{fno2d_forward.9} parent=43 // pred_check_branch
                %333 = sbr.rel target = $region70
              $region69: #{fno2d_forward.9} parent=43 // pred_region
                _
              $region70: #{fno2d_forward.9} parent=43 // pred_fallthru
                _
            $region44: #{fno2d_forward.9} parent=39 // pred_fallthru
              _
            // Predicated region
            $region45: #{fno2d_forward.9} parent=39 // pred_check
              _
            $region46: #{fno2d_forward.9} parent=39 // pred_check_branch
              %303 = sbr.rel target = $region48
            $region47: #{fno2d_forward.9} parent=39 // pred_region
              %s305 = ssub.s32 256, 1
              loop: start=0, step=1, limit=1
              $region49: #{fno2d_forward.9} parent=47 // loop_pre_header
                _
              $region50: #{fno2d_forward.9} parent=47 // loop_header
                %s307 = sphi 0, %s311
                %p308 = scmp.ge.s32.totalorder %s307, 1
                %s312 = sphi %s291, %s291
                %s313 = sphi %s297, %s297
              $region51: #{fno2d_forward.9} parent=47 // loop_header_branch
                %310 = sbr.rel (%p308) target = $region55
              $region52: #{fno2d_forward.9} parent=47 // loop_body
                %v314 = vld [vmem:[%s312] sm:%s305]
                %315 = vst [vmem:[%s313] sm:%s305] %v314
                %v316 = vld [vmem:[%s312 + $0x8] sm:%s305]
                %317 = vst [vmem:[%s313 + $0x10] sm:%s305] %v316
              $region53: #{fno2d_forward.9} parent=47 // loop_footer
                %s311 = sadd.s32 1, %s307
              $region54: #{fno2d_forward.9} parent=47 // loop_footer_branch
                %306 = sbr.rel target = $region50
              $region55: #{fno2d_forward.9} parent=47 // loop_exit
                _
            $region48: #{fno2d_forward.9} parent=39 // pred_fallthru
              _
          $region40: #{fno2d_forward.9} parent=35 // pred_fallthru
            _
          %334 = vnop
        $region36: #{fno2d_forward.9} parent=31 // pred_fallthru
          _
      $region32: #{fno2d_forward.9} parent=5 // pred_fallthru
        _
      %p335 = scmp.le.s32.totalorder 2, %s9
      // Predicated region
      $region71: #{fno2d_forward.9} parent=5 // pred_check
        %p336 = pneg %p335
      $region72: #{fno2d_forward.9} parent=5 // pred_check_branch
        %338 = sbr.rel (%p336) target = $region74
      $region73: #{fno2d_forward.9} parent=5 // pred_region
        %s339 = ssub.s32 %s9, 2
        // Predicated region
        $region75: #{fno2d_forward.9} parent=73 // pred_check
          %p340 = pneg %p106
        $region76: #{fno2d_forward.9} parent=73 // pred_check_branch
          %342 = sbr.rel (%p340) target = $region78
        $region77: #{fno2d_forward.9} parent=73 // pred_region
          %s343 = sand.u32 %s91, 1
          %s344 = sand.u32 %s91, 1
          %s345 = smul.addr %s344, 16
          %s346 = scalar_lea.vmem [#allocation2], %s345
        $region78: #{fno2d_forward.9} parent=73 // pred_fallthru
          _
      $region74: #{fno2d_forward.9} parent=5 // pred_fallthru
        _
    $region6: #{fno2d_forward.9} parent=1 // loop_footer
      %s13 = sadd.s32 1, %s9
    $region7: #{fno2d_forward.9} parent=1 // loop_footer_branch
      %8 = sbr.rel target = $region3
    $region8: #{fno2d_forward.9} parent=1 // loop_exit
      _

// kernel: fno2d_forward.10
$region0: #{fno2d_forward.10}
  #allocation0 [shape = 'u32[]', space=smem, size = 0x4, offset = 0x4, fixed_abs, tag = 'smem constant byte address 0x4 - core index']
  #allocation1 [shape = 'u32[144,128]{1,0:T(1,128)}', space=vmem, size = 0x12000, scoped, tag = 'internal scratch']
  %s0 = inlined_call_operand.vmem [shape: f32[2,512], index: 0, kind: input, shape index: {}]
  %s1 = inlined_call_operand.vmem [shape: f32[512,512], index: 1, kind: input, shape index: {}]
  %s2 = inlined_call_operand.vmem [shape: f32[2,512], index: 2, kind: output, shape index: {}]
  %s3 = sld [smem:[#allocation0]]
  $region18: #{fno2d_forward.10} parent=0
    _
  %s5 = ssub.s32 1, %s3
  %s6 = scalar_select 0, %s5, %s3
  // Predicated region
  $region2: #{fno2d_forward.10} parent=0 // pred_check
    _
  $region3: #{fno2d_forward.10} parent=0 // pred_check_branch
    %8 = sbr.rel (0) target = $region5
  $region4: #{fno2d_forward.10} parent=0 // pred_region
    _
  $region5: #{fno2d_forward.10} parent=0 // pred_fallthru
    _
  // Predicated region
  $region6: #{fno2d_forward.10} parent=0 // pred_check
    _
  $region7: #{fno2d_forward.10} parent=0 // pred_check_branch
    %10 = sbr.rel (0) target = $region9
  $region8: #{fno2d_forward.10} parent=0 // pred_region
    _
  $region9: #{fno2d_forward.10} parent=0 // pred_fallthru
    _
  %v11 = vld [vmem:[%s0] sm:$0xff]
  %v12 = vld [vmem:[%s1] sm:$0xff]
  %v13 = vld [vmem:[%s1 + $0x8] sm:$0xff]
  %v14 = vld [vmem:[%s1 + $0x10] sm:$0xff]
  %v15 = vld [vmem:[%s1 + $0x18] sm:$0xff]
  %v16 = vld [vmem:[%s1 + $0x20] sm:$0xff]
  %v17 = vld [vmem:[%s1 + $0x28] sm:$0xff]
  %v18 = vld [vmem:[%s1 + $0x30] sm:$0xff]
  %v19 = vld [vmem:[%s1 + $0x38] sm:$0xff]
  %v20 = vld [vmem:[%s1 + $0x40] sm:$0xff]
  %v21 = vld [vmem:[%s1 + $0x48] sm:$0xff]
  %v22 = vld [vmem:[%s1 + $0x50] sm:$0xff]
  %v23 = vld [vmem:[%s1 + $0x58] sm:$0xff]
  %v24 = vld [vmem:[%s1 + $0x60] sm:$0xff]
  %v25 = vld [vmem:[%s1 + $0x68] sm:$0xff]
  %v26 = vld [vmem:[%s1 + $0x70] sm:$0xff]
  %v27 = vld [vmem:[%s1 + $0x78] sm:$0xff]
  %v28 = vld [vmem:[%s1 + $0x80] sm:$0xff]
  %v29 = vld [vmem:[%s1 + $0x88] sm:$0xff]
  %v30 = vld [vmem:[%s1 + $0x90] sm:$0xff]
  %v31 = vld [vmem:[%s1 + $0x98] sm:$0xff]
  %v32 = vld [vmem:[%s1 + $0xa0] sm:$0xff]
  %v33 = vld [vmem:[%s1 + $0xa8] sm:$0xff]
  %v34 = vld [vmem:[%s1 + $0xb0] sm:$0xff]
  %v35 = vld [vmem:[%s1 + $0xb8] sm:$0xff]
  %v36 = vld [vmem:[%s1 + $0xc0] sm:$0xff]
  %v37 = vld [vmem:[%s1 + $0xc8] sm:$0xff]
  %v38 = vld [vmem:[%s1 + $0xd0] sm:$0xff]
  %v39 = vld [vmem:[%s1 + $0xd8] sm:$0xff]
  %v40 = vld [vmem:[%s1 + $0xe0] sm:$0xff]
  %v41 = vld [vmem:[%s1 + $0xe8] sm:$0xff]
  %v42 = vld [vmem:[%s1 + $0xf0] sm:$0xff]
  %v43 = vld [vmem:[%s1 + $0xf8] sm:$0xff]
  %v44 = vld [vmem:[%s1 + $0x100] sm:$0xff]
  %v45 = vld [vmem:[%s1 + $0x108] sm:$0xff]
  %v46 = vld [vmem:[%s1 + $0x110] sm:$0xff]
  %v47 = vld [vmem:[%s1 + $0x118] sm:$0xff]
  %v48 = vld [vmem:[%s1 + $0x120] sm:$0xff]
  %v49 = vld [vmem:[%s1 + $0x128] sm:$0xff]
  %v50 = vld [vmem:[%s1 + $0x130] sm:$0xff]
  %v51 = vld [vmem:[%s1 + $0x138] sm:$0xff]
  %v52 = vld [vmem:[%s1 + $0x140] sm:$0xff]
  %v53 = vld [vmem:[%s1 + $0x148] sm:$0xff]
  %v54 = vld [vmem:[%s1 + $0x150] sm:$0xff]
  %v55 = vld [vmem:[%s1 + $0x158] sm:$0xff]
  %v56 = vld [vmem:[%s1 + $0x160] sm:$0xff]
  %v57 = vld [vmem:[%s1 + $0x168] sm:$0xff]
  %v58 = vld [vmem:[%s1 + $0x170] sm:$0xff]
  %v59 = vld [vmem:[%s1 + $0x178] sm:$0xff]
  %v60 = vld [vmem:[%s1 + $0x180] sm:$0xff]
  %v61 = vld [vmem:[%s1 + $0x188] sm:$0xff]
  %v62 = vld [vmem:[%s1 + $0x190] sm:$0xff]
  %v63 = vld [vmem:[%s1 + $0x198] sm:$0xff]
  %v64 = vld [vmem:[%s1 + $0x1a0] sm:$0xff]
  %v65 = vld [vmem:[%s1 + $0x1a8] sm:$0xff]
  %v66 = vld [vmem:[%s1 + $0x1b0] sm:$0xff]
  %v67 = vld [vmem:[%s1 + $0x1b8] sm:$0xff]
  %v68 = vld [vmem:[%s1 + $0x1c0] sm:$0xff]
  %v69 = vld [vmem:[%s1 + $0x1c8] sm:$0xff]
  %v70 = vld [vmem:[%s1 + $0x1d0] sm:$0xff]
  %v71 = vld [vmem:[%s1 + $0x1d8] sm:$0xff]
  %v72 = vld [vmem:[%s1 + $0x1e0] sm:$0xff]
  %v73 = vld [vmem:[%s1 + $0x1e8] sm:$0xff]
  %v74 = vld [vmem:[%s1 + $0x1f0] sm:$0xff]
  %v75 = vld [vmem:[%s1 + $0x1f8] sm:$0xff]
  %v76 = vld [vmem:[%s1 + $0x200] sm:$0xff]
  %v77 = vld [vmem:[%s1 + $0x208] sm:$0xff]
  %v78 = vld [vmem:[%s1 + $0x210] sm:$0xff]
  %v79 = vld [vmem:[%s1 + $0x218] sm:$0xff]
  %v80 = vld [vmem:[%s1 + $0x220] sm:$0xff]
  %v81 = vld [vmem:[%s1 + $0x228] sm:$0xff]
  %v82 = vld [vmem:[%s1 + $0x230] sm:$0xff]
  %v83 = vld [vmem:[%s1 + $0x238] sm:$0xff]
  %v84 = vld [vmem:[%s1 + $0x240] sm:$0xff]
  %v85 = vld [vmem:[%s1 + $0x248] sm:$0xff]
  %v86 = vld [vmem:[%s1 + $0x250] sm:$0xff]
  %v87 = vld [vmem:[%s1 + $0x258] sm:$0xff]
  %v88 = vld [vmem:[%s1 + $0x260] sm:$0xff]
  %v89 = vld [vmem:[%s1 + $0x268] sm:$0xff]
  %v90 = vld [vmem:[%s1 + $0x270] sm:$0xff]
  %v91 = vld [vmem:[%s1 + $0x278] sm:$0xff]
  %v92 = vld [vmem:[%s1 + $0x280] sm:$0xff]
  %v93 = vld [vmem:[%s1 + $0x288] sm:$0xff]
  %v94 = vld [vmem:[%s1 + $0x290] sm:$0xff]
  %v95 = vld [vmem:[%s1 + $0x298] sm:$0xff]
  %v96 = vld [vmem:[%s1 + $0x2a0] sm:$0xff]
  %v97 = vld [vmem:[%s1 + $0x2a8] sm:$0xff]
  %v98 = vld [vmem:[%s1 + $0x2b0] sm:$0xff]
  %v99 = vld [vmem:[%s1 + $0x2b8] sm:$0xff]
  %v100 = vld [vmem:[%s1 + $0x2c0] sm:$0xff]
  %v101 = vld [vmem:[%s1 + $0x2c8] sm:$0xff]
  %v102 = vld [vmem:[%s1 + $0x2d0] sm:$0xff]
  %v103 = vld [vmem:[%s1 + $0x2d8] sm:$0xff]
  %v104 = vld [vmem:[%s1 + $0x2e0] sm:$0xff]
  %v105 = vld [vmem:[%s1 + $0x2e8] sm:$0xff]
  %v106 = vld [vmem:[%s1 + $0x2f0] sm:$0xff]
  %v107 = vld [vmem:[%s1 + $0x2f8] sm:$0xff]
  %v108 = vld [vmem:[%s1 + $0x300] sm:$0xff]
  %v109 = vld [vmem:[%s1 + $0x308] sm:$0xff]
  %v110 = vld [vmem:[%s1 + $0x310] sm:$0xff]
  %v111 = vld [vmem:[%s1 + $0x318] sm:$0xff]
  %v112 = vld [vmem:[%s1 + $0x320] sm:$0xff]
  %v113 = vld [vmem:[%s1 + $0x328] sm:$0xff]
  %v114 = vld [vmem:[%s1 + $0x330] sm:$0xff]
  %v115 = vld [vmem:[%s1 + $0x338] sm:$0xff]
  %v116 = vld [vmem:[%s1 + $0x340] sm:$0xff]
  %v117 = vld [vmem:[%s1 + $0x348] sm:$0xff]
  %v118 = vld [vmem:[%s1 + $0x350] sm:$0xff]
  %v119 = vld [vmem:[%s1 + $0x358] sm:$0xff]
  %v120 = vld [vmem:[%s1 + $0x360] sm:$0xff]
  %v121 = vld [vmem:[%s1 + $0x368] sm:$0xff]
  %v122 = vld [vmem:[%s1 + $0x370] sm:$0xff]
  %v123 = vld [vmem:[%s1 + $0x378] sm:$0xff]
  %v124 = vld [vmem:[%s1 + $0x380] sm:$0xff]
  %v125 = vld [vmem:[%s1 + $0x388] sm:$0xff]
  %v126 = vld [vmem:[%s1 + $0x390] sm:$0xff]
  %v127 = vld [vmem:[%s1 + $0x398] sm:$0xff]
  %v128 = vld [vmem:[%s1 + $0x3a0] sm:$0xff]
  %v129 = vld [vmem:[%s1 + $0x3a8] sm:$0xff]
  %v130 = vld [vmem:[%s1 + $0x3b0] sm:$0xff]
  %v131 = vld [vmem:[%s1 + $0x3b8] sm:$0xff]
  %v132 = vld [vmem:[%s1 + $0x3c0] sm:$0xff]
  %v133 = vld [vmem:[%s1 + $0x3c8] sm:$0xff]
  %v134 = vld [vmem:[%s1 + $0x3d0] sm:$0xff]
  %v135 = vld [vmem:[%s1 + $0x3d8] sm:$0xff]
  %v136 = vld [vmem:[%s1 + $0x3e0] sm:$0xff]
  %v137 = vld [vmem:[%s1 + $0x3e8] sm:$0xff]
  %v138 = vld [vmem:[%s1 + $0x3f0] sm:$0xff]
  %v139 = vld [vmem:[%s1 + $0x3f8] sm:$0xff]
  %v140 = vld [vmem:[%s1 + $0x400] sm:$0xff]
  %v141 = vld [vmem:[%s1 + $0x408] sm:$0xff]
  %v142 = vld [vmem:[%s1 + $0x410] sm:$0xff]
  %v143 = vld [vmem:[%s1 + $0x418] sm:$0xff]
  %v144 = vld [vmem:[%s1 + $0x420] sm:$0xff]
  %v145 = vld [vmem:[%s1 + $0x428] sm:$0xff]
  %v146 = vld [vmem:[%s1 + $0x430] sm:$0xff]
  %v147 = vld [vmem:[%s1 + $0x438] sm:$0xff]
  %v148 = vld [vmem:[%s1 + $0x440] sm:$0xff]
  %v149 = vld [vmem:[%s1 + $0x448] sm:$0xff]
  %v150 = vld [vmem:[%s1 + $0x450] sm:$0xff]
  %v151 = vld [vmem:[%s1 + $0x458] sm:$0xff]
  %v152 = vld [vmem:[%s1 + $0x460] sm:$0xff]
  %v153 = vld [vmem:[%s1 + $0x468] sm:$0xff]
  %v154 = vld [vmem:[%s1 + $0x470] sm:$0xff]
  %v155 = vld [vmem:[%s1 + $0x478] sm:$0xff]
  %v156 = vld [vmem:[%s1 + $0x480] sm:$0xff]
  %v157 = vld [vmem:[%s1 + $0x488] sm:$0xff]
  %v158 = vld [vmem:[%s1 + $0x490] sm:$0xff]
  %v159 = vld [vmem:[%s1 + $0x498] sm:$0xff]
  %v160 = vld [vmem:[%s1 + $0x4a0] sm:$0xff]
  %v161 = vld [vmem:[%s1 + $0x4a8] sm:$0xff]
  %v162 = vld [vmem:[%s1 + $0x4b0] sm:$0xff]
  %v163 = vld [vmem:[%s1 + $0x4b8] sm:$0xff]
  %v164 = vld [vmem:[%s1 + $0x4c0] sm:$0xff]
  %v165 = vld [vmem:[%s1 + $0x4c8] sm:$0xff]
  %v166 = vld [vmem:[%s1 + $0x4d0] sm:$0xff]
  %v167 = vld [vmem:[%s1 + $0x4d8] sm:$0xff]
  %v168 = vld [vmem:[%s1 + $0x4e0] sm:$0xff]
  %v169 = vld [vmem:[%s1 + $0x4e8] sm:$0xff]
  %v170 = vld [vmem:[%s1 + $0x4f0] sm:$0xff]
  %v171 = vld [vmem:[%s1 + $0x4f8] sm:$0xff]
  %v172 = vld [vmem:[%s1 + $0x500] sm:$0xff]
  %v173 = vld [vmem:[%s1 + $0x508] sm:$0xff]
  %v174 = vld [vmem:[%s1 + $0x510] sm:$0xff]
  %v175 = vld [vmem:[%s1 + $0x518] sm:$0xff]
  %v176 = vld [vmem:[%s1 + $0x520] sm:$0xff]
  %v177 = vld [vmem:[%s1 + $0x528] sm:$0xff]
  %v178 = vld [vmem:[%s1 + $0x530] sm:$0xff]
  %v179 = vld [vmem:[%s1 + $0x538] sm:$0xff]
  %v180 = vld [vmem:[%s1 + $0x540] sm:$0xff]
  %v181 = vld [vmem:[%s1 + $0x548] sm:$0xff]
  %v182 = vld [vmem:[%s1 + $0x550] sm:$0xff]
  %v183 = vld [vmem:[%s1 + $0x558] sm:$0xff]
  %v184 = vld [vmem:[%s1 + $0x560] sm:$0xff]
  %v185 = vld [vmem:[%s1 + $0x568] sm:$0xff]
  %v186 = vld [vmem:[%s1 + $0x570] sm:$0xff]
  %v187 = vld [vmem:[%s1 + $0x578] sm:$0xff]
  %v188 = vld [vmem:[%s1 + $0x580] sm:$0xff]
  %v189 = vld [vmem:[%s1 + $0x588] sm:$0xff]
  %v190 = vld [vmem:[%s1 + $0x590] sm:$0xff]
  %v191 = vld [vmem:[%s1 + $0x598] sm:$0xff]
  %v192 = vld [vmem:[%s1 + $0x5a0] sm:$0xff]
  %v193 = vld [vmem:[%s1 + $0x5a8] sm:$0xff]
  %v194 = vld [vmem:[%s1 + $0x5b0] sm:$0xff]
  %v195 = vld [vmem:[%s1 + $0x5b8] sm:$0xff]
  %v196 = vld [vmem:[%s1 + $0x5c0] sm:$0xff]
  %v197 = vld [vmem:[%s1 + $0x5c8] sm:$0xff]
  %v198 = vld [vmem:[%s1 + $0x5d0] sm:$0xff]
  %v199 = vld [vmem:[%s1 + $0x5d8] sm:$0xff]
  %v200 = vld [vmem:[%s1 + $0x5e0] sm:$0xff]
  %v201 = vld [vmem:[%s1 + $0x5e8] sm:$0xff]
  %v202 = vld [vmem:[%s1 + $0x5f0] sm:$0xff]
  %v203 = vld [vmem:[%s1 + $0x5f8] sm:$0xff]
  %v204 = vld [vmem:[%s1 + $0x600] sm:$0xff]
  %v205 = vld [vmem:[%s1 + $0x608] sm:$0xff]
  %v206 = vld [vmem:[%s1 + $0x610] sm:$0xff]
  %v207 = vld [vmem:[%s1 + $0x618] sm:$0xff]
  %v208 = vld [vmem:[%s1 + $0x620] sm:$0xff]
  %v209 = vld [vmem:[%s1 + $0x628] sm:$0xff]
  %v210 = vld [vmem:[%s1 + $0x630] sm:$0xff]
  %v211 = vld [vmem:[%s1 + $0x638] sm:$0xff]
  %v212 = vld [vmem:[%s1 + $0x640] sm:$0xff]
  %v213 = vld [vmem:[%s1 + $0x648] sm:$0xff]
  %v214 = vld [vmem:[%s1 + $0x650] sm:$0xff]
  %v215 = vld [vmem:[%s1 + $0x658] sm:$0xff]
  %v216 = vld [vmem:[%s1 + $0x660] sm:$0xff]
  %v217 = vld [vmem:[%s1 + $0x668] sm:$0xff]
  %v218 = vld [vmem:[%s1 + $0x670] sm:$0xff]
  %v219 = vld [vmem:[%s1 + $0x678] sm:$0xff]
  %v220 = vld [vmem:[%s1 + $0x680] sm:$0xff]
  %v221 = vld [vmem:[%s1 + $0x688] sm:$0xff]
  %v222 = vld [vmem:[%s1 + $0x690] sm:$0xff]
  %v223 = vld [vmem:[%s1 + $0x698] sm:$0xff]
  %v224 = vld [vmem:[%s1 + $0x6a0] sm:$0xff]
  %v225 = vld [vmem:[%s1 + $0x6a8] sm:$0xff]
  %v226 = vld [vmem:[%s1 + $0x6b0] sm:$0xff]
  %v227 = vld [vmem:[%s1 + $0x6b8] sm:$0xff]
  %v228 = vld [vmem:[%s1 + $0x6c0] sm:$0xff]
  %v229 = vld [vmem:[%s1 + $0x6c8] sm:$0xff]
  %v230 = vld [vmem:[%s1 + $0x6d0] sm:$0xff]
  %v231 = vld [vmem:[%s1 + $0x6d8] sm:$0xff]
  %v232 = vld [vmem:[%s1 + $0x6e0] sm:$0xff]
  %v233 = vld [vmem:[%s1 + $0x6e8] sm:$0xff]
  %v234 = vld [vmem:[%s1 + $0x6f0] sm:$0xff]
  %v235 = vld [vmem:[%s1 + $0x6f8] sm:$0xff]
  %v236 = vld [vmem:[%s1 + $0x700] sm:$0xff]
  %v237 = vld [vmem:[%s1 + $0x708] sm:$0xff]
  %v238 = vld [vmem:[%s1 + $0x710] sm:$0xff]
  %v239 = vld [vmem:[%s1 + $0x718] sm:$0xff]
  %v240 = vld [vmem:[%s1 + $0x720] sm:$0xff]
  %v241 = vld [vmem:[%s1 + $0x728] sm:$0xff]
  %v242 = vld [vmem:[%s1 + $0x730] sm:$0xff]
  %v243 = vld [vmem:[%s1 + $0x738] sm:$0xff]
  %v244 = vld [vmem:[%s1 + $0x740] sm:$0xff]
  %v245 = vld [vmem:[%s1 + $0x748] sm:$0xff]
  %v246 = vld [vmem:[%s1 + $0x750] sm:$0xff]
  %v247 = vld [vmem:[%s1 + $0x758] sm:$0xff]
  %v248 = vld [vmem:[%s1 + $0x760] sm:$0xff]
  %v249 = vld [vmem:[%s1 + $0x768] sm:$0xff]
  %v250 = vld [vmem:[%s1 + $0x770] sm:$0xff]
  %v251 = vld [vmem:[%s1 + $0x778] sm:$0xff]
  %v252 = vld [vmem:[%s1 + $0x780] sm:$0xff]
  %v253 = vld [vmem:[%s1 + $0x788] sm:$0xff]
  %v254 = vld [vmem:[%s1 + $0x790] sm:$0xff]
  %v255 = vld [vmem:[%s1 + $0x798] sm:$0xff]
  %v256 = vld [vmem:[%s1 + $0x7a0] sm:$0xff]
  %v257 = vld [vmem:[%s1 + $0x7a8] sm:$0xff]
  %v258 = vld [vmem:[%s1 + $0x7b0] sm:$0xff]
  %v259 = vld [vmem:[%s1 + $0x7b8] sm:$0xff]
  %v260 = vld [vmem:[%s1 + $0x7c0] sm:$0xff]
  %v261 = vld [vmem:[%s1 + $0x7c8] sm:$0xff]
  %v262 = vld [vmem:[%s1 + $0x7d0] sm:$0xff]
  %v263 = vld [vmem:[%s1 + $0x7d8] sm:$0xff]
  %v264 = vld [vmem:[%s1 + $0x7e0] sm:$0xff]
  %v265 = vld [vmem:[%s1 + $0x7e8] sm:$0xff]
  %v266 = vld [vmem:[%s1 + $0x7f0] sm:$0xff]
  %v267 = vld [vmem:[%s1 + $0x7f8] sm:$0xff]
  %v269 = vcombine.high %v11, %v11
  %v271 = vunpack.c.l.s4 1983009808
  %v272 = vunpack.c.0.s8 %v271
  %v273 = vlaneseq
  %v274 = vshrl.u32 %v273, 7
  %v275 = vsub.s32 %v272, %v274
  %v276 = vrot.slane %v11, %v275
  %v278 = vunpack.c.l.s4 1983009808
  %v279 = vunpack.c.0.s8 %v278
  %v280 = vlaneseq
  %v281 = vshrl.u32 %v280, 7
  %v282 = vsub.s32 %v279, %v281
  %v283 = vrot.slane %v269, %v282
  %v284 = vcombine.high %v276, %v276
  %v285 = vcombine.high %v283, %v283
  %290 = vmatprep.subr.mxu0 %v73
  %291 = vmatpush1.msra.mxu0 %v72
  %292 = vmatprep.subr.mxu0 %v69
  %293 = vmatpush1.msra.mxu0 %v68
  %294 = vmatprep.subr.mxu0 %v65
  %295 = vmatpush1.msra.mxu0 %v64
  %296 = vmatprep.subr.mxu0 %v61
  %297 = vmatpush1.msra.mxu0 %v60
  %298 = vmatprep.subr.mxu0 %v57
  %299 = vmatpush1.msra.mxu0 %v56
  %300 = vmatprep.subr.mxu0 %v53
  %301 = vmatpush1.msra.mxu0 %v52
  %302 = vmatprep.subr.mxu0 %v49
  %303 = vmatpush1.msra.mxu0 %v48
  %304 = vmatprep.subr.mxu0 %v45
  %305 = vmatpush1.msra.mxu0 %v44
  %306 = vmatprep.subr.mxu0 %v41
  %307 = vmatpush1.msra.mxu0 %v40
  %308 = vmatprep.subr.mxu0 %v37
  %309 = vmatpush1.msra.mxu0 %v36
  %310 = vmatprep.subr.mxu0 %v33
  %311 = vmatpush1.msra.mxu0 %v32
  %312 = vmatprep.subr.mxu0 %v29
  %313 = vmatpush1.msra.mxu0 %v28
  %314 = vmatprep.subr.mxu0 %v25
  %315 = vmatpush1.msra.mxu0 %v24
  %316 = vmatprep.subr.mxu0 %v21
  %317 = vmatpush1.msra.mxu0 %v20
  %318 = vmatprep.subr.mxu0 %v17
  %319 = vmatpush1.msra.mxu0 %v16
  %320 = vmatprep.subr.mxu0 %v13
  %321 = vmatpush1.msra.mxu0 %v12
  %322 = vmatprep.subr.mxu0 %v137
  %323 = vmatpush2.msra.mxu0 %v136
  %324 = vmatprep.subr.mxu0 %v133
  %325 = vmatpush2.msra.mxu0 %v132
  %326 = vmatprep.subr.mxu0 %v129
  %327 = vmatpush2.msra.mxu0 %v128
  %328 = vmatprep.subr.mxu0 %v125
  %329 = vmatpush2.msra.mxu0 %v124
  %330 = vmatprep.subr.mxu0 %v121
  %331 = vmatpush2.msra.mxu0 %v120
  %332 = vmatprep.subr.mxu0 %v117
  %333 = vmatpush2.msra.mxu0 %v116
  %334 = vmatprep.subr.mxu0 %v113
  %335 = vmatpush2.msra.mxu0 %v112
  %336 = vmatprep.subr.mxu0 %v109
  %337 = vmatpush2.msra.mxu0 %v108
  %338 = vmatprep.subr.mxu0 %v105
  %339 = vmatpush2.msra.mxu0 %v104
  %340 = vmatprep.subr.mxu0 %v101
  %341 = vmatpush2.msra.mxu0 %v100
  %342 = vmatprep.subr.mxu0 %v97
  %343 = vmatpush2.msra.mxu0 %v96
  %344 = vmatprep.subr.mxu0 %v93
  %345 = vmatpush2.msra.mxu0 %v92
  %346 = vmatprep.subr.mxu0 %v89
  %347 = vmatpush2.msra.mxu0 %v88
  %348 = vmatprep.subr.mxu0 %v85
  %349 = vmatpush2.msra.mxu0 %v84
  %350 = vmatprep.subr.mxu0 %v81
  %351 = vmatpush2.msra.mxu0 %v80
  %352 = vmatprep.subr.mxu0 %v77
  %353 = vmatpush2.msra.mxu0 %v76
  %354 = vmatprep.mubr.f32.mxu0 %v284
  %355 = vmatmul.mubr.f32.gmra.mxu0 %v276
  %v356 = vpop.f32.mrf.mxu0
  %v357 = vadd.f32 0.0, %v356
  %v358 = vpop.f32.mrf.mxu0
  %v359 = vadd.f32 0.0, %v358
  %360 = vdwg.mxu0
  %361 = vmatprep.subr.mxu0 %v201
  %362 = vmatpush1.msra.mxu0 %v200
  %363 = vmatprep.subr.mxu0 %v197
  %364 = vmatpush1.msra.mxu0 %v196
  %365 = vmatprep.subr.mxu0 %v193
  %366 = vmatpush1.msra.mxu0 %v192
  %367 = vmatprep.subr.mxu0 %v189
  %368 = vmatpush1.msra.mxu0 %v188
  %369 = vmatprep.subr.mxu0 %v185
  %370 = vmatpush1.msra.mxu0 %v184
  %371 = vmatprep.subr.mxu0 %v181
  %372 = vmatpush1.msra.mxu0 %v180
  %373 = vmatprep.subr.mxu0 %v177
  %374 = vmatpush1.msra.mxu0 %v176
  %375 = vmatprep.subr.mxu0 %v173
  %376 = vmatpush1.msra.mxu0 %v172
  %377 = vmatprep.subr.mxu0 %v169
  %378 = vmatpush1.msra.mxu0 %v168
  %379 = vmatprep.subr.mxu0 %v165
  %380 = vmatpush1.msra.mxu0 %v164
  %381 = vmatprep.subr.mxu0 %v161
  %382 = vmatpush1.msra.mxu0 %v160
  %383 = vmatprep.subr.mxu0 %v157
  %384 = vmatpush1.msra.mxu0 %v156
  %385 = vmatprep.subr.mxu0 %v153
  %386 = vmatpush1.msra.mxu0 %v152
  %387 = vmatprep.subr.mxu0 %v149
  %388 = vmatpush1.msra.mxu0 %v148
  %389 = vmatprep.subr.mxu0 %v145
  %390 = vmatpush1.msra.mxu0 %v144
  %391 = vmatprep.subr.mxu0 %v141
  %392 = vmatpush1.msra.mxu0 %v140
  %393 = vmatprep.subr.mxu0 %v265
  %394 = vmatpush2.msra.mxu0 %v264
  %395 = vmatprep.subr.mxu0 %v261
  %396 = vmatpush2.msra.mxu0 %v260
  %397 = vmatprep.subr.mxu0 %v257
  %398 = vmatpush2.msra.mxu0 %v256
  %399 = vmatprep.subr.mxu0 %v253
  %400 = vmatpush2.msra.mxu0 %v252
  %401 = vmatprep.subr.mxu0 %v249
  %402 = vmatpush2.msra.mxu0 %v248
  %403 = vmatprep.subr.mxu0 %v245
  %404 = vmatpush2.msra.mxu0 %v244
  %405 = vmatprep.subr.mxu0 %v241
  %406 = vmatpush2.msra.mxu0 %v240
  %407 = vmatprep.subr.mxu0 %v237
  %408 = vmatpush2.msra.mxu0 %v236
  %409 = vmatprep.subr.mxu0 %v233
  %410 = vmatpush2.msra.mxu0 %v232
  %411 = vmatprep.subr.mxu0 %v229
  %412 = vmatpush2.msra.mxu0 %v228
  %413 = vmatprep.subr.mxu0 %v225
  %414 = vmatpush2.msra.mxu0 %v224
  %415 = vmatprep.subr.mxu0 %v221
  %416 = vmatpush2.msra.mxu0 %v220
  %417 = vmatprep.subr.mxu0 %v217
  %418 = vmatpush2.msra.mxu0 %v216
  %419 = vmatprep.subr.mxu0 %v213
  %420 = vmatpush2.msra.mxu0 %v212
  %421 = vmatprep.subr.mxu0 %v209
  %422 = vmatpush2.msra.mxu0 %v208
  %423 = vmatprep.subr.mxu0 %v205
  %424 = vmatpush2.msra.mxu0 %v204
  %425 = vmatprep.mubr.f32.mxu0 %v285
  %426 = vmatmul.mubr.f32.gmra.mxu0 %v283
  %v427 = vpop.f32.mrf.mxu0
  %v428 = vadd.f32 %v357, %v427
  %v429 = vpop.f32.mrf.mxu0
  %v430 = vadd.f32 %v359, %v429
  %431 = vdwg.mxu0
  %432 = vmatprep.subr.mxu0 %v75
  %433 = vmatpush1.msra.mxu0 %v74
  %434 = vmatprep.subr.mxu0 %v71
  %435 = vmatpush1.msra.mxu0 %v70
  %436 = vmatprep.subr.mxu0 %v67
  %437 = vmatpush1.msra.mxu0 %v66
  %438 = vmatprep.subr.mxu0 %v63
  %439 = vmatpush1.msra.mxu0 %v62
  %440 = vmatprep.subr.mxu0 %v59
  %441 = vmatpush1.msra.mxu0 %v58
  %442 = vmatprep.subr.mxu0 %v55
  %443 = vmatpush1.msra.mxu0 %v54
  %444 = vmatprep.subr.mxu0 %v51
  %445 = vmatpush1.msra.mxu0 %v50
  %446 = vmatprep.subr.mxu0 %v47
  %447 = vmatpush1.msra.mxu0 %v46
  %448 = vmatprep.subr.mxu0 %v43
  %449 = vmatpush1.msra.mxu0 %v42
  %450 = vmatprep.subr.mxu0 %v39
  %451 = vmatpush1.msra.mxu0 %v38
  %452 = vmatprep.subr.mxu0 %v35
  %453 = vmatpush1.msra.mxu0 %v34
  %454 = vmatprep.subr.mxu0 %v31
  %455 = vmatpush1.msra.mxu0 %v30
  %456 = vmatprep.subr.mxu0 %v27
  %457 = vmatpush1.msra.mxu0 %v26
  %458 = vmatprep.subr.mxu0 %v23
  %459 = vmatpush1.msra.mxu0 %v22
  %460 = vmatprep.subr.mxu0 %v19
  %461 = vmatpush1.msra.mxu0 %v18
  %462 = vmatprep.subr.mxu0 %v15
  %463 = vmatpush1.msra.mxu0 %v14
  %464 = vmatprep.subr.mxu0 %v139
  %465 = vmatpush2.msra.mxu0 %v138
  %466 = vmatprep.subr.mxu0 %v135
  %467 = vmatpush2.msra.mxu0 %v134
  %468 = vmatprep.subr.mxu0 %v131
  %469 = vmatpush2.msra.mxu0 %v130
  %470 = vmatprep.subr.mxu0 %v127
  %471 = vmatpush2.msra.mxu0 %v126
  %472 = vmatprep.subr.mxu0 %v123
  %473 = vmatpush2.msra.mxu0 %v122
  %474 = vmatprep.subr.mxu0 %v119
  %475 = vmatpush2.msra.mxu0 %v118
  %476 = vmatprep.subr.mxu0 %v115
  %477 = vmatpush2.msra.mxu0 %v114
  %478 = vmatprep.subr.mxu0 %v111
  %479 = vmatpush2.msra.mxu0 %v110
  %480 = vmatprep.subr.mxu0 %v107
  %481 = vmatpush2.msra.mxu0 %v106
  %482 = vmatprep.subr.mxu0 %v103
  %483 = vmatpush2.msra.mxu0 %v102
  %484 = vmatprep.subr.mxu0 %v99
  %485 = vmatpush2.msra.mxu0 %v98
  %486 = vmatprep.subr.mxu0 %v95
  %487 = vmatpush2.msra.mxu0 %v94
  %488 = vmatprep.subr.mxu0 %v91
  %489 = vmatpush2.msra.mxu0 %v90
  %490 = vmatprep.subr.mxu0 %v87
  %491 = vmatpush2.msra.mxu0 %v86
  %492 = vmatprep.subr.mxu0 %v83
  %493 = vmatpush2.msra.mxu0 %v82
  %494 = vmatprep.subr.mxu0 %v79
  %495 = vmatpush2.msra.mxu0 %v78
  %496 = vmatprep.mubr.f32.mxu0 %v284
  %497 = vmatmul.mubr.f32.gmra.mxu0 %v276
  %v498 = vpop.f32.mrf.mxu0
  %v499 = vadd.f32 0.0, %v498
  %v500 = vpop.f32.mrf.mxu0
  %v501 = vadd.f32 0.0, %v500
  %502 = vdwg.mxu0
  %503 = vmatprep.subr.mxu0 %v203
  %504 = vmatpush1.msra.mxu0 %v202
  %505 = vmatprep.subr.mxu0 %v199
  %506 = vmatpush1.msra.mxu0 %v198
  %507 = vmatprep.subr.mxu0 %v195
  %508 = vmatpush1.msra.mxu0 %v194
  %509 = vmatprep.subr.mxu0 %v191
  %510 = vmatpush1.msra.mxu0 %v190
  %511 = vmatprep.subr.mxu0 %v187
  %512 = vmatpush1.msra.mxu0 %v186
  %513 = vmatprep.subr.mxu0 %v183
  %514 = vmatpush1.msra.mxu0 %v182
  %515 = vmatprep.subr.mxu0 %v179
  %516 = vmatpush1.msra.mxu0 %v178
  %517 = vmatprep.subr.mxu0 %v175
  %518 = vmatpush1.msra.mxu0 %v174
  %519 = vmatprep.subr.mxu0 %v171
  %520 = vmatpush1.msra.mxu0 %v170
  %521 = vmatprep.subr.mxu0 %v167
  %522 = vmatpush1.msra.mxu0 %v166
  %523 = vmatprep.subr.mxu0 %v163
  %524 = vmatpush1.msra.mxu0 %v162
  %525 = vmatprep.subr.mxu0 %v159
  %526 = vmatpush1.msra.mxu0 %v158
  %527 = vmatprep.subr.mxu0 %v155
  %528 = vmatpush1.msra.mxu0 %v154
  %529 = vmatprep.subr.mxu0 %v151
  %530 = vmatpush1.msra.mxu0 %v150
  %531 = vmatprep.subr.mxu0 %v147
  %532 = vmatpush1.msra.mxu0 %v146
  %533 = vmatprep.subr.mxu0 %v143
  %534 = vmatpush1.msra.mxu0 %v142
  %535 = vmatprep.subr.mxu0 %v267
  %536 = vmatpush2.msra.mxu0 %v266
  %537 = vmatprep.subr.mxu0 %v263
  %538 = vmatpush2.msra.mxu0 %v262
  %539 = vmatprep.subr.mxu0 %v259
  %540 = vmatpush2.msra.mxu0 %v258
  %541 = vmatprep.subr.mxu0 %v255
  %542 = vmatpush2.msra.mxu0 %v254
  %543 = vmatprep.subr.mxu0 %v251
  %544 = vmatpush2.msra.mxu0 %v250
  %545 = vmatprep.subr.mxu0 %v247
  %546 = vmatpush2.msra.mxu0 %v246
  %547 = vmatprep.subr.mxu0 %v243
  %548 = vmatpush2.msra.mxu0 %v242
  %549 = vmatprep.subr.mxu0 %v239
  %550 = vmatpush2.msra.mxu0 %v238
  %551 = vmatprep.subr.mxu0 %v235
  %552 = vmatpush2.msra.mxu0 %v234
  %553 = vmatprep.subr.mxu0 %v231
  %554 = vmatpush2.msra.mxu0 %v230
  %555 = vmatprep.subr.mxu0 %v227
  %556 = vmatpush2.msra.mxu0 %v226
  %557 = vmatprep.subr.mxu0 %v223
  %558 = vmatpush2.msra.mxu0 %v222
  %559 = vmatprep.subr.mxu0 %v219
  %560 = vmatpush2.msra.mxu0 %v218
  %561 = vmatprep.subr.mxu0 %v215
  %562 = vmatpush2.msra.mxu0 %v214
  %563 = vmatprep.subr.mxu0 %v211
  %564 = vmatpush2.msra.mxu0 %v210
  %565 = vmatprep.subr.mxu0 %v207
  %566 = vmatpush2.msra.mxu0 %v206
  %567 = vmatprep.mubr.f32.mxu0 %v285
  %568 = vmatmul.mubr.f32.gmra.mxu0 %v283
  %v569 = vpop.f32.mrf.mxu0
  %v570 = vadd.f32 %v499, %v569
  %v571 = vpop.f32.mrf.mxu0
  %v572 = vadd.f32 %v501, %v571
  %573 = vdwg.mxu0
  %v578 = vcombine.low %v428, %v430
  %v579 = vcombine.low %v570, %v572
  %v581 = vunpack.c.l.s4 1983009808
  %v582 = vunpack.c.0.s8 %v581
  %v583 = vlaneseq
  %v584 = vshrl.u32 %v583, 7
  %v585 = vsub.s32 %v582, %v584
  %v586 = vrot.slane %v578, %v585
  %v588 = vunpack.c.l.s4 1983009808
  %v589 = vunpack.c.0.s8 %v588
  %v590 = vlaneseq
  %v591 = vshrl.u32 %v590, 7
  %v592 = vsub.s32 %v589, %v591
  %v593 = vrot.slane %v579, %v592
  %v594 = vcombine.low %v586, %v593
  %596 = vst [vmem:[%s2] sm:$0xff] %v594
  // Predicated region
  $region10: #{fno2d_forward.10} parent=0 // pred_check
    _
  $region11: #{fno2d_forward.10} parent=0 // pred_check_branch
    %598 = sbr.rel (0) target = $region13
  $region12: #{fno2d_forward.10} parent=0 // pred_region
    _
  $region13: #{fno2d_forward.10} parent=0 // pred_fallthru
    _
  // Predicated region
  $region14: #{fno2d_forward.10} parent=0 // pred_check
    _
  $region15: #{fno2d_forward.10} parent=0 // pred_check_branch
    %600 = sbr.rel (0) target = $region17
  $region16: #{fno2d_forward.10} parent=0 // pred_region
    _
  $region17: #{fno2d_forward.10} parent=0 // pred_fallthru
    _

// kernel: reverse.8
$region0: #{reverse.8}
  #allocation0 [shape = 's32[1]{0}', space=sflag, size = 0x4, scoped, tag = 'scoped memory for reverse.8']
  %s0 = inlined_call_operand.vmem [shape: f32[16,2,16,7], index: 0, kind: input, shape index: {}]
  %s1 = inlined_call_operand.vmem [shape: f32[16,2,16,7], index: 1, kind: output, shape index: {}]
  %s2 = scalar_lea.vmem %s0, 96
  %v3 = vld [vmem:[%s2] sm:$0xff]
  %4 = vst [vmem:[%s1] sm:$0xff] %v3
  %s5 = scalar_lea.vmem %s0, 208
  %v6 = vld [vmem:[%s5] sm:$0xff]
  %s7 = scalar_lea.vmem %s1, 112
  %8 = vst [vmem:[%s7] sm:$0xff] %v6
  %s9 = scalar_lea.vmem %s0, 80
  %v10 = vld [vmem:[%s9] sm:$0xff]
  %s11 = scalar_lea.vmem %s1, 16
  %12 = vst [vmem:[%s11] sm:$0xff] %v10
  %s13 = scalar_lea.vmem %s0, 192
  %v14 = vld [vmem:[%s13] sm:$0xff]
  %s15 = scalar_lea.vmem %s1, 128
  %16 = vst [vmem:[%s15] sm:$0xff] %v14
  %s17 = scalar_lea.vmem %s0, 64
  %v18 = vld [vmem:[%s17] sm:$0xff]
  %s19 = scalar_lea.vmem %s1, 32
  %20 = vst [vmem:[%s19] sm:$0xff] %v18
  %s21 = scalar_lea.vmem %s0, 176
  %v22 = vld [vmem:[%s21] sm:$0xff]
  %s23 = scalar_lea.vmem %s1, 144
  %24 = vst [vmem:[%s23] sm:$0xff] %v22
  %s25 = scalar_lea.vmem %s0, 48
  %v26 = vld [vmem:[%s25] sm:$0xff]
  %s27 = scalar_lea.vmem %s1, 48
  %28 = vst [vmem:[%s27] sm:$0xff] %v26
  %s29 = scalar_lea.vmem %s0, 160
  %v30 = vld [vmem:[%s29] sm:$0xff]
  %s31 = scalar_lea.vmem %s1, 160
  %32 = vst [vmem:[%s31] sm:$0xff] %v30
  %s33 = scalar_lea.vmem %s0, 32
  %v34 = vld [vmem:[%s33] sm:$0xff]
  %s35 = scalar_lea.vmem %s1, 64
  %36 = vst [vmem:[%s35] sm:$0xff] %v34
  %s37 = scalar_lea.vmem %s0, 144
  %v38 = vld [vmem:[%s37] sm:$0xff]
  %s39 = scalar_lea.vmem %s1, 176
  %40 = vst [vmem:[%s39] sm:$0xff] %v38
  %s41 = scalar_lea.vmem %s0, 16
  %v42 = vld [vmem:[%s41] sm:$0xff]
  %s43 = scalar_lea.vmem %s1, 80
  %44 = vst [vmem:[%s43] sm:$0xff] %v42
  %s45 = scalar_lea.vmem %s0, 128
  %v46 = vld [vmem:[%s45] sm:$0xff]
  %s47 = scalar_lea.vmem %s1, 192
  %48 = vst [vmem:[%s47] sm:$0xff] %v46
  %v49 = vld [vmem:[%s0] sm:$0xff]
  %s50 = scalar_lea.vmem %s1, 96
  %51 = vst [vmem:[%s50] sm:$0xff] %v49
  %s52 = scalar_lea.vmem %s0, 112
  %v53 = vld [vmem:[%s52] sm:$0xff]
  %s54 = scalar_lea.vmem %s1, 208
  %55 = vst [vmem:[%s54] sm:$0xff] %v53
  %s56 = scalar_lea.vmem %s0, 104
  %v57 = vld [vmem:[%s56] sm:$0xff]
  %s58 = scalar_lea.vmem %s1, 8
  %59 = vst [vmem:[%s58] sm:$0xff] %v57
  %s60 = scalar_lea.vmem %s0, 216
  %v61 = vld [vmem:[%s60] sm:$0xff]
  %s62 = scalar_lea.vmem %s1, 120
  %63 = vst [vmem:[%s62] sm:$0xff] %v61
  %s64 = scalar_lea.vmem %s0, 88
  %v65 = vld [vmem:[%s64] sm:$0xff]
  %s66 = scalar_lea.vmem %s1, 24
  %67 = vst [vmem:[%s66] sm:$0xff] %v65
  %s68 = scalar_lea.vmem %s0, 200
  %v69 = vld [vmem:[%s68] sm:$0xff]
  %s70 = scalar_lea.vmem %s1, 136
  %71 = vst [vmem:[%s70] sm:$0xff] %v69
  %s72 = scalar_lea.vmem %s0, 72
  %v73 = vld [vmem:[%s72] sm:$0xff]
  %s74 = scalar_lea.vmem %s1, 40
  %75 = vst [vmem:[%s74] sm:$0xff] %v73
  %s76 = scalar_lea.vmem %s0, 184
  %v77 = vld [vmem:[%s76] sm:$0xff]
  %s78 = scalar_lea.vmem %s1, 152
  %79 = vst [vmem:[%s78] sm:$0xff] %v77
  %s80 = scalar_lea.vmem %s0, 56
  %v81 = vld [vmem:[%s80] sm:$0xff]
  %s82 = scalar_lea.vmem %s1, 56
  %83 = vst [vmem:[%s82] sm:$0xff] %v81
  %s84 = scalar_lea.vmem %s0, 168
  %v85 = vld [vmem:[%s84] sm:$0xff]
  %s86 = scalar_lea.vmem %s1, 168
  %87 = vst [vmem:[%s86] sm:$0xff] %v85
  %s88 = scalar_lea.vmem %s0, 40
  %v89 = vld [vmem:[%s88] sm:$0xff]
  %s90 = scalar_lea.vmem %s1, 72
  %91 = vst [vmem:[%s90] sm:$0xff] %v89
  %s92 = scalar_lea.vmem %s0, 152
  %v93 = vld [vmem:[%s92] sm:$0xff]
  %s94 = scalar_lea.vmem %s1, 184
  %95 = vst [vmem:[%s94] sm:$0xff] %v93
  %s96 = scalar_lea.vmem %s0, 24
  %v97 = vld [vmem:[%s96] sm:$0xff]
  %s98 = scalar_lea.vmem %s1, 88
  %99 = vst [vmem:[%s98] sm:$0xff] %v97
  %s100 = scalar_lea.vmem %s0, 136
  %v101 = vld [vmem:[%s100] sm:$0xff]
  %s102 = scalar_lea.vmem %s1, 200
  %103 = vst [vmem:[%s102] sm:$0xff] %v101
  %s104 = scalar_lea.vmem %s0, 8
  %v105 = vld [vmem:[%s104] sm:$0xff]
  %s106 = scalar_lea.vmem %s1, 104
  %107 = vst [vmem:[%s106] sm:$0xff] %v105
  %s108 = scalar_lea.vmem %s0, 120
  %v109 = vld [vmem:[%s108] sm:$0xff]
  %s110 = scalar_lea.vmem %s1, 216
  %111 = vst [vmem:[%s110] sm:$0xff] %v109

// kernel: fno2d_forward.11
$region0: #{fno2d_forward.11}
  #allocation0 [shape = 'u32[]', space=smem, size = 0x4, offset = 0x4, fixed_abs, tag = 'smem constant byte address 0x4 - core index']
  #allocation1 [shape = 'u32[144,128]{1,0:T(1,128)}', space=vmem, size = 0x12000, scoped, tag = 'internal scratch']
  %s0 = inlined_call_operand.vmem [shape: bf16[16,512], index: 0, kind: input, shape index: {}]
  %s1 = inlined_call_operand.vmem [shape: f32[16,16], index: 1, kind: input, shape index: {}]
  %s2 = inlined_call_operand.vmem [shape: f32[16,1], index: 2, kind: input, shape index: {}]
  %s3 = inlined_call_operand.vmem [shape: f32[16,512], index: 3, kind: input, shape index: {}]
  %s4 = inlined_call_operand.vmem [shape: bf16[16,512], index: 4, kind: output, shape index: {}]
  %s5 = sld [smem:[#allocation0]]
  $region144: #{fno2d_forward.11} parent=0
    _
  %s7 = ssub.s32 1, %s5
  %s8 = scalar_select 0, %s7, %s5
  $region1: #{fno2d_forward.11} parent=0
    #allocation2 [shape = 'u8[16384]{0}', space=vmem, size = 0x4000, scoped, tag = 'input window, operand 0']
    #allocation3 [shape = 'u8[32768]{0}', space=vmem, size = 0x8000, scoped, tag = 'input window, operand 3']
    #allocation4 [shape = 'u8[16384]{0}', space=vmem, size = 0x4000, scoped, tag = 'output window, operand 0']
    loop: start=0, step=1, limit=4
    $region2: #{fno2d_forward.11} parent=1 // loop_pre_header
      _
    $region3: #{fno2d_forward.11} parent=1 // loop_header
      %s10 = sphi 0, %s14
      %p11 = scmp.ge.s32.totalorder %s10, 4
      %s20 = sphi 0, %s22
      %s23 = sphi 0, %s20
      %s24 = sphi 0, %s23
      %s40 = sphi 0, %s24
      %s44 = sphi 0, %s44
      %s46 = sphi 0, %s44
      %s47 = sphi 0, %s46
      %s61 = sphi 0, %s47
      %s65 = sphi 0, %s65
      %s67 = sphi 0, %s65
      %s68 = sphi 0, %s67
      %s82 = sphi 0, %s68
      %s88 = sphi 0, %s90
      %s91 = sphi 0, %s88
      %s92 = sphi 0, %s91
      %s108 = sphi 0, %s92
      %s114 = sphi 0, %s116
      %s117 = sphi 0, %s114
      %s118 = sphi 0, %s117
      %s134 = sphi 0, %s118
    $region4: #{fno2d_forward.11} parent=1 // loop_header_branch
      %13 = sbr.rel (%p11) target = $region8
    $region5: #{fno2d_forward.11} parent=1 // loop_body
      %s15 = ssub.s32 %s10, 1
      %s16 = ssub.s32 %s10, 2
      %s17 = sadd.s32 %s10, 1
      %s18 = ssub.s32 %s10, %s17
      %p19 = scmp.eq.s32.totalorder %s18, 0
      %s21 = sadd.s32 %s20, 1
      %s22 = scalar_select %p19, %s20, %s21
      %p25 = pneg %p19
      %p26 = scmp.eq.s32.totalorder %s10, 1
      %p27 = por %p25, %p26
      %p28 = scmp.ne.s32.totalorder %s20, %s23
      %p29 = scmp.eq.s32.totalorder %s10, 0
      %p30 = por %p28, %p29
      %p31 = scmp.ne.s32.totalorder %s20, %s23
      %p32 = scmp.eq.s32.totalorder %s15, 1
      %p33 = por %p31, %p32
      %p34 = scmp.ne.s32.totalorder %s23, %s24
      %p35 = scmp.eq.s32.totalorder %s15, 0
      %p36 = por %p34, %p35
      %p37 = scmp.ne.s32.totalorder %s23, %s24
      %p38 = scmp.eq.s32.totalorder %s16, 1
      %p39 = por %p37, %p38
      %p41 = scmp.ne.s32.totalorder %s24, %s40
      %p42 = scmp.eq.s32.totalorder %s16, 0
      %p43 = por %p41, %p42
      %s45 = sadd.s32 %s44, 1
      %p48 = scmp.eq.s32.totalorder %s10, 1
      %p49 = scmp.ne.s32.totalorder %s44, %s46
      %p50 = scmp.eq.s32.totalorder %s10, 0
      %p51 = por %p49, %p50
      %p52 = scmp.ne.s32.totalorder %s44, %s46
      %p53 = scmp.eq.s32.totalorder %s15, 1
      %p54 = por %p52, %p53
      %p55 = scmp.ne.s32.totalorder %s46, %s47
      %p56 = scmp.eq.s32.totalorder %s15, 0
      %p57 = por %p55, %p56
      %p58 = scmp.ne.s32.totalorder %s46, %s47
      %p59 = scmp.eq.s32.totalorder %s16, 1
      %p60 = por %p58, %p59
      %p62 = scmp.ne.s32.totalorder %s47, %s61
      %p63 = scmp.eq.s32.totalorder %s16, 0
      %p64 = por %p62, %p63
      %s66 = sadd.s32 %s65, 1
      %p69 = scmp.eq.s32.totalorder %s10, 1
      %p70 = scmp.ne.s32.totalorder %s65, %s67
      %p71 = scmp.eq.s32.totalorder %s10, 0
      %p72 = por %p70, %p71
      %p73 = scmp.ne.s32.totalorder %s65, %s67
      %p74 = scmp.eq.s32.totalorder %s15, 1
      %p75 = por %p73, %p74
      %p76 = scmp.ne.s32.totalorder %s67, %s68
      %p77 = scmp.eq.s32.totalorder %s15, 0
      %p78 = por %p76, %p77
      %p79 = scmp.ne.s32.totalorder %s67, %s68
      %p80 = scmp.eq.s32.totalorder %s16, 1
      %p81 = por %p79, %p80
      %p83 = scmp.ne.s32.totalorder %s68, %s82
      %p84 = scmp.eq.s32.totalorder %s16, 0
      %p85 = por %p83, %p84
      %s86 = ssub.s32 %s10, %s17
      %p87 = scmp.eq.s32.totalorder %s86, 0
      %s89 = sadd.s32 %s88, 1
      %s90 = scalar_select %p87, %s88, %s89
      %p93 = pneg %p87
      %p94 = scmp.eq.s32.totalorder %s10, 1
      %p95 = por %p93, %p94
      %p96 = scmp.ne.s32.totalorder %s88, %s91
      %p97 = scmp.eq.s32.totalorder %s10, 0
      %p98 = por %p96, %p97
      %p99 = scmp.ne.s32.totalorder %s88, %s91
      %p100 = scmp.eq.s32.totalorder %s15, 1
      %p101 = por %p99, %p100
      %p102 = scmp.ne.s32.totalorder %s91, %s92
      %p103 = scmp.eq.s32.totalorder %s15, 0
      %p104 = por %p102, %p103
      %p105 = scmp.ne.s32.totalorder %s91, %s92
      %p106 = scmp.eq.s32.totalorder %s16, 1
      %p107 = por %p105, %p106
      %p109 = scmp.ne.s32.totalorder %s92, %s108
      %p110 = scmp.eq.s32.totalorder %s16, 0
      %p111 = por %p109, %p110
      %s112 = ssub.s32 %s10, %s17
      %p113 = scmp.eq.s32.totalorder %s112, 0
      %s115 = sadd.s32 %s114, 1
      %s116 = scalar_select %p113, %s114, %s115
      %p119 = pneg %p113
      %p120 = scmp.eq.s32.totalorder %s10, 1
      %p121 = por %p119, %p120
      %p122 = scmp.ne.s32.totalorder %s114, %s117
      %p123 = scmp.eq.s32.totalorder %s10, 0
      %p124 = por %p122, %p123
      %p125 = scmp.ne.s32.totalorder %s114, %s117
      %p126 = scmp.eq.s32.totalorder %s15, 1
      %p127 = por %p125, %p126
      %p128 = scmp.ne.s32.totalorder %s117, %s118
      %p129 = scmp.eq.s32.totalorder %s15, 0
      %p130 = por %p128, %p129
      %p131 = scmp.ne.s32.totalorder %s117, %s118
      %p132 = scmp.eq.s32.totalorder %s16, 1
      %p133 = por %p131, %p132
      %p135 = scmp.ne.s32.totalorder %s118, %s134
      %p136 = scmp.eq.s32.totalorder %s16, 0
      %p137 = por %p135, %p136
      %p138 = scmp.le.s32.totalorder 1, %s10
      %p139 = scmp.lt.s32.totalorder %s10, 3
      %p140 = pnand %p138, %p139
      %p141 = pneg %p140
      // Predicated region
      $region9: #{fno2d_forward.11} parent=5 // pred_check
        _
      $region10: #{fno2d_forward.11} parent=5 // pred_check_branch
        %143 = sbr.rel (%p140) target = $region12
      $region11: #{fno2d_forward.11} parent=5 // pred_region
        %s144 = ssub.s32 %s10, 1
        // Predicated region
        $region13: #{fno2d_forward.11} parent=11 // pred_check
          %p145 = pneg %p57
        $region14: #{fno2d_forward.11} parent=11 // pred_check_branch
          %147 = sbr.rel (%p145) target = $region16
        $region15: #{fno2d_forward.11} parent=11 // pred_region
          _
        $region16: #{fno2d_forward.11} parent=11 // pred_fallthru
          _
        // Predicated region
        $region17: #{fno2d_forward.11} parent=11 // pred_check
          %p148 = pneg %p78
        $region18: #{fno2d_forward.11} parent=11 // pred_check_branch
          %150 = sbr.rel (%p148) target = $region20
        $region19: #{fno2d_forward.11} parent=11 // pred_region
          _
        $region20: #{fno2d_forward.11} parent=11 // pred_fallthru
          _
      $region12: #{fno2d_forward.11} parent=5 // pred_fallthru
        _
      %p151 = scmp.lt.s32.totalorder %s10, 2
      // Predicated region
      $region21: #{fno2d_forward.11} parent=5 // pred_check
        %p152 = pneg %p151
      $region22: #{fno2d_forward.11} parent=5 // pred_check_branch
        %154 = sbr.rel (%p152) target = $region24
      $region23: #{fno2d_forward.11} parent=5 // pred_region
        // Predicated region
        $region25: #{fno2d_forward.11} parent=23 // pred_check
          %p155 = pneg %p30
        $region26: #{fno2d_forward.11} parent=23 // pred_check_branch
          %157 = sbr.rel (%p155) target = $region28
        $region27: #{fno2d_forward.11} parent=23 // pred_region
          %s158 = sand.u32 %s20, 1
          %s159 = sand.u32 %s20, 1
          %s160 = smul.addr %s159, 16
          %s161 = scalar_lea.vmem [#allocation2], %s160
          %s162 = smul.u32 2, %s10
          %s163 = smul.addr %s162, 4
          %s164 = scalar_lea.vmem %s0, %s163
          // Predicated region
          $region29: #{fno2d_forward.11} parent=27 // pred_check
            _
          $region30: #{fno2d_forward.11} parent=27 // pred_check_branch
            %166 = sbr.rel (0) target = $region32
          $region31: #{fno2d_forward.11} parent=27 // pred_region
            // Predicated region
            $region33: #{fno2d_forward.11} parent=31 // pred_check
              _
            $region34: #{fno2d_forward.11} parent=31 // pred_check_branch
              %168 = sbr.rel (0) target = $region36
            $region35: #{fno2d_forward.11} parent=31 // pred_region
              // Predicated region
              $region48: #{fno2d_forward.11} parent=35 // pred_check
                _
              $region49: #{fno2d_forward.11} parent=35 // pred_check_branch
                %186 = sbr.rel (0) target = $region51
              $region50: #{fno2d_forward.11} parent=35 // pred_region
                loop: start=0, step=1, limit=1
                $region52: #{fno2d_forward.11} parent=50 // loop_pre_header
                  _
                $region53: #{fno2d_forward.11} parent=50 // loop_header
                  %s188 = sphi 0, %s192
                  %p189 = scmp.ge.s32.totalorder %s188, 1
                  %s193 = sphi %s164, %s164
                  %s194 = sphi %s161, %s161
                $region54: #{fno2d_forward.11} parent=50 // loop_header_branch
                  %191 = sbr.rel (%p189) target = $region58
                $region55: #{fno2d_forward.11} parent=50 // loop_body
                  %v195 = vld [vmem:[%s193] sm:$0xff]
                  %196 = vst [vmem:[%s194] sm:$0xff] %v195
                  %v197 = vld [vmem:[%s193 + $0x10] sm:$0xff]
                  %198 = vst [vmem:[%s194 + $0x8] sm:$0xff] %v197
                $region56: #{fno2d_forward.11} parent=50 // loop_footer
                  %s192 = sadd.s32 1, %s188
                $region57: #{fno2d_forward.11} parent=50 // loop_footer_branch
                  %187 = sbr.rel target = $region53
                $region58: #{fno2d_forward.11} parent=50 // loop_exit
                  _
              $region51: #{fno2d_forward.11} parent=35 // pred_fallthru
                _
              // Predicated region
              $region59: #{fno2d_forward.11} parent=35 // pred_check
                _
              $region60: #{fno2d_forward.11} parent=35 // pred_check_branch
                %200 = sbr.rel target = $region62
              $region61: #{fno2d_forward.11} parent=35 // pred_region
                _
              $region62: #{fno2d_forward.11} parent=35 // pred_fallthru
                _
            $region36: #{fno2d_forward.11} parent=31 // pred_fallthru
              _
            // Predicated region
            $region37: #{fno2d_forward.11} parent=31 // pred_check
              _
            $region38: #{fno2d_forward.11} parent=31 // pred_check_branch
              %170 = sbr.rel target = $region40
            $region39: #{fno2d_forward.11} parent=31 // pred_region
              %s172 = ssub.s32 256, 1
              loop: start=0, step=1, limit=1
              $region41: #{fno2d_forward.11} parent=39 // loop_pre_header
                _
              $region42: #{fno2d_forward.11} parent=39 // loop_header
                %s174 = sphi 0, %s178
                %p175 = scmp.ge.s32.totalorder %s174, 1
                %s179 = sphi %s164, %s164
                %s180 = sphi %s161, %s161
              $region43: #{fno2d_forward.11} parent=39 // loop_header_branch
                %177 = sbr.rel (%p175) target = $region47
              $region44: #{fno2d_forward.11} parent=39 // loop_body
                %v181 = vld [vmem:[%s179] sm:%s172]
                %182 = vst [vmem:[%s180] sm:%s172] %v181
                %v183 = vld [vmem:[%s179 + $0x10] sm:%s172]
                %184 = vst [vmem:[%s180 + $0x8] sm:%s172] %v183
              $region45: #{fno2d_forward.11} parent=39 // loop_footer
                %s178 = sadd.s32 1, %s174
              $region46: #{fno2d_forward.11} parent=39 // loop_footer_branch
                %173 = sbr.rel target = $region42
              $region47: #{fno2d_forward.11} parent=39 // loop_exit
                _
            $region40: #{fno2d_forward.11} parent=31 // pred_fallthru
              _
          $region32: #{fno2d_forward.11} parent=27 // pred_fallthru
            _
          %201 = vnop
        $region28: #{fno2d_forward.11} parent=23 // pred_fallthru
          _
        // Predicated region
        $region63: #{fno2d_forward.11} parent=23 // pred_check
          %p202 = pneg %p98
        $region64: #{fno2d_forward.11} parent=23 // pred_check_branch
          %204 = sbr.rel (%p202) target = $region66
        $region65: #{fno2d_forward.11} parent=23 // pred_region
          %s205 = sand.u32 %s88, 1
          %s206 = sand.u32 %s88, 1
          %s207 = smul.addr %s206, 32
          %s208 = scalar_lea.vmem [#allocation3], %s207
          %s209 = smul.u32 2, %s10
          %s210 = smul.addr %s209, 8
          %s211 = scalar_lea.vmem %s3, %s210
          // Predicated region
          $region67: #{fno2d_forward.11} parent=65 // pred_check
            _
          $region68: #{fno2d_forward.11} parent=65 // pred_check_branch
            %213 = sbr.rel (0) target = $region70
          $region69: #{fno2d_forward.11} parent=65 // pred_region
            // Predicated region
            $region71: #{fno2d_forward.11} parent=69 // pred_check
              _
            $region72: #{fno2d_forward.11} parent=69 // pred_check_branch
              %215 = sbr.rel (0) target = $region74
            $region73: #{fno2d_forward.11} parent=69 // pred_region
              loop: start=0, step=1, limit=1
              $region75: #{fno2d_forward.11} parent=73 // loop_pre_header
                _
              $region76: #{fno2d_forward.11} parent=73 // loop_header
                %s217 = sphi 0, %s221
                %p218 = scmp.ge.s32.totalorder %s217, 1
                %s222 = sphi %s211, %s211
                %s223 = sphi %s208, %s208
              $region77: #{fno2d_forward.11} parent=73 // loop_header_branch
                %220 = sbr.rel (%p218) target = $region81
              $region78: #{fno2d_forward.11} parent=73 // loop_body
                %v224 = vld [vmem:[%s222] sm:$0xff]
                %225 = vst [vmem:[%s223] sm:$0xff] %v224
                %v226 = vld [vmem:[%s222 + $0x8] sm:$0xff]
                %227 = vst [vmem:[%s223 + $0x8] sm:$0xff] %v226
                %v228 = vld [vmem:[%s222 + $0x20] sm:$0xff]
                %229 = vst [vmem:[%s223 + $0x10] sm:$0xff] %v228
                %v230 = vld [vmem:[%s222 + $0x28] sm:$0xff]
                %231 = vst [vmem:[%s223 + $0x18] sm:$0xff] %v230
              $region79: #{fno2d_forward.11} parent=73 // loop_footer
                %s221 = sadd.s32 1, %s217
              $region80: #{fno2d_forward.11} parent=73 // loop_footer_branch
                %216 = sbr.rel target = $region76
              $region81: #{fno2d_forward.11} parent=73 // loop_exit
                _
            $region74: #{fno2d_forward.11} parent=69 // pred_fallthru
              _
            // Predicated region
            $region82: #{fno2d_forward.11} parent=69 // pred_check
              _
            $region83: #{fno2d_forward.11} parent=69 // pred_check_branch
              %233 = sbr.rel target = $region85
            $region84: #{fno2d_forward.11} parent=69 // pred_region
              _
            $region85: #{fno2d_forward.11} parent=69 // pred_fallthru
              _
          $region70: #{fno2d_forward.11} parent=65 // pred_fallthru
            _
          %234 = vnop
        $region66: #{fno2d_forward.11} parent=23 // pred_fallthru
          _
      $region24: #{fno2d_forward.11} parent=5 // pred_fallthru
        _
      %p235 = scmp.le.s32.totalorder 1, %s10
      %p236 = scmp.lt.s32.totalorder %s10, 3
      %p237 = pnand %p235, %p236
      %p238 = pneg %p237
      // Predicated region
      $region86: #{fno2d_forward.11} parent=5 // pred_check
        _
      $region87: #{fno2d_forward.11} parent=5 // pred_check_branch
        %240 = sbr.rel (%p237) target = $region89
      $region88: #{fno2d_forward.11} parent=5 // pred_region
        %s241 = ssub.s32 %s10, 1
        %s242 = sand.u32 %s23, 1
        %s243 = sand.u32 %s23, 1
        %s244 = smul.addr %s243, 16
        %s245 = scalar_lea.vmem [#allocation2], %s244
        // Predicated region
        $region90: #{fno2d_forward.11} parent=88 // pred_check
          %p246 = pneg %p36
        $region91: #{fno2d_forward.11} parent=88 // pred_check_branch
          %248 = sbr.rel (%p246) target = $region93
        $region92: #{fno2d_forward.11} parent=88 // pred_region
          _
        $region93: #{fno2d_forward.11} parent=88 // pred_fallthru
          _
        %s249 = sand.u32 %s91, 1
        %s250 = sand.u32 %s91, 1
        %s251 = smul.addr %s250, 32
        %s252 = scalar_lea.vmem [#allocation3], %s251
        // Predicated region
        $region94: #{fno2d_forward.11} parent=88 // pred_check
          %p253 = pneg %p104
        $region95: #{fno2d_forward.11} parent=88 // pred_check_branch
          %255 = sbr.rel (%p253) target = $region97
        $region96: #{fno2d_forward.11} parent=88 // pred_region
          _
        $region97: #{fno2d_forward.11} parent=88 // pred_fallthru
          _
        %s256 = sand.u32 %s23, 1
        %s257 = sand.u32 %s23, 1
        %s258 = smul.addr %s257, 16
        %s259 = scalar_lea.vmem [#allocation2], %s258
        %p260 = pneg %p36
        %p261 = pneg %p33
        %p262 = pneg %p57
        %p263 = pneg %p54
        %p264 = pneg %p78
        %p265 = pneg %p75
        %s266 = sand.u32 %s91, 1
        %s267 = sand.u32 %s91, 1
        %s268 = smul.addr %s267, 32
        %s269 = scalar_lea.vmem [#allocation3], %s268
        %p270 = pneg %p104
        %p271 = pneg %p101
        %p272 = pneg %p130
        %p273 = pneg %p127
        %s274 = sand.u32 %s117, 1
        %s275 = sand.u32 %s117, 1
        %s276 = smul.addr %s275, 16
        %s277 = scalar_lea.vmem [#allocation4], %s276
        %s278 = smul.u32 2, %s15
        %s279 = smul.u32 2, %s15
        %s280 = smul.u32 2, %s15
        %v281 = vld [vmem:[%s1] sm:$0xff]
        %v282 = vld [vmem:[%s1 + $0x8] sm:$0xff]
        %v283 = vld [vmem:[%s245] sm:$0xff]
        %v284 = vld [vmem:[%s245 + $0x8] sm:$0xff]
        %v285 = vunpack.c.l.bf16 %v283
        %v286 = vunpack.c.h.bf16 %v283
        %v287 = vunpack.c.l.bf16 %v284
        %v288 = vunpack.c.h.bf16 %v284
        %v289 = vld [vmem:[%s2] sm:$0xff]
        %v290 = vld [vmem:[%s2 + $0x8] sm:$0xff]
        %292 = vset.pattern.permute.xlu0 0
        %293 = vperm.xlu0 %292, %v289
        %v294 = vpop.permute.xlu0 %293
        %297 = vset.pattern.permute.xlu0 0
        %298 = vperm.xlu0 %297, %v290
        %v299 = vpop.permute.xlu0 %298
        %vm301 = vcmask 130048
        %v303 = vsel %vm301, %v281, 0
        %v306 = vsel %vm301, %v282, 0
        %308 = vmatprep.subr.mxu0 0.0
        %309 = vmatpush1.msra.mxu0 0.0
        %310 = vmatprep.subr.mxu0 0.0
        %311 = vmatpush1.msra.mxu0 0.0
        %312 = vmatprep.subr.mxu0 0.0
        %313 = vmatpush1.msra.mxu0 0.0
        %314 = vmatprep.subr.mxu0 0.0
        %315 = vmatpush1.msra.mxu0 0.0
        %316 = vmatprep.subr.mxu0 0.0
        %317 = vmatpush1.msra.mxu0 0.0
        %318 = vmatprep.subr.mxu0 0.0
        %319 = vmatpush1.msra.mxu0 0.0
        %320 = vmatprep.subr.mxu0 0.0
        %321 = vmatpush1.msra.mxu0 0.0
        %322 = vmatprep.subr.mxu0 0.0
        %323 = vmatpush1.msra.mxu0 0.0
        %324 = vmatprep.subr.mxu0 0.0
        %325 = vmatpush1.msra.mxu0 0.0
        %326 = vmatprep.subr.mxu0 0.0
        %327 = vmatpush1.msra.mxu0 0.0
        %328 = vmatprep.subr.mxu0 0.0
        %329 = vmatpush1.msra.mxu0 0.0
        %330 = vmatprep.subr.mxu0 0.0
        %331 = vmatpush1.msra.mxu0 0.0
        %332 = vmatprep.subr.mxu0 0.0
        %333 = vmatpush1.msra.mxu0 0.0
        %334 = vmatprep.subr.mxu0 0.0
        %335 = vmatpush1.msra.mxu0 0.0
        %336 = vmatprep.subr.mxu0 %v288
        %337 = vmatpush1.msra.mxu0 %v287
        %338 = vmatprep.subr.mxu0 %v286
        %339 = vmatpush1.msra.mxu0 %v285
        %340 = vmatprep.subr.mxu0 0.0
        %341 = vmatpush2.msra.mxu0 0.0
        %342 = vmatprep.subr.mxu0 0.0
        %343 = vmatpush2.msra.mxu0 0.0
        %344 = vmatprep.subr.mxu0 0.0
        %345 = vmatpush2.msra.mxu0 0.0
        %346 = vmatprep.subr.mxu0 0.0
        %347 = vmatpush2.msra.mxu0 0.0
        %348 = vmatprep.subr.mxu0 0.0
        %349 = vmatpush2.msra.mxu0 0.0
        %350 = vmatprep.subr.mxu0 0.0
        %351 = vmatpush2.msra.mxu0 0.0
        %352 = vmatprep.subr.mxu0 0.0
        %353 = vmatpush2.msra.mxu0 0.0
        %354 = vmatprep.subr.mxu0 0.0
        %355 = vmatpush2.msra.mxu0 0.0
        %356 = vmatprep.subr.mxu0 0.0
        %357 = vmatpush2.msra.mxu0 0.0
        %358 = vmatprep.subr.mxu0 0.0
        %359 = vmatpush2.msra.mxu0 0.0
        %360 = vmatprep.subr.mxu0 0.0
        %361 = vmatpush2.msra.mxu0 0.0
        %362 = vmatprep.subr.mxu0 0.0
        %363 = vmatpush2.msra.mxu0 0.0
        %364 = vmatprep.subr.mxu0 0.0
        %365 = vmatpush2.msra.mxu0 0.0
        %366 = vmatprep.subr.mxu0 0.0
        %367 = vmatpush2.msra.mxu0 0.0
        %368 = vmatprep.subr.mxu0 0.0
        %369 = vmatpush2.msra.mxu0 0.0
        %370 = vmatprep.subr.mxu0 0.0
        %371 = vmatpush2.msra.mxu0 0.0
        %372 = vmatprep.mubr.f32.mxu0 0.0
        %373 = vmatmul.mubr.f32.gmra.mxu0 %v303
        %v374 = vpop.f32.mrf.mxu0
        %v375 = vadd.f32 %v294, %v374
        %v376 = vpop.f32.mrf.mxu0
        %v377 = vadd.f32 %v294, %v376
        %378 = vmatprep.mubr.f32.mxu0 0.0
        %379 = vmatmul.mubr.f32.gmra.mxu0 %v306
        %v380 = vpop.f32.mrf.mxu0
        %v381 = vadd.f32 %v299, %v380
        %v382 = vpop.f32.mrf.mxu0
        %v383 = vadd.f32 %v299, %v382
        %384 = vdwg.mxu0
        %v385 = vld [vmem:[%s252] sm:$0xff]
        %v386 = vld [vmem:[%s252 + $0x8] sm:$0xff]
        %v387 = vld [vmem:[%s252 + $0x10] sm:$0xff]
        %v388 = vld [vmem:[%s252 + $0x18] sm:$0xff]
        %v389 = vadd.f32 %v375, %v385
        %v390 = vadd.f32 %v377, %v386
        %v391 = vadd.f32 %v381, %v387
        %v392 = vadd.f32 %v383, %v388
        %v393 = vmax.f32 %v389, 0.0
        %v394 = vmax.f32 %v390, 0.0
        %v395 = vmax.f32 %v391, 0.0
        %v396 = vmax.f32 %v392, 0.0
        %v397 = vpack.c.bf16 %v395, %v393
        %v398 = vpack.c.bf16 %v396, %v394
        %v401 = vunpack.c.l.b16 %v397
        %v402 = vunpack.c.l.b16 %v398
        %v403 = vunpack.c.h.b16 %v397
        %v404 = vunpack.c.h.b16 %v398
        %v405 = vpack.c.b16 %v402, %v401
        %v406 = vpack.c.b16 %v404, %v403
        %409 = vst [vmem:[%s277] sm:$0xff] %v405
        %410 = vst [vmem:[%s277 + $0x8] sm:$0xff] %v406
        %s411 = sand.u32 %s117, 1
        %s412 = sand.u32 %s117, 1
        %s413 = smul.addr %s412, 16
        %s414 = scalar_lea.vmem [#allocation4], %s413
        // Predicated region
        $region98: #{fno2d_forward.11} parent=88 // pred_check
          %p415 = pneg %p127
        $region99: #{fno2d_forward.11} parent=88 // pred_check_branch
          %417 = sbr.rel (%p415) target = $region101
        $region100: #{fno2d_forward.11} parent=88 // pred_region
          %s418 = smul.u32 2, %s15
          %s419 = smul.addr %s418, 4
          %s420 = scalar_lea.vmem %s4, %s419
          // Predicated region
          $region102: #{fno2d_forward.11} parent=100 // pred_check
            _
          $region103: #{fno2d_forward.11} parent=100 // pred_check_branch
            %422 = sbr.rel (0) target = $region105
          $region104: #{fno2d_forward.11} parent=100 // pred_region
            // Predicated region
            $region106: #{fno2d_forward.11} parent=104 // pred_check
              _
            $region107: #{fno2d_forward.11} parent=104 // pred_check_branch
              %424 = sbr.rel (0) target = $region109
            $region108: #{fno2d_forward.11} parent=104 // pred_region
              // Predicated region
              $region121: #{fno2d_forward.11} parent=108 // pred_check
                _
              $region122: #{fno2d_forward.11} parent=108 // pred_check_branch
                %442 = sbr.rel (0) target = $region124
              $region123: #{fno2d_forward.11} parent=108 // pred_region
                loop: start=0, step=1, limit=1
                $region125: #{fno2d_forward.11} parent=123 // loop_pre_header
                  _
                $region126: #{fno2d_forward.11} parent=123 // loop_header
                  %s444 = sphi 0, %s448
                  %p445 = scmp.ge.s32.totalorder %s444, 1
                  %s449 = sphi %s414, %s414
                  %s450 = sphi %s420, %s420
                $region127: #{fno2d_forward.11} parent=123 // loop_header_branch
                  %447 = sbr.rel (%p445) target = $region131
                $region128: #{fno2d_forward.11} parent=123 // loop_body
                  %v451 = vld [vmem:[%s449] sm:$0xff]
                  %452 = vst [vmem:[%s450] sm:$0xff] %v451
                  %v453 = vld [vmem:[%s449 + $0x8] sm:$0xff]
                  %454 = vst [vmem:[%s450 + $0x10] sm:$0xff] %v453
                $region129: #{fno2d_forward.11} parent=123 // loop_footer
                  %s448 = sadd.s32 1, %s444
                $region130: #{fno2d_forward.11} parent=123 // loop_footer_branch
                  %443 = sbr.rel target = $region126
                $region131: #{fno2d_forward.11} parent=123 // loop_exit
                  _
              $region124: #{fno2d_forward.11} parent=108 // pred_fallthru
                _
              // Predicated region
              $region132: #{fno2d_forward.11} parent=108 // pred_check
                _
              $region133: #{fno2d_forward.11} parent=108 // pred_check_branch
                %456 = sbr.rel target = $region135
              $region134: #{fno2d_forward.11} parent=108 // pred_region
                _
              $region135: #{fno2d_forward.11} parent=108 // pred_fallthru
                _
            $region109: #{fno2d_forward.11} parent=104 // pred_fallthru
              _
            // Predicated region
            $region110: #{fno2d_forward.11} parent=104 // pred_check
              _
            $region111: #{fno2d_forward.11} parent=104 // pred_check_branch
              %426 = sbr.rel target = $region113
            $region112: #{fno2d_forward.11} parent=104 // pred_region
              %s428 = ssub.s32 256, 1
              loop: start=0, step=1, limit=1
              $region114: #{fno2d_forward.11} parent=112 // loop_pre_header
                _
              $region115: #{fno2d_forward.11} parent=112 // loop_header
                %s430 = sphi 0, %s434
                %p431 = scmp.ge.s32.totalorder %s430, 1
                %s435 = sphi %s414, %s414
                %s436 = sphi %s420, %s420
              $region116: #{fno2d_forward.11} parent=112 // loop_header_branch
                %433 = sbr.rel (%p431) target = $region120
              $region117: #{fno2d_forward.11} parent=112 // loop_body
                %v437 = vld [vmem:[%s435] sm:%s428]
                %438 = vst [vmem:[%s436] sm:%s428] %v437
                %v439 = vld [vmem:[%s435 + $0x8] sm:%s428]
                %440 = vst [vmem:[%s436 + $0x10] sm:%s428] %v439
              $region118: #{fno2d_forward.11} parent=112 // loop_footer
                %s434 = sadd.s32 1, %s430
              $region119: #{fno2d_forward.11} parent=112 // loop_footer_branch
                %429 = sbr.rel target = $region115
              $region120: #{fno2d_forward.11} parent=112 // loop_exit
                _
            $region113: #{fno2d_forward.11} parent=104 // pred_fallthru
              _
          $region105: #{fno2d_forward.11} parent=100 // pred_fallthru
            _
          %457 = vnop
        $region101: #{fno2d_forward.11} parent=88 // pred_fallthru
          _
      $region89: #{fno2d_forward.11} parent=5 // pred_fallthru
        _
      %p458 = scmp.le.s32.totalorder 2, %s10
      // Predicated region
      $region136: #{fno2d_forward.11} parent=5 // pred_check
        %p459 = pneg %p458
      $region137: #{fno2d_forward.11} parent=5 // pred_check_branch
        %461 = sbr.rel (%p459) target = $region139
      $region138: #{fno2d_forward.11} parent=5 // pred_region
        %s462 = ssub.s32 %s10, 2
        // Predicated region
        $region140: #{fno2d_forward.11} parent=138 // pred_check
          %p463 = pneg %p133
        $region141: #{fno2d_forward.11} parent=138 // pred_check_branch
          %465 = sbr.rel (%p463) target = $region143
        $region142: #{fno2d_forward.11} parent=138 // pred_region
          %s466 = sand.u32 %s118, 1
          %s467 = sand.u32 %s118, 1
          %s468 = smul.addr %s467, 16
          %s469 = scalar_lea.vmem [#allocation4], %s468
        $region143: #{fno2d_forward.11} parent=138 // pred_fallthru
          _
      $region139: #{fno2d_forward.11} parent=5 // pred_fallthru
        _
    $region6: #{fno2d_forward.11} parent=1 // loop_footer
      %s14 = sadd.s32 1, %s10
    $region7: #{fno2d_forward.11} parent=1 // loop_footer_branch
      %9 = sbr.rel target = $region3
    $region8: #{fno2d_forward.11} parent=1 // loop_exit
      _

// kernel: fno2d_forward.17
$region0: #{fno2d_forward.17}
  #allocation0 [shape = 'u32[]', space=smem, size = 0x4, offset = 0x4, fixed_abs, tag = 'smem constant byte address 0x4 - core index']
  #allocation1 [shape = 'u32[144,128]{1,0:T(1,128)}', space=vmem, size = 0x12000, scoped, tag = 'internal scratch']
  #allocation2 [shape = 'f32[1,1]{1,0:T(1,128)S(1)}', space=vmem, size = 0x200, scoped, tag = 'scoped memory for fno2d_forward.17']
  %s0 = inlined_call_operand.vmem [shape: bf16[16,512], index: 0, kind: input, shape index: {}]
  %s1 = inlined_call_operand.vmem [shape: f32[16,512], index: 1, kind: input, shape index: {}]
  %s2 = inlined_call_operand.vmem [shape: f32[16,16], index: 2, kind: input, shape index: {}]
  %s3 = inlined_call_operand.vmem [shape: f32[16,1], index: 3, kind: input, shape index: {}]
  %s4 = inlined_call_operand.vmem [shape: f32[128,16], index: 4, kind: input, shape index: {}]
  %s5 = inlined_call_operand.vmem [shape: f32[128,1], index: 5, kind: input, shape index: {}]
  %s6 = inlined_call_operand.vmem [shape: f32[1,128], index: 6, kind: input, shape index: {}]
  %s7 = inlined_call_operand.<no memory space> [shape: f32[1,1], index: 7, kind: input, shape index: {}]
  %s8 = inlined_call_operand.vmem [shape: f32[1,512], index: 8, kind: output, shape index: {}]
  %s9 = sld [smem:[#allocation0]]
  $region126: #{fno2d_forward.17} parent=0
    _
  %s11 = ssub.s32 1, %s9
  %s12 = scalar_select 0, %s11, %s9
  %v13 = vstv %s7
  %14 = vst [vmem:[#allocation2] sm:$0x1] %v13
  $region1: #{fno2d_forward.17} parent=0
    #allocation3 [shape = 'u8[16384]{0}', space=vmem, size = 0x4000, scoped, tag = 'input window, operand 0']
    #allocation4 [shape = 'u8[32768]{0}', space=vmem, size = 0x8000, scoped, tag = 'input window, operand 1']
    loop: start=0, step=1, limit=4
    $region2: #{fno2d_forward.17} parent=1 // loop_pre_header
      _
    $region3: #{fno2d_forward.17} parent=1 // loop_header
      %s16 = sphi 0, %s20
      %p17 = scmp.ge.s32.totalorder %s16, 4
      %s26 = sphi 0, %s28
      %s29 = sphi 0, %s26
      %s30 = sphi 0, %s29
      %s46 = sphi 0, %s30
      %s52 = sphi 0, %s54
      %s55 = sphi 0, %s52
      %s56 = sphi 0, %s55
      %s72 = sphi 0, %s56
      %s76 = sphi 0, %s76
      %s78 = sphi 0, %s76
      %s79 = sphi 0, %s78
      %s93 = sphi 0, %s79
      %s97 = sphi 0, %s97
      %s99 = sphi 0, %s97
      %s100 = sphi 0, %s99
      %s114 = sphi 0, %s100
      %s118 = sphi 0, %s118
      %s120 = sphi 0, %s118
      %s121 = sphi 0, %s120
      %s135 = sphi 0, %s121
      %s139 = sphi 0, %s139
      %s141 = sphi 0, %s139
      %s142 = sphi 0, %s141
      %s156 = sphi 0, %s142
      %s160 = sphi 0, %s160
      %s162 = sphi 0, %s160
      %s163 = sphi 0, %s162
      %s177 = sphi 0, %s163
      %s181 = sphi 0, %s181
      %s183 = sphi 0, %s181
      %s184 = sphi 0, %s183
      %s198 = sphi 0, %s184
      %s204 = sphi 0, %s206
      %s207 = sphi 0, %s204
      %s208 = sphi 0, %s207
      %s224 = sphi 0, %s208
    $region4: #{fno2d_forward.17} parent=1 // loop_header_branch
      %19 = sbr.rel (%p17) target = $region8
    $region5: #{fno2d_forward.17} parent=1 // loop_body
      %s21 = ssub.s32 %s16, 1
      %s22 = ssub.s32 %s16, 2
      %s23 = sadd.s32 %s16, 1
      %s24 = ssub.s32 %s16, %s23
      %p25 = scmp.eq.s32.totalorder %s24, 0
      %s27 = sadd.s32 %s26, 1
      %s28 = scalar_select %p25, %s26, %s27
      %p31 = pneg %p25
      %p32 = scmp.eq.s32.totalorder %s16, 1
      %p33 = por %p31, %p32
      %p34 = scmp.ne.s32.totalorder %s26, %s29
      %p35 = scmp.eq.s32.totalorder %s16, 0
      %p36 = por %p34, %p35
      %p37 = scmp.ne.s32.totalorder %s26, %s29
      %p38 = scmp.eq.s32.totalorder %s21, 1
      %p39 = por %p37, %p38
      %p40 = scmp.ne.s32.totalorder %s29, %s30
      %p41 = scmp.eq.s32.totalorder %s21, 0
      %p42 = por %p40, %p41
      %p43 = scmp.ne.s32.totalorder %s29, %s30
      %p44 = scmp.eq.s32.totalorder %s22, 1
      %p45 = por %p43, %p44
      %p47 = scmp.ne.s32.totalorder %s30, %s46
      %p48 = scmp.eq.s32.totalorder %s22, 0
      %p49 = por %p47, %p48
      %s50 = ssub.s32 %s16, %s23
      %p51 = scmp.eq.s32.totalorder %s50, 0
      %s53 = sadd.s32 %s52, 1
      %s54 = scalar_select %p51, %s52, %s53
      %p57 = pneg %p51
      %p58 = scmp.eq.s32.totalorder %s16, 1
      %p59 = por %p57, %p58
      %p60 = scmp.ne.s32.totalorder %s52, %s55
      %p61 = scmp.eq.s32.totalorder %s16, 0
      %p62 = por %p60, %p61
      %p63 = scmp.ne.s32.totalorder %s52, %s55
      %p64 = scmp.eq.s32.totalorder %s21, 1
      %p65 = por %p63, %p64
      %p66 = scmp.ne.s32.totalorder %s55, %s56
      %p67 = scmp.eq.s32.totalorder %s21, 0
      %p68 = por %p66, %p67
      %p69 = scmp.ne.s32.totalorder %s55, %s56
      %p70 = scmp.eq.s32.totalorder %s22, 1
      %p71 = por %p69, %p70
      %p73 = scmp.ne.s32.totalorder %s56, %s72
      %p74 = scmp.eq.s32.totalorder %s22, 0
      %p75 = por %p73, %p74
      %s77 = sadd.s32 %s76, 1
      %p80 = scmp.eq.s32.totalorder %s16, 1
      %p81 = scmp.ne.s32.totalorder %s76, %s78
      %p82 = scmp.eq.s32.totalorder %s16, 0
      %p83 = por %p81, %p82
      %p84 = scmp.ne.s32.totalorder %s76, %s78
      %p85 = scmp.eq.s32.totalorder %s21, 1
      %p86 = por %p84, %p85
      %p87 = scmp.ne.s32.totalorder %s78, %s79
      %p88 = scmp.eq.s32.totalorder %s21, 0
      %p89 = por %p87, %p88
      %p90 = scmp.ne.s32.totalorder %s78, %s79
      %p91 = scmp.eq.s32.totalorder %s22, 1
      %p92 = por %p90, %p91
      %p94 = scmp.ne.s32.totalorder %s79, %s93
      %p95 = scmp.eq.s32.totalorder %s22, 0
      %p96 = por %p94, %p95
      %s98 = sadd.s32 %s97, 1
      %p101 = scmp.eq.s32.totalorder %s16, 1
      %p102 = scmp.ne.s32.totalorder %s97, %s99
      %p103 = scmp.eq.s32.totalorder %s16, 0
      %p104 = por %p102, %p103
      %p105 = scmp.ne.s32.totalorder %s97, %s99
      %p106 = scmp.eq.s32.totalorder %s21, 1
      %p107 = por %p105, %p106
      %p108 = scmp.ne.s32.totalorder %s99, %s100
      %p109 = scmp.eq.s32.totalorder %s21, 0
      %p110 = por %p108, %p109
      %p111 = scmp.ne.s32.totalorder %s99, %s100
      %p112 = scmp.eq.s32.totalorder %s22, 1
      %p113 = por %p111, %p112
      %p115 = scmp.ne.s32.totalorder %s100, %s114
      %p116 = scmp.eq.s32.totalorder %s22, 0
      %p117 = por %p115, %p116
      %s119 = sadd.s32 %s118, 1
      %p122 = scmp.eq.s32.totalorder %s16, 1
      %p123 = scmp.ne.s32.totalorder %s118, %s120
      %p124 = scmp.eq.s32.totalorder %s16, 0
      %p125 = por %p123, %p124
      %p126 = scmp.ne.s32.totalorder %s118, %s120
      %p127 = scmp.eq.s32.totalorder %s21, 1
      %p128 = por %p126, %p127
      %p129 = scmp.ne.s32.totalorder %s120, %s121
      %p130 = scmp.eq.s32.totalorder %s21, 0
      %p131 = por %p129, %p130
      %p132 = scmp.ne.s32.totalorder %s120, %s121
      %p133 = scmp.eq.s32.totalorder %s22, 1
      %p134 = por %p132, %p133
      %p136 = scmp.ne.s32.totalorder %s121, %s135
      %p137 = scmp.eq.s32.totalorder %s22, 0
      %p138 = por %p136, %p137
      %s140 = sadd.s32 %s139, 1
      %p143 = scmp.eq.s32.totalorder %s16, 1
      %p144 = scmp.ne.s32.totalorder %s139, %s141
      %p145 = scmp.eq.s32.totalorder %s16, 0
      %p146 = por %p144, %p145
      %p147 = scmp.ne.s32.totalorder %s139, %s141
      %p148 = scmp.eq.s32.totalorder %s21, 1
      %p149 = por %p147, %p148
      %p150 = scmp.ne.s32.totalorder %s141, %s142
      %p151 = scmp.eq.s32.totalorder %s21, 0
      %p152 = por %p150, %p151
      %p153 = scmp.ne.s32.totalorder %s141, %s142
      %p154 = scmp.eq.s32.totalorder %s22, 1
      %p155 = por %p153, %p154
      %p157 = scmp.ne.s32.totalorder %s142, %s156
      %p158 = scmp.eq.s32.totalorder %s22, 0
      %p159 = por %p157, %p158
      %s161 = sadd.s32 %s160, 1
      %p164 = scmp.eq.s32.totalorder %s16, 1
      %p165 = scmp.ne.s32.totalorder %s160, %s162
      %p166 = scmp.eq.s32.totalorder %s16, 0
      %p167 = por %p165, %p166
      %p168 = scmp.ne.s32.totalorder %s160, %s162
      %p169 = scmp.eq.s32.totalorder %s21, 1
      %p170 = por %p168, %p169
      %p171 = scmp.ne.s32.totalorder %s162, %s163
      %p172 = scmp.eq.s32.totalorder %s21, 0
      %p173 = por %p171, %p172
      %p174 = scmp.ne.s32.totalorder %s162, %s163
      %p175 = scmp.eq.s32.totalorder %s22, 1
      %p176 = por %p174, %p175
      %p178 = scmp.ne.s32.totalorder %s163, %s177
      %p179 = scmp.eq.s32.totalorder %s22, 0
      %p180 = por %p178, %p179
      %s182 = sadd.s32 %s181, 1
      %p185 = scmp.eq.s32.totalorder %s16, 1
      %p186 = scmp.ne.s32.totalorder %s181, %s183
      %p187 = scmp.eq.s32.totalorder %s16, 0
      %p188 = por %p186, %p187
      %p189 = scmp.ne.s32.totalorder %s181, %s183
      %p190 = scmp.eq.s32.totalorder %s21, 1
      %p191 = por %p189, %p190
      %p192 = scmp.ne.s32.totalorder %s183, %s184
      %p193 = scmp.eq.s32.totalorder %s21, 0
      %p194 = por %p192, %p193
      %p195 = scmp.ne.s32.totalorder %s183, %s184
      %p196 = scmp.eq.s32.totalorder %s22, 1
      %p197 = por %p195, %p196
      %p199 = scmp.ne.s32.totalorder %s184, %s198
      %p200 = scmp.eq.s32.totalorder %s22, 0
      %p201 = por %p199, %p200
      %s202 = ssub.s32 %s16, %s23
      %p203 = scmp.eq.s32.totalorder %s202, 0
      %s205 = sadd.s32 %s204, 1
      %s206 = scalar_select %p203, %s204, %s205
      %p209 = pneg %p203
      %p210 = scmp.eq.s32.totalorder %s16, 1
      %p211 = por %p209, %p210
      %p212 = scmp.ne.s32.totalorder %s204, %s207
      %p213 = scmp.eq.s32.totalorder %s16, 0
      %p214 = por %p212, %p213
      %p215 = scmp.ne.s32.totalorder %s204, %s207
      %p216 = scmp.eq.s32.totalorder %s21, 1
      %p217 = por %p215, %p216
      %p218 = scmp.ne.s32.totalorder %s207, %s208
      %p219 = scmp.eq.s32.totalorder %s21, 0
      %p220 = por %p218, %p219
      %p221 = scmp.ne.s32.totalorder %s207, %s208
      %p222 = scmp.eq.s32.totalorder %s22, 1
      %p223 = por %p221, %p222
      %p225 = scmp.ne.s32.totalorder %s208, %s224
      %p226 = scmp.eq.s32.totalorder %s22, 0
      %p227 = por %p225, %p226
      %p228 = scmp.le.s32.totalorder 1, %s16
      %p229 = scmp.lt.s32.totalorder %s16, 3
      %p230 = pnand %p228, %p229
      %p231 = pneg %p230
      // Predicated region
      $region9: #{fno2d_forward.17} parent=5 // pred_check
        _
      $region10: #{fno2d_forward.17} parent=5 // pred_check_branch
        %233 = sbr.rel (%p230) target = $region12
      $region11: #{fno2d_forward.17} parent=5 // pred_region
        %s234 = ssub.s32 %s16, 1
        // Predicated region
        $region13: #{fno2d_forward.17} parent=11 // pred_check
          %p235 = pneg %p89
        $region14: #{fno2d_forward.17} parent=11 // pred_check_branch
          %237 = sbr.rel (%p235) target = $region16
        $region15: #{fno2d_forward.17} parent=11 // pred_region
          _
        $region16: #{fno2d_forward.17} parent=11 // pred_fallthru
          _
        // Predicated region
        $region17: #{fno2d_forward.17} parent=11 // pred_check
          %p238 = pneg %p110
        $region18: #{fno2d_forward.17} parent=11 // pred_check_branch
          %240 = sbr.rel (%p238) target = $region20
        $region19: #{fno2d_forward.17} parent=11 // pred_region
          _
        $region20: #{fno2d_forward.17} parent=11 // pred_fallthru
          _
        // Predicated region
        $region21: #{fno2d_forward.17} parent=11 // pred_check
          %p241 = pneg %p131
        $region22: #{fno2d_forward.17} parent=11 // pred_check_branch
          %243 = sbr.rel (%p241) target = $region24
        $region23: #{fno2d_forward.17} parent=11 // pred_region
          _
        $region24: #{fno2d_forward.17} parent=11 // pred_fallthru
          _
        // Predicated region
        $region25: #{fno2d_forward.17} parent=11 // pred_check
          %p244 = pneg %p152
        $region26: #{fno2d_forward.17} parent=11 // pred_check_branch
          %246 = sbr.rel (%p244) target = $region28
        $region27: #{fno2d_forward.17} parent=11 // pred_region
          _
        $region28: #{fno2d_forward.17} parent=11 // pred_fallthru
          _
        // Predicated region
        $region29: #{fno2d_forward.17} parent=11 // pred_check
          %p247 = pneg %p173
        $region30: #{fno2d_forward.17} parent=11 // pred_check_branch
          %249 = sbr.rel (%p247) target = $region32
        $region31: #{fno2d_forward.17} parent=11 // pred_region
          _
        $region32: #{fno2d_forward.17} parent=11 // pred_fallthru
          _
        // Predicated region
        $region33: #{fno2d_forward.17} parent=11 // pred_check
          %p250 = pneg %p194
        $region34: #{fno2d_forward.17} parent=11 // pred_check_branch
          %252 = sbr.rel (%p250) target = $region36
        $region35: #{fno2d_forward.17} parent=11 // pred_region
          _
        $region36: #{fno2d_forward.17} parent=11 // pred_fallthru
          _
      $region12: #{fno2d_forward.17} parent=5 // pred_fallthru
        _
      %p253 = scmp.lt.s32.totalorder %s16, 2
      // Predicated region
      $region37: #{fno2d_forward.17} parent=5 // pred_check
        %p254 = pneg %p253
      $region38: #{fno2d_forward.17} parent=5 // pred_check_branch
        %256 = sbr.rel (%p254) target = $region40
      $region39: #{fno2d_forward.17} parent=5 // pred_region
        // Predicated region
        $region41: #{fno2d_forward.17} parent=39 // pred_check
          %p257 = pneg %p36
        $region42: #{fno2d_forward.17} parent=39 // pred_check_branch
          %259 = sbr.rel (%p257) target = $region44
        $region43: #{fno2d_forward.17} parent=39 // pred_region
          %s260 = sand.u32 %s26, 1
          %s261 = sand.u32 %s26, 1
          %s262 = smul.addr %s261, 16
          %s263 = scalar_lea.vmem [#allocation3], %s262
          %s264 = smul.u32 2, %s16
          %s265 = smul.addr %s264, 4
          %s266 = scalar_lea.vmem %s0, %s265
          // Predicated region
          $region45: #{fno2d_forward.17} parent=43 // pred_check
            _
          $region46: #{fno2d_forward.17} parent=43 // pred_check_branch
            %268 = sbr.rel (0) target = $region48
          $region47: #{fno2d_forward.17} parent=43 // pred_region
            // Predicated region
            $region49: #{fno2d_forward.17} parent=47 // pred_check
              _
            $region50: #{fno2d_forward.17} parent=47 // pred_check_branch
              %270 = sbr.rel (0) target = $region52
            $region51: #{fno2d_forward.17} parent=47 // pred_region
              // Predicated region
              $region64: #{fno2d_forward.17} parent=51 // pred_check
                _
              $region65: #{fno2d_forward.17} parent=51 // pred_check_branch
                %288 = sbr.rel (0) target = $region67
              $region66: #{fno2d_forward.17} parent=51 // pred_region
                loop: start=0, step=1, limit=1
                $region68: #{fno2d_forward.17} parent=66 // loop_pre_header
                  _
                $region69: #{fno2d_forward.17} parent=66 // loop_header
                  %s290 = sphi 0, %s294
                  %p291 = scmp.ge.s32.totalorder %s290, 1
                  %s295 = sphi %s266, %s266
                  %s296 = sphi %s263, %s263
                $region70: #{fno2d_forward.17} parent=66 // loop_header_branch
                  %293 = sbr.rel (%p291) target = $region74
                $region71: #{fno2d_forward.17} parent=66 // loop_body
                  %v297 = vld [vmem:[%s295] sm:$0xff]
                  %298 = vst [vmem:[%s296] sm:$0xff] %v297
                  %v299 = vld [vmem:[%s295 + $0x10] sm:$0xff]
                  %300 = vst [vmem:[%s296 + $0x8] sm:$0xff] %v299
                $region72: #{fno2d_forward.17} parent=66 // loop_footer
                  %s294 = sadd.s32 1, %s290
                $region73: #{fno2d_forward.17} parent=66 // loop_footer_branch
                  %289 = sbr.rel target = $region69
                $region74: #{fno2d_forward.17} parent=66 // loop_exit
                  _
              $region67: #{fno2d_forward.17} parent=51 // pred_fallthru
                _
              // Predicated region
              $region75: #{fno2d_forward.17} parent=51 // pred_check
                _
              $region76: #{fno2d_forward.17} parent=51 // pred_check_branch
                %302 = sbr.rel target = $region78
              $region77: #{fno2d_forward.17} parent=51 // pred_region
                _
              $region78: #{fno2d_forward.17} parent=51 // pred_fallthru
                _
            $region52: #{fno2d_forward.17} parent=47 // pred_fallthru
              _
            // Predicated region
            $region53: #{fno2d_forward.17} parent=47 // pred_check
              _
            $region54: #{fno2d_forward.17} parent=47 // pred_check_branch
              %272 = sbr.rel target = $region56
            $region55: #{fno2d_forward.17} parent=47 // pred_region
              %s274 = ssub.s32 256, 1
              loop: start=0, step=1, limit=1
              $region57: #{fno2d_forward.17} parent=55 // loop_pre_header
                _
              $region58: #{fno2d_forward.17} parent=55 // loop_header
                %s276 = sphi 0, %s280
                %p277 = scmp.ge.s32.totalorder %s276, 1
                %s281 = sphi %s266, %s266
                %s282 = sphi %s263, %s263
              $region59: #{fno2d_forward.17} parent=55 // loop_header_branch
                %279 = sbr.rel (%p277) target = $region63
              $region60: #{fno2d_forward.17} parent=55 // loop_body
                %v283 = vld [vmem:[%s281] sm:%s274]
                %284 = vst [vmem:[%s282] sm:%s274] %v283
                %v285 = vld [vmem:[%s281 + $0x10] sm:%s274]
                %286 = vst [vmem:[%s282 + $0x8] sm:%s274] %v285
              $region61: #{fno2d_forward.17} parent=55 // loop_footer
                %s280 = sadd.s32 1, %s276
              $region62: #{fno2d_forward.17} parent=55 // loop_footer_branch
                %275 = sbr.rel target = $region58
              $region63: #{fno2d_forward.17} parent=55 // loop_exit
                _
            $region56: #{fno2d_forward.17} parent=47 // pred_fallthru
              _
          $region48: #{fno2d_forward.17} parent=43 // pred_fallthru
            _
          %303 = vnop
        $region44: #{fno2d_forward.17} parent=39 // pred_fallthru
          _
        // Predicated region
        $region79: #{fno2d_forward.17} parent=39 // pred_check
          %p304 = pneg %p62
        $region80: #{fno2d_forward.17} parent=39 // pred_check_branch
          %306 = sbr.rel (%p304) target = $region82
        $region81: #{fno2d_forward.17} parent=39 // pred_region
          %s307 = sand.u32 %s52, 1
          %s308 = sand.u32 %s52, 1
          %s309 = smul.addr %s308, 32
          %s310 = scalar_lea.vmem [#allocation4], %s309
          %s311 = smul.u32 2, %s16
          %s312 = smul.addr %s311, 8
          %s313 = scalar_lea.vmem %s1, %s312
          // Predicated region
          $region83: #{fno2d_forward.17} parent=81 // pred_check
            _
          $region84: #{fno2d_forward.17} parent=81 // pred_check_branch
            %315 = sbr.rel (0) target = $region86
          $region85: #{fno2d_forward.17} parent=81 // pred_region
            // Predicated region
            $region87: #{fno2d_forward.17} parent=85 // pred_check
              _
            $region88: #{fno2d_forward.17} parent=85 // pred_check_branch
              %317 = sbr.rel (0) target = $region90
            $region89: #{fno2d_forward.17} parent=85 // pred_region
              loop: start=0, step=1, limit=1
              $region91: #{fno2d_forward.17} parent=89 // loop_pre_header
                _
              $region92: #{fno2d_forward.17} parent=89 // loop_header
                %s319 = sphi 0, %s323
                %p320 = scmp.ge.s32.totalorder %s319, 1
                %s324 = sphi %s313, %s313
                %s325 = sphi %s310, %s310
              $region93: #{fno2d_forward.17} parent=89 // loop_header_branch
                %322 = sbr.rel (%p320) target = $region97
              $region94: #{fno2d_forward.17} parent=89 // loop_body
                %v326 = vld [vmem:[%s324] sm:$0xff]
                %327 = vst [vmem:[%s325] sm:$0xff] %v326
                %v328 = vld [vmem:[%s324 + $0x8] sm:$0xff]
                %329 = vst [vmem:[%s325 + $0x8] sm:$0xff] %v328
                %v330 = vld [vmem:[%s324 + $0x20] sm:$0xff]
                %331 = vst [vmem:[%s325 + $0x10] sm:$0xff] %v330
                %v332 = vld [vmem:[%s324 + $0x28] sm:$0xff]
                %333 = vst [vmem:[%s325 + $0x18] sm:$0xff] %v332
              $region95: #{fno2d_forward.17} parent=89 // loop_footer
                %s323 = sadd.s32 1, %s319
              $region96: #{fno2d_forward.17} parent=89 // loop_footer_branch
                %318 = sbr.rel target = $region92
              $region97: #{fno2d_forward.17} parent=89 // loop_exit
                _
            $region90: #{fno2d_forward.17} parent=85 // pred_fallthru
              _
            // Predicated region
            $region98: #{fno2d_forward.17} parent=85 // pred_check
              _
            $region99: #{fno2d_forward.17} parent=85 // pred_check_branch
              %335 = sbr.rel target = $region101
            $region100: #{fno2d_forward.17} parent=85 // pred_region
              _
            $region101: #{fno2d_forward.17} parent=85 // pred_fallthru
              _
          $region86: #{fno2d_forward.17} parent=81 // pred_fallthru
            _
          %336 = vnop
        $region82: #{fno2d_forward.17} parent=39 // pred_fallthru
          _
      $region40: #{fno2d_forward.17} parent=5 // pred_fallthru
        _
      %p337 = scmp.le.s32.totalorder 1, %s16
      %p338 = scmp.lt.s32.totalorder %s16, 3
      %p339 = pnand %p337, %p338
      %p340 = pneg %p339
      // Predicated region
      $region102: #{fno2d_forward.17} parent=5 // pred_check
        _
      $region103: #{fno2d_forward.17} parent=5 // pred_check_branch
        %342 = sbr.rel (%p339) target = $region105
      $region104: #{fno2d_forward.17} parent=5 // pred_region
        %s343 = ssub.s32 %s16, 1
        %s344 = sand.u32 %s29, 1
        %s345 = sand.u32 %s29, 1
        %s346 = smul.addr %s345, 16
        %s347 = scalar_lea.vmem [#allocation3], %s346
        // Predicated region
        $region106: #{fno2d_forward.17} parent=104 // pred_check
          %p348 = pneg %p42
        $region107: #{fno2d_forward.17} parent=104 // pred_check_branch
          %350 = sbr.rel (%p348) target = $region109
        $region108: #{fno2d_forward.17} parent=104 // pred_region
          _
        $region109: #{fno2d_forward.17} parent=104 // pred_fallthru
          _
        %s351 = sand.u32 %s55, 1
        %s352 = sand.u32 %s55, 1
        %s353 = smul.addr %s352, 32
        %s354 = scalar_lea.vmem [#allocation4], %s353
        // Predicated region
        $region110: #{fno2d_forward.17} parent=104 // pred_check
          %p355 = pneg %p68
        $region111: #{fno2d_forward.17} parent=104 // pred_check_branch
          %357 = sbr.rel (%p355) target = $region113
        $region112: #{fno2d_forward.17} parent=104 // pred_region
          _
        $region113: #{fno2d_forward.17} parent=104 // pred_fallthru
          _
        %s358 = sand.u32 %s29, 1
        %s359 = sand.u32 %s29, 1
        %s360 = smul.addr %s359, 16
        %s361 = scalar_lea.vmem [#allocation3], %s360
        %p362 = pneg %p42
        %p363 = pneg %p39
        %s364 = sand.u32 %s55, 1
        %s365 = sand.u32 %s55, 1
        %s366 = smul.addr %s365, 32
        %s367 = scalar_lea.vmem [#allocation4], %s366
        %p368 = pneg %p68
        %p369 = pneg %p65
        %p370 = pneg %p89
        %p371 = pneg %p86
        %p372 = pneg %p110
        %p373 = pneg %p107
        %p374 = pneg %p131
        %p375 = pneg %p128
        %p376 = pneg %p152
        %p377 = pneg %p149
        %p378 = pneg %p173
        %p379 = pneg %p170
        %p380 = pneg %p194
        %p381 = pneg %p191
        %p382 = pneg %p220
        %p383 = pneg %p217
        %s384 = smul.u32 2, %s21
        %p385 = scmp.lt.s32.totalorder %s384, 3
        %s386 = scalar_select %p385, %s384, 3
        %s387 = scalar_lea.vmem %s8, %s386
        %s388 = smul.u32 2, %s21
        %s389 = smul.u32 2, %s21
        %s390 = smul.u32 2, %s21
        %p391 = scmp.lt.s32.totalorder %s390, 3
        %s392 = scalar_select %p391, %s390, 3
        %s393 = scalar_lea.vmem %s8, %s392
        %s394 = smul.u32 2, %s21
        %v395 = vld [vmem:[%s2] sm:$0xff]
        %v396 = vld [vmem:[%s2 + $0x8] sm:$0xff]
        %v397 = vld [vmem:[%s347] sm:$0xff]
        %v398 = vld [vmem:[%s347 + $0x8] sm:$0xff]
        %v399 = vunpack.c.l.bf16 %v397
        %v400 = vunpack.c.h.bf16 %v397
        %v401 = vunpack.c.l.bf16 %v398
        %v402 = vunpack.c.h.bf16 %v398
        %v403 = vld [vmem:[%s3] sm:$0xff]
        %v404 = vld [vmem:[%s3 + $0x8] sm:$0xff]
        %406 = vset.pattern.permute.xlu0 0
        %407 = vperm.xlu0 %406, %v403
        %v408 = vpop.permute.xlu0 %407
        %411 = vset.pattern.permute.xlu0 0
        %412 = vperm.xlu0 %411, %v404
        %v413 = vpop.permute.xlu0 %412
        %vm415 = vcmask 130048
        %v417 = vsel %vm415, %v395, 0
        %v420 = vsel %vm415, %v396, 0
        %422 = vmatprep.subr.mxu0 0.0
        %423 = vmatpush1.msra.mxu0 0.0
        %424 = vmatprep.subr.mxu0 0.0
        %425 = vmatpush1.msra.mxu0 0.0
        %426 = vmatprep.subr.mxu0 0.0
        %427 = vmatpush1.msra.mxu0 0.0
        %428 = vmatprep.subr.mxu0 0.0
        %429 = vmatpush1.msra.mxu0 0.0
        %430 = vmatprep.subr.mxu0 0.0
        %431 = vmatpush1.msra.mxu0 0.0
        %432 = vmatprep.subr.mxu0 0.0
        %433 = vmatpush1.msra.mxu0 0.0
        %434 = vmatprep.subr.mxu0 0.0
        %435 = vmatpush1.msra.mxu0 0.0
        %436 = vmatprep.subr.mxu0 0.0
        %437 = vmatpush1.msra.mxu0 0.0
        %438 = vmatprep.subr.mxu0 0.0
        %439 = vmatpush1.msra.mxu0 0.0
        %440 = vmatprep.subr.mxu0 0.0
        %441 = vmatpush1.msra.mxu0 0.0
        %442 = vmatprep.subr.mxu0 0.0
        %443 = vmatpush1.msra.mxu0 0.0
        %444 = vmatprep.subr.mxu0 0.0
        %445 = vmatpush1.msra.mxu0 0.0
        %446 = vmatprep.subr.mxu0 0.0
        %447 = vmatpush1.msra.mxu0 0.0
        %448 = vmatprep.subr.mxu0 0.0
        %449 = vmatpush1.msra.mxu0 0.0
        %450 = vmatprep.subr.mxu0 %v402
        %451 = vmatpush1.msra.mxu0 %v401
        %452 = vmatprep.subr.mxu0 %v400
        %453 = vmatpush1.msra.mxu0 %v399
        %454 = vmatprep.subr.mxu0 0.0
        %455 = vmatpush2.msra.mxu0 0.0
        %456 = vmatprep.subr.mxu0 0.0
        %457 = vmatpush2.msra.mxu0 0.0
        %458 = vmatprep.subr.mxu0 0.0
        %459 = vmatpush2.msra.mxu0 0.0
        %460 = vmatprep.subr.mxu0 0.0
        %461 = vmatpush2.msra.mxu0 0.0
        %462 = vmatprep.subr.mxu0 0.0
        %463 = vmatpush2.msra.mxu0 0.0
        %464 = vmatprep.subr.mxu0 0.0
        %465 = vmatpush2.msra.mxu0 0.0
        %466 = vmatprep.subr.mxu0 0.0
        %467 = vmatpush2.msra.mxu0 0.0
        %468 = vmatprep.subr.mxu0 0.0
        %469 = vmatpush2.msra.mxu0 0.0
        %470 = vmatprep.subr.mxu0 0.0
        %471 = vmatpush2.msra.mxu0 0.0
        %472 = vmatprep.subr.mxu0 0.0
        %473 = vmatpush2.msra.mxu0 0.0
        %474 = vmatprep.subr.mxu0 0.0
        %475 = vmatpush2.msra.mxu0 0.0
        %476 = vmatprep.subr.mxu0 0.0
        %477 = vmatpush2.msra.mxu0 0.0
        %478 = vmatprep.subr.mxu0 0.0
        %479 = vmatpush2.msra.mxu0 0.0
        %480 = vmatprep.subr.mxu0 0.0
        %481 = vmatpush2.msra.mxu0 0.0
        %482 = vmatprep.subr.mxu0 0.0
        %483 = vmatpush2.msra.mxu0 0.0
        %484 = vmatprep.subr.mxu0 0.0
        %485 = vmatpush2.msra.mxu0 0.0
        %486 = vmatprep.mubr.f32.mxu0 0.0
        %487 = vmatmul.mubr.f32.gmra.mxu0 %v417
        %v488 = vpop.f32.mrf.mxu0
        %v489 = vadd.f32 %v408, %v488
        %v490 = vpop.f32.mrf.mxu0
        %v491 = vadd.f32 %v408, %v490
        %492 = vmatprep.mubr.f32.mxu0 0.0
        %493 = vmatmul.mubr.f32.gmra.mxu0 %v420
        %v494 = vpop.f32.mrf.mxu0
        %v495 = vadd.f32 %v413, %v494
        %v496 = vpop.f32.mrf.mxu0
        %v497 = vadd.f32 %v413, %v496
        %498 = vdwg.mxu0
        %v499 = vld [vmem:[%s354] sm:$0xff]
        %v500 = vld [vmem:[%s354 + $0x8] sm:$0xff]
        %v501 = vld [vmem:[%s354 + $0x10] sm:$0xff]
        %v502 = vld [vmem:[%s354 + $0x18] sm:$0xff]
        %v503 = vadd.f32 %v489, %v499
        %v504 = vadd.f32 %v491, %v500
        %v505 = vadd.f32 %v495, %v501
        %v506 = vadd.f32 %v497, %v502
        %v507 = vld [vmem:[%s4] sm:$0xff]
        %v508 = vld [vmem:[%s4 + $0x8] sm:$0xff]
        %v509 = vld [vmem:[%s4 + $0x10] sm:$0xff]
        %v510 = vld [vmem:[%s4 + $0x18] sm:$0xff]
        %v511 = vld [vmem:[%s4 + $0x20] sm:$0xff]
        %v512 = vld [vmem:[%s4 + $0x28] sm:$0xff]
        %v513 = vld [vmem:[%s4 + $0x30] sm:$0xff]
        %v514 = vld [vmem:[%s4 + $0x38] sm:$0xff]
        %v515 = vld [vmem:[%s4 + $0x40] sm:$0xff]
        %v516 = vld [vmem:[%s4 + $0x48] sm:$0xff]
        %v517 = vld [vmem:[%s4 + $0x50] sm:$0xff]
        %v518 = vld [vmem:[%s4 + $0x58] sm:$0xff]
        %v519 = vld [vmem:[%s4 + $0x60] sm:$0xff]
        %v520 = vld [vmem:[%s4 + $0x68] sm:$0xff]
        %v521 = vld [vmem:[%s4 + $0x70] sm:$0xff]
        %v522 = vld [vmem:[%s4 + $0x78] sm:$0xff]
        %v523 = vld [vmem:[%s5] sm:$0xff]
        %v524 = vld [vmem:[%s5 + $0x8] sm:$0xff]
        %v525 = vld [vmem:[%s5 + $0x10] sm:$0xff]
        %v526 = vld [vmem:[%s5 + $0x18] sm:$0xff]
        %v527 = vld [vmem:[%s5 + $0x20] sm:$0xff]
        %v528 = vld [vmem:[%s5 + $0x28] sm:$0xff]
        %v529 = vld [vmem:[%s5 + $0x30] sm:$0xff]
        %v530 = vld [vmem:[%s5 + $0x38] sm:$0xff]
        %v531 = vld [vmem:[%s5 + $0x40] sm:$0xff]
        %v532 = vld [vmem:[%s5 + $0x48] sm:$0xff]
        %v533 = vld [vmem:[%s5 + $0x50] sm:$0xff]
        %v534 = vld [vmem:[%s5 + $0x58] sm:$0xff]
        %v535 = vld [vmem:[%s5 + $0x60] sm:$0xff]
        %v536 = vld [vmem:[%s5 + $0x68] sm:$0xff]
        %v537 = vld [vmem:[%s5 + $0x70] sm:$0xff]
        %v538 = vld [vmem:[%s5 + $0x78] sm:$0xff]
        %540 = vset.pattern.permute.xlu0 0
        %541 = vperm.xlu0 %540, %v523
        %v542 = vpop.permute.xlu0 %541
        %545 = vset.pattern.permute.xlu0 0
        %546 = vperm.xlu0 %545, %v524
        %v547 = vpop.permute.xlu0 %546
        %550 = vset.pattern.permute.xlu0 0
        %551 = vperm.xlu0 %550, %v525
        %v552 = vpop.permute.xlu0 %551
        %555 = vset.pattern.permute.xlu0 0
        %556 = vperm.xlu0 %555, %v526
        %v557 = vpop.permute.xlu0 %556
        %560 = vset.pattern.permute.xlu0 0
        %561 = vperm.xlu0 %560, %v527
        %v562 = vpop.permute.xlu0 %561
        %565 = vset.pattern.permute.xlu0 0
        %566 = vperm.xlu0 %565, %v528
        %v567 = vpop.permute.xlu0 %566
        %570 = vset.pattern.permute.xlu0 0
        %571 = vperm.xlu0 %570, %v529
        %v572 = vpop.permute.xlu0 %571
        %575 = vset.pattern.permute.xlu0 0
        %576 = vperm.xlu0 %575, %v530
        %v577 = vpop.permute.xlu0 %576
        %580 = vset.pattern.permute.xlu0 0
        %581 = vperm.xlu0 %580, %v531
        %v582 = vpop.permute.xlu0 %581
        %585 = vset.pattern.permute.xlu0 0
        %586 = vperm.xlu0 %585, %v532
        %v587 = vpop.permute.xlu0 %586
        %590 = vset.pattern.permute.xlu0 0
        %591 = vperm.xlu0 %590, %v533
        %v592 = vpop.permute.xlu0 %591
        %595 = vset.pattern.permute.xlu0 0
        %596 = vperm.xlu0 %595, %v534
        %v597 = vpop.permute.xlu0 %596
        %600 = vset.pattern.permute.xlu0 0
        %601 = vperm.xlu0 %600, %v535
        %v602 = vpop.permute.xlu0 %601
        %605 = vset.pattern.permute.xlu0 0
        %606 = vperm.xlu0 %605, %v536
        %v607 = vpop.permute.xlu0 %606
        %610 = vset.pattern.permute.xlu0 0
        %611 = vperm.xlu0 %610, %v537
        %v612 = vpop.permute.xlu0 %611
        %615 = vset.pattern.permute.xlu0 0
        %616 = vperm.xlu0 %615, %v538
        %v617 = vpop.permute.xlu0 %616
        %v620 = vsel %vm415, %v507, 0
        %v623 = vsel %vm415, %v508, 0
        %v626 = vsel %vm415, %v509, 0
        %v629 = vsel %vm415, %v510, 0
        %v632 = vsel %vm415, %v511, 0
        %v635 = vsel %vm415, %v512, 0
        %v638 = vsel %vm415, %v513, 0
        %v641 = vsel %vm415, %v514, 0
        %v644 = vsel %vm415, %v515, 0
        %v647 = vsel %vm415, %v516, 0
        %v650 = vsel %vm415, %v517, 0
        %v653 = vsel %vm415, %v518, 0
        %v656 = vsel %vm415, %v519, 0
        %v659 = vsel %vm415, %v520, 0
        %v662 = vsel %vm415, %v521, 0
        %v665 = vsel %vm415, %v522, 0
        %667 = vmatprep.subr.mxu0 0.0
        %668 = vmatpush1.msra.mxu0 0.0
        %669 = vmatprep.subr.mxu0 0.0
        %670 = vmatpush1.msra.mxu0 0.0
        %671 = vmatprep.subr.mxu0 0.0
        %672 = vmatpush1.msra.mxu0 0.0
        %673 = vmatprep.subr.mxu0 0.0
        %674 = vmatpush1.msra.mxu0 0.0
        %675 = vmatprep.subr.mxu0 0.0
        %676 = vmatpush1.msra.mxu0 0.0
        %677 = vmatprep.subr.mxu0 0.0
        %678 = vmatpush1.msra.mxu0 0.0
        %679 = vmatprep.subr.mxu0 0.0
        %680 = vmatpush1.msra.mxu0 0.0
        %681 = vmatprep.subr.mxu0 0.0
        %682 = vmatpush1.msra.mxu0 0.0
        %683 = vmatprep.subr.mxu0 0.0
        %684 = vmatpush1.msra.mxu0 0.0
        %685 = vmatprep.subr.mxu0 0.0
        %686 = vmatpush1.msra.mxu0 0.0
        %687 = vmatprep.subr.mxu0 0.0
        %688 = vmatpush1.msra.mxu0 0.0
        %689 = vmatprep.subr.mxu0 0.0
        %690 = vmatpush1.msra.mxu0 0.0
        %691 = vmatprep.subr.mxu0 0.0
        %692 = vmatpush1.msra.mxu0 0.0
        %693 = vmatprep.subr.mxu0 0.0
        %694 = vmatpush1.msra.mxu0 0.0
        %695 = vmatprep.subr.mxu0 %v506
        %696 = vmatpush1.msra.mxu0 %v505
        %697 = vmatprep.subr.mxu0 %v504
        %698 = vmatpush1.msra.mxu0 %v503
        %699 = vmatprep.subr.mxu0 0.0
        %700 = vmatpush2.msra.mxu0 0.0
        %701 = vmatprep.subr.mxu0 0.0
        %702 = vmatpush2.msra.mxu0 0.0
        %703 = vmatprep.subr.mxu0 0.0
        %704 = vmatpush2.msra.mxu0 0.0
        %705 = vmatprep.subr.mxu0 0.0
        %706 = vmatpush2.msra.mxu0 0.0
        %707 = vmatprep.subr.mxu0 0.0
        %708 = vmatpush2.msra.mxu0 0.0
        %709 = vmatprep.subr.mxu0 0.0
        %710 = vmatpush2.msra.mxu0 0.0
        %711 = vmatprep.subr.mxu0 0.0
        %712 = vmatpush2.msra.mxu0 0.0
        %713 = vmatprep.subr.mxu0 0.0
        %714 = vmatpush2.msra.mxu0 0.0
        %715 = vmatprep.subr.mxu0 0.0
        %716 = vmatpush2.msra.mxu0 0.0
        %717 = vmatprep.subr.mxu0 0.0
        %718 = vmatpush2.msra.mxu0 0.0
        %719 = vmatprep.subr.mxu0 0.0
        %720 = vmatpush2.msra.mxu0 0.0
        %721 = vmatprep.subr.mxu0 0.0
        %722 = vmatpush2.msra.mxu0 0.0
        %723 = vmatprep.subr.mxu0 0.0
        %724 = vmatpush2.msra.mxu0 0.0
        %725 = vmatprep.subr.mxu0 0.0
        %726 = vmatpush2.msra.mxu0 0.0
        %727 = vmatprep.subr.mxu0 0.0
        %728 = vmatpush2.msra.mxu0 0.0
        %729 = vmatprep.subr.mxu0 0.0
        %730 = vmatpush2.msra.mxu0 0.0
        %731 = vmatprep.mubr.f32.mxu0 0.0
        %732 = vmatmul.mubr.f32.gmra.mxu0 %v620
        %v733 = vpop.f32.mrf.mxu0
        %v734 = vadd.f32 %v542, %v733
        %v735 = vpop.f32.mrf.mxu0
        %v736 = vadd.f32 %v542, %v735
        %737 = vmatprep.mubr.f32.mxu0 0.0
        %738 = vmatmul.mubr.f32.gmra.mxu0 %v623
        %v739 = vpop.f32.mrf.mxu0
        %v740 = vadd.f32 %v547, %v739
        %v741 = vpop.f32.mrf.mxu0
        %v742 = vadd.f32 %v547, %v741
        %743 = vmatprep.mubr.f32.mxu0 0.0
        %744 = vmatmul.mubr.f32.gmra.mxu0 %v626
        %v745 = vpop.f32.mrf.mxu0
        %v746 = vadd.f32 %v552, %v745
        %v747 = vpop.f32.mrf.mxu0
        %v748 = vadd.f32 %v552, %v747
        %749 = vmatprep.mubr.f32.mxu0 0.0
        %750 = vmatmul.mubr.f32.gmra.mxu0 %v629
        %v751 = vpop.f32.mrf.mxu0
        %v752 = vadd.f32 %v557, %v751
        %v753 = vpop.f32.mrf.mxu0
        %v754 = vadd.f32 %v557, %v753
        %755 = vmatprep.mubr.f32.mxu0 0.0
        %756 = vmatmul.mubr.f32.gmra.mxu0 %v632
        %v757 = vpop.f32.mrf.mxu0
        %v758 = vadd.f32 %v562, %v757
        %v759 = vpop.f32.mrf.mxu0
        %v760 = vadd.f32 %v562, %v759
        %761 = vmatprep.mubr.f32.mxu0 0.0
        %762 = vmatmul.mubr.f32.gmra.mxu0 %v635
        %v763 = vpop.f32.mrf.mxu0
        %v764 = vadd.f32 %v567, %v763
        %v765 = vpop.f32.mrf.mxu0
        %v766 = vadd.f32 %v567, %v765
        %767 = vmatprep.mubr.f32.mxu0 0.0
        %768 = vmatmul.mubr.f32.gmra.mxu0 %v638
        %v769 = vpop.f32.mrf.mxu0
        %v770 = vadd.f32 %v572, %v769
        %v771 = vpop.f32.mrf.mxu0
        %v772 = vadd.f32 %v572, %v771
        %773 = vmatprep.mubr.f32.mxu0 0.0
        %774 = vmatmul.mubr.f32.gmra.mxu0 %v641
        %v775 = vpop.f32.mrf.mxu0
        %v776 = vadd.f32 %v577, %v775
        %v777 = vpop.f32.mrf.mxu0
        %v778 = vadd.f32 %v577, %v777
        %779 = vmatprep.mubr.f32.mxu0 0.0
        %780 = vmatmul.mubr.f32.gmra.mxu0 %v644
        %v781 = vpop.f32.mrf.mxu0
        %v782 = vadd.f32 %v582, %v781
        %v783 = vpop.f32.mrf.mxu0
        %v784 = vadd.f32 %v582, %v783
        %785 = vmatprep.mubr.f32.mxu0 0.0
        %786 = vmatmul.mubr.f32.gmra.mxu0 %v647
        %v787 = vpop.f32.mrf.mxu0
        %v788 = vadd.f32 %v587, %v787
        %v789 = vpop.f32.mrf.mxu0
        %v790 = vadd.f32 %v587, %v789
        %791 = vmatprep.mubr.f32.mxu0 0.0
        %792 = vmatmul.mubr.f32.gmra.mxu0 %v650
        %v793 = vpop.f32.mrf.mxu0
        %v794 = vadd.f32 %v592, %v793
        %v795 = vpop.f32.mrf.mxu0
        %v796 = vadd.f32 %v592, %v795
        %797 = vmatprep.mubr.f32.mxu0 0.0
        %798 = vmatmul.mubr.f32.gmra.mxu0 %v653
        %v799 = vpop.f32.mrf.mxu0
        %v800 = vadd.f32 %v597, %v799
        %v801 = vpop.f32.mrf.mxu0
        %v802 = vadd.f32 %v597, %v801
        %803 = vmatprep.mubr.f32.mxu0 0.0
        %804 = vmatmul.mubr.f32.gmra.mxu0 %v656
        %v805 = vpop.f32.mrf.mxu0
        %v806 = vadd.f32 %v602, %v805
        %v807 = vpop.f32.mrf.mxu0
        %v808 = vadd.f32 %v602, %v807
        %809 = vmatprep.mubr.f32.mxu0 0.0
        %810 = vmatmul.mubr.f32.gmra.mxu0 %v659
        %v811 = vpop.f32.mrf.mxu0
        %v812 = vadd.f32 %v607, %v811
        %v813 = vpop.f32.mrf.mxu0
        %v814 = vadd.f32 %v607, %v813
        %815 = vmatprep.mubr.f32.mxu0 0.0
        %816 = vmatmul.mubr.f32.gmra.mxu0 %v662
        %v817 = vpop.f32.mrf.mxu0
        %v818 = vadd.f32 %v612, %v817
        %v819 = vpop.f32.mrf.mxu0
        %v820 = vadd.f32 %v612, %v819
        %821 = vmatprep.mubr.f32.mxu0 0.0
        %822 = vmatmul.mubr.f32.gmra.mxu0 %v665
        %v823 = vpop.f32.mrf.mxu0
        %v824 = vadd.f32 %v617, %v823
        %v825 = vpop.f32.mrf.mxu0
        %v826 = vadd.f32 %v617, %v825
        %827 = vdwg.mxu0
        %v828 = vmax.f32 %v734, 0.0
        %v829 = vmax.f32 %v736, 0.0
        %v830 = vmax.f32 %v740, 0.0
        %v831 = vmax.f32 %v742, 0.0
        %v832 = vmax.f32 %v746, 0.0
        %v833 = vmax.f32 %v748, 0.0
        %v834 = vmax.f32 %v752, 0.0
        %v835 = vmax.f32 %v754, 0.0
        %v836 = vmax.f32 %v758, 0.0
        %v837 = vmax.f32 %v760, 0.0
        %v838 = vmax.f32 %v764, 0.0
        %v839 = vmax.f32 %v766, 0.0
        %v840 = vmax.f32 %v770, 0.0
        %v841 = vmax.f32 %v772, 0.0
        %v842 = vmax.f32 %v776, 0.0
        %v843 = vmax.f32 %v778, 0.0
        %v844 = vmax.f32 %v782, 0.0
        %v845 = vmax.f32 %v784, 0.0
        %v846 = vmax.f32 %v788, 0.0
        %v847 = vmax.f32 %v790, 0.0
        %v848 = vmax.f32 %v794, 0.0
        %v849 = vmax.f32 %v796, 0.0
        %v850 = vmax.f32 %v800, 0.0
        %v851 = vmax.f32 %v802, 0.0
        %v852 = vmax.f32 %v806, 0.0
        %v853 = vmax.f32 %v808, 0.0
        %v854 = vmax.f32 %v812, 0.0
        %v855 = vmax.f32 %v814, 0.0
        %v856 = vmax.f32 %v818, 0.0
        %v857 = vmax.f32 %v820, 0.0
        %v858 = vmax.f32 %v824, 0.0
        %v859 = vmax.f32 %v826, 0.0
        %v860 = vld [vmem:[%s6] sm:$0x1]
        %v861 = vld [vmem:[#allocation2] sm:$0x1]
        %863 = vset.pattern.permute.xlu0 0
        %864 = vperm.xlu0 %863, %v861
        %v865 = vpop.permute.xlu0 %864
        %v867 = vlaneseq
        %v868 = vshrl.u32 %v867, 7
        %v869 = vsub.s32 0, %v868
        %v870 = vrot.slane %v865, %v869
        %871 = vmatprep.subr.mxu0 %v859
        %872 = vmatpush1.msra.mxu0 %v858
        %873 = vmatprep.subr.mxu0 %v857
        %874 = vmatpush1.msra.mxu0 %v856
        %875 = vmatprep.subr.mxu0 %v855
        %876 = vmatpush1.msra.mxu0 %v854
        %877 = vmatprep.subr.mxu0 %v853
        %878 = vmatpush1.msra.mxu0 %v852
        %879 = vmatprep.subr.mxu0 %v851
        %880 = vmatpush1.msra.mxu0 %v850
        %881 = vmatprep.subr.mxu0 %v849
        %882 = vmatpush1.msra.mxu0 %v848
        %883 = vmatprep.subr.mxu0 %v847
        %884 = vmatpush1.msra.mxu0 %v846
        %885 = vmatprep.subr.mxu0 %v845
        %886 = vmatpush1.msra.mxu0 %v844
        %887 = vmatprep.subr.mxu0 %v843
        %888 = vmatpush1.msra.mxu0 %v842
        %889 = vmatprep.subr.mxu0 %v841
        %890 = vmatpush1.msra.mxu0 %v840
        %891 = vmatprep.subr.mxu0 %v839
        %892 = vmatpush1.msra.mxu0 %v838
        %893 = vmatprep.subr.mxu0 %v837
        %894 = vmatpush1.msra.mxu0 %v836
        %895 = vmatprep.subr.mxu0 %v835
        %896 = vmatpush1.msra.mxu0 %v834
        %897 = vmatprep.subr.mxu0 %v833
        %898 = vmatpush1.msra.mxu0 %v832
        %899 = vmatprep.subr.mxu0 %v831
        %900 = vmatpush1.msra.mxu0 %v830
        %901 = vmatprep.subr.mxu0 %v829
        %902 = vmatpush1.msra.mxu0 %v828
        %903 = vmatprep.subr.mxu0 0.0
        %904 = vmatpush2.msra.mxu0 0.0
        %905 = vmatprep.subr.mxu0 0.0
        %906 = vmatpush2.msra.mxu0 0.0
        %907 = vmatprep.subr.mxu0 0.0
        %908 = vmatpush2.msra.mxu0 0.0
        %909 = vmatprep.subr.mxu0 0.0
        %910 = vmatpush2.msra.mxu0 0.0
        %911 = vmatprep.subr.mxu0 0.0
        %912 = vmatpush2.msra.mxu0 0.0
        %913 = vmatprep.subr.mxu0 0.0
        %914 = vmatpush2.msra.mxu0 0.0
        %915 = vmatprep.subr.mxu0 0.0
        %916 = vmatpush2.msra.mxu0 0.0
        %917 = vmatprep.subr.mxu0 0.0
        %918 = vmatpush2.msra.mxu0 0.0
        %919 = vmatprep.subr.mxu0 0.0
        %920 = vmatpush2.msra.mxu0 0.0
        %921 = vmatprep.subr.mxu0 0.0
        %922 = vmatpush2.msra.mxu0 0.0
        %923 = vmatprep.subr.mxu0 0.0
        %924 = vmatpush2.msra.mxu0 0.0
        %925 = vmatprep.subr.mxu0 0.0
        %926 = vmatpush2.msra.mxu0 0.0
        %927 = vmatprep.subr.mxu0 0.0
        %928 = vmatpush2.msra.mxu0 0.0
        %929 = vmatprep.subr.mxu0 0.0
        %930 = vmatpush2.msra.mxu0 0.0
        %931 = vmatprep.subr.mxu0 0.0
        %932 = vmatpush2.msra.mxu0 0.0
        %933 = vmatprep.subr.mxu0 0.0
        %934 = vmatpush2.msra.mxu0 0.0
        %935 = vmatprep.mubr.f32.mxu0 0.0
        %936 = vmatmul.mubr.f32.gmra.mxu0 %v860
        %v937 = vpop.f32.mrf.mxu0
        %v938 = vadd.f32 %v870, %v937
        %v939 = vpop.f32.mrf.mxu0
        %v940 = vadd.f32 %v870, %v939
        %941 = vdwg.mxu0
        %v944 = vcombine.low %v938, %v940
        %v946 = vunpack.c.l.s4 1966171168
        %v947 = vunpack.c.0.s8 %v946
        %v948 = vlaneseq
        %v949 = vshrl.u32 %v948, 7
        %v950 = vsub.s32 %v947, %v949
        %v951 = vrot.slane %v944, %v950
        %v953 = vunpack.c.l.s4 1966171168
        %v954 = vunpack.c.0.s8 %v953
        %v955 = vlaneseq
        %v956 = vshrl.u32 %v955, 7
        %v957 = vsub.s32 %v954, %v956
        %v958 = vrot.slane %v951, %v957
        %v960 = vlaneseq
        %vm961 = vcmp.ge.s32.totalorder %v960, 0
        %vm962 = vcmp.lt.s32.totalorder %v960, 256
        %vm963 = vmand %vm961, %vm962
        %964 = vst.msk [vmem:[%s393] sm:$0x3] %vm963, %v958
        %s965 = smul.u32 2, %s21
        %p966 = scmp.lt.s32.totalorder %s965, 3
        %s967 = scalar_select %p966, %s965, 3
        %s968 = scalar_lea.vmem %s8, %s967
        // Predicated region
        $region114: #{fno2d_forward.17} parent=104 // pred_check
          %p969 = pneg %p217
        $region115: #{fno2d_forward.17} parent=104 // pred_check_branch
          %971 = sbr.rel (%p969) target = $region117
        $region116: #{fno2d_forward.17} parent=104 // pred_region
          %s972 = smul.u32 2, %s21
        $region117: #{fno2d_forward.17} parent=104 // pred_fallthru
          _
      $region105: #{fno2d_forward.17} parent=5 // pred_fallthru
        _
      %p973 = scmp.le.s32.totalorder 2, %s16
      // Predicated region
      $region118: #{fno2d_forward.17} parent=5 // pred_check
        %p974 = pneg %p973
      $region119: #{fno2d_forward.17} parent=5 // pred_check_branch
        %976 = sbr.rel (%p974) target = $region121
      $region120: #{fno2d_forward.17} parent=5 // pred_region
        %s977 = ssub.s32 %s16, 2
        // Predicated region
        $region122: #{fno2d_forward.17} parent=120 // pred_check
          %p978 = pneg %p223
        $region123: #{fno2d_forward.17} parent=120 // pred_check_branch
          %980 = sbr.rel (%p978) target = $region125
        $region124: #{fno2d_forward.17} parent=120 // pred_region
          %s981 = smul.u32 2, %s22
          %p982 = scmp.lt.s32.totalorder %s981, 3
          %s983 = scalar_select %p982, %s981, 3
          %s984 = scalar_lea.vmem %s8, %s983
        $region125: #{fno2d_forward.17} parent=120 // pred_fallthru
          _
      $region121: #{fno2d_forward.17} parent=5 // pred_fallthru
        _
    $region6: #{fno2d_forward.17} parent=1 // loop_footer
      %s20 = sadd.s32 1, %s16
    $region7: #{fno2d_forward.17} parent=1 // loop_footer_branch
      %15 = sbr.rel target = $region3
    $region8: #{fno2d_forward.17} parent=1 // loop_exit
      _

</llo_original>
